<compile_context>
chip_gen: v6e
topology: v6e:2x2x1
jax: 0.10.0
libtpu: 0.0.40
codegen_flags: <defaults>
</compile_context>

<pallas_src>
import jax
import jax.numpy as jnp
from jax import lax
from jax.experimental import pallas as pl
from jax.experimental.pallas import tpu as pltpu


CPAD1 = 8  # layer-1 input channels padded 3 -> 8 (multiple-of-8 contraction dim)


def _shift_lanes(x, offset):
    """Cyclic lane shift (XLU): out[:, f] = x[:, (f + offset) % L]."""
    L = x.shape[-1]
    amt = (-offset) % L                       # jnp.roll-style shift amount
    if amt == 0:
        return x
    return pltpu.roll(x, amt, axis=1)


def _make_fused_kernel(T, H, W, K):
    """Kernel for K clips of T frames (3 x H x W) per grid step."""
    HW = H * W
    L = K * T * HW                            # lanes per grid step
    n_frames = K * T
    fs = 8                                    # valid-cell stride after 3 pools
    n_cells = (H // fs) * (W // fs)
    log2w = W.bit_length() - 1

    def kernel(x_ref, w1_ref, b1_ref, w2_ref, b2_ref, w3_ref, b3_ref,
               wl1_ref, bl1_ref, wl2_ref, bl2_ref, o_ref):
        # ---- position decode: ONCE per grid step (hoisted out of the layers) ----
        flat = lax.broadcasted_iota(jnp.int32, (1, L), 1)
        xpos = flat & (W - 1)
        ypos = (flat >> log2w) & (H - 1)

        def boundary_masks(stride):
            # 4 per-stride boundary predicates -> 8 tiny (1, L) f32 {0,1} masks,
            # built once per layer; each tap then pays one broadcast vmul.
            mxn = (xpos >= stride).astype(jnp.float32)       # dx = -1 in range
            mxp = (xpos < W - stride).astype(jnp.float32)    # dx = +1 in range
            myn = (ypos >= stride).astype(jnp.float32)       # dy = -1 in range
            myp = (ypos < H - stride).astype(jnp.float32)    # dy = +1 in range
            return {(-1, -1): myn * mxn, (-1, 0): myn, (-1, 1): myn * mxp,
                    (0, -1): mxn,        (0, 0): None, (0, 1): mxp,
                    (1, -1): myp * mxn,  (1, 0): myp,  (1, 1): myp * mxp}

        def conv_relu_pool(act, w_ref, b_ref, stride):
            """Conv2d(3x3, pad=1) + bias + ReLU + MaxPool2d(2) on the dilated
            (C, K*T*H*W) layout.  One lane-dense bf16 MXU matmul per layer; valid
            data moves from the `stride` grid to the `2*stride` grid.  NOTE: the
            cyclic rolls wrap across frame/clip boundaries; the x/y masks zero every
            wrapped tap at lanes that downstream layers actually read."""
            cin = act.shape[0]
            cast_per_tap = (cin % 16 == 0)     # full bf16 sublane tiles (layers 2/3)
            masks = boundary_masks(stride)
            taps = []
            for dy in (-1, 0, 1):
                for dx in (-1, 0, 1):
                    tap = _shift_lanes(act, (dy * W + dx) * stride)
                    m = masks[(dy, dx)]
                    if m is not None:
                        tap = tap * m                          # zero padding
                    if cast_per_tap:
                        tap = tap.astype(jnp.bfloat16)
                    taps.append(tap)
            tap_stack = jnp.concatenate(taps, axis=0)          # (9*cin, L)
            if not cast_per_tap:
                tap_stack = tap_stack.astype(jnp.bfloat16)
            out = jnp.dot(w_ref[...], tap_stack,
                          preferred_element_type=jnp.float32)  # (Cout, L) f32
            out = jnp.maximum(out + b_ref[...], 0.0)           # bias + ReLU
            # Fused MaxPool2d(2): pooled values land on the 2*stride grid.
            out = jnp.maximum(out, _shift_lanes(out, stride))
            out = jnp.maximum(out, _shift_lanes(out, stride * W))
            return out

        x = x_ref[...]                                         # (3, L) f32
        act = jnp.concatenate(                                 # pad channels 3 -> 8
            [x, jnp.zeros((CPAD1 - x.shape[0], L), jnp.float32)], axis=0)
        act = conv_relu_pool(act, w1_ref, b1_ref, stride=1)    # (16, L)
        act = conv_relu_pool(act, w2_ref, b2_ref, stride=2)    # (32, L)
        act = conv_relu_pool(act, w3_ref, b3_ref, stride=4)    # (64, L)

        # AdaptiveAvgPool2d(1): lane-dense cell mask + per-frame lane reductions
        # (XLU) -- no sublane-major iotas, no lane-sparse selection matmul.
        cell = ((xpos & (fs - 1)) == 0) & ((ypos & (fs - 1)) == 0)
        masked = act * jnp.where(cell, 1.0 / n_cells, 0.0)
        gap = jnp.concatenate(
            [jnp.sum(masked[:, f * HW:(f + 1) * HW], axis=1, keepdims=True)
             for f in range(n_frames)], axis=1)                # (64, K*T) f32

        # Classifier head: frames stay on the lane axis.
        hid = jnp.dot(wl1_ref[...], gap.astype(jnp.bfloat16),
                      preferred_element_type=jnp.float32)
        hid = jnp.maximum(hid + bl1_ref[...], 0.0)             # (32, K*T)
        # Final Linear(32, 1) on VPU/XLU (too small to be worth an MXU pass).
        logit = jnp.sum(wl2_ref[...] * hid, axis=0, keepdims=True) + bl2_ref[...]
        prob = 0.5 * (jnp.tanh(0.5 * logit) + 1.0)             # sigmoid, (1, K*T)

        # Per-clip temporal mean -> one aligned (8, 128) tile per clip.
        rows = []
        for k in range(K):
            mean_k = jnp.sum(prob[:, k * T:(k + 1) * T], axis=1,
                             keepdims=True) * (1.0 / T)        # (1, 1)
            rows.append(jnp.broadcast_to(mean_k, (8, 128)))
        o_ref[...] = jnp.concatenate(rows, axis=0)             # (K*8, 128)

    return kernel


def _clips_per_step(B):
    """Fold clips per grid step (amortize per-step overhead / widen MXU N on 1-TC
    v5e/v6e) while always keeping >= 2 parallel steps for the two v7x TCs."""
    for k in (8, 4, 2):
        if B % (2 * k) == 0:
            return k
    return 1


def engagement_forward(params, x):
    """x: (B, T, 3, H, W) f32 -> (B,) f32, mirroring SimpleEngagementModel.forward."""
    B, T, C, H, W = x.shape
    assert C == 3
    assert (H & (H - 1)) == 0 and (W & (W - 1)) == 0 and H % 8 == 0 and W % 8 == 0
    L_clip = T * H * W
    K = _clips_per_step(B)
    steps = B // K

    # TODO(synk): produce x upstream already in (C, B*T*H*W) layout; this transpose
    # is an extra XLA pass over the input in HBM before the kernel runs.
    x2d = jnp.transpose(x, (2, 0, 1, 3, 4)).reshape(C, B * L_clip).astype(jnp.float32)

    full = lambda a: pl.BlockSpec(a.shape, lambda s: (0,) * a.ndim)
    p = params
    out = pl.pallas_call(
        _make_fused_kernel(T, H, W, K),
        out_shape=jax.ShapeDtypeStruct((B * 8, 128), jnp.float32),
        grid=(steps,),                                  # K clips per grid step
        in_specs=[
            pl.BlockSpec((C, K * L_clip), lambda s: (0, s)),
            full(p["w1"]), full(p["b1"]),
            full(p["w2"]), full(p["b2"]),
            full(p["w3"]), full(p["b3"]),
            full(p["wl1"]), full(p["bl1"]),
            full(p["wl2"]), full(p["bl2"]),
        ],
        out_specs=pl.BlockSpec((K * 8, 128), lambda s: (s, 0)),
        compiler_params=pltpu.CompilerParams(
            dimension_semantics=("parallel",)),         # both v7x TCs take a step
    )(x2d, p["w1"], p["b1"], p["w2"], p["b2"], p["w3"], p["b3"],
      p["wl1"], p["bl1"], p["wl2"], p["bl2"])
    return out.reshape(B, 8, 128)[:, 0, 0]              # (B,)


# ----------------------------------------------------------------------------
# Parameters (PyTorch layout for the reference, packed layout for the kernel)
# ----------------------------------------------------------------------------
def _pack_conv(w_oihw, cin_pad):
    """PyTorch OIHW conv weight -> (Cout, 9*cin_pad) bf16, tap-major columns."""
    cout, cin, kh, kw = w_oihw.shape
    w = jnp.transpose(w_oihw, (0, 2, 3, 1))                   # (Cout, kh, kw, Cin)
    w = jnp.pad(w, ((0, 0), (0, 0), (0, 0), (0, cin_pad - cin)))
    return w.reshape(cout, kh * kw * cin_pad).astype(jnp.bfloat16)


def init_raw_params(key):
    """Deterministic PyTorch-layout f32 parameters (used by the f32 reference)."""
    ks = jax.random.split(key, 10)
    return {
        "w1": 0.1 * jax.random.normal(ks[0], (16, 3, 3, 3), jnp.float32),
        "b1": 0.01 * jax.random.normal(ks[1], (16,), jnp.float32),
        "w2": 0.1 * jax.random.normal(ks[2], (32, 16, 3, 3), jnp.float32),
        "b2": 0.01 * jax.random.normal(ks[3], (32,), jnp.float32),
        "w3": 0.1 * jax.random.normal(ks[4], (64, 32, 3, 3), jnp.float32),
        "b3": 0.01 * jax.random.normal(ks[5], (64,), jnp.float32),
        "wl1": 0.1 * jax.random.normal(ks[6], (32, 64), jnp.float32),
        "bl1": 0.01 * jax.random.normal(ks[7], (32,), jnp.float32),
        "wl2": 0.1 * jax.random.normal(ks[8], (1, 32), jnp.float32),
        "bl2": 0.01 * jax.random.normal(ks[9], (1,), jnp.float32),
    }


def pack_params(raw):
    """Kernel-layout parameters (bf16 MXU weights, column-vector biases)."""
    return {
        "w1": _pack_conv(raw["w1"], CPAD1), "b1": raw["b1"].reshape(16, 1),
        "w2": _pack_conv(raw["w2"], 16),    "b2": raw["b2"].reshape(32, 1),
        "w3": _pack_conv(raw["w3"], 32),    "b3": raw["b3"].reshape(64, 1),
        "wl1": raw["wl1"].astype(jnp.bfloat16), "bl1": raw["bl1"].reshape(32, 1),
        "wl2": raw["wl2"].reshape(32, 1),        "bl2": raw["bl2"].reshape(1, 1),
    }


def reference_forward(raw, x):
    """Pure-JAX f32 replica of SimpleEngagementModel.forward (tolerance check)."""
    B, T, C, H, W = x.shape
    z = x.reshape(B * T, C, H, W)

    def conv_relu_pool(z, w, b):
        z = lax.conv_general_dilated(z, w, window_strides=(1, 1),
                                     padding=((1, 1), (1, 1)),
                                     dimension_numbers=("NCHW", "OIHW", "NCHW"))
        z = jnp.maximum(z + b[None, :, None, None], 0.0)
        n, c, h, w2 = z.shape
        return z.reshape(n, c, h // 2, 2, w2 // 2, 2).max(axis=(3, 5))

    z = conv_relu_pool(z, raw["w1"], raw["b1"])
    z = conv_relu_pool(z, raw["w2"], raw["b2"])
    z = conv_relu_pool(z, raw["w3"], raw["b3"])
    g = z.mean(axis=(2, 3))                                   # (B*T, 64)
    h = jnp.maximum(g @ raw["wl1"].T + raw["bl1"], 0.0)
    logit = h @ raw["wl2"].T + raw["bl2"]                     # (B*T, 1)
    prob = jax.nn.sigmoid(logit).reshape(B, T)
    return prob.mean(axis=1)


if __name__ == "__main__":
    B, T, C, H, W = 2, 4, 3, 16, 16
    kx, kp = jax.random.split(jax.random.PRNGKey(0))
    x = jax.random.normal(kx, (B, T, C, H, W), jnp.float32)
    raw = init_raw_params(kp)
    params = pack_params(raw)

    fwd = jax.jit(engagement_forward)
    out = jax.block_until_ready(fwd(params, x))

    assert out.shape == (B,), out.shape
    assert bool(jnp.all(jnp.isfinite(out)))
    assert bool(jnp.all((out > 0.0) & (out < 1.0)))           # sigmoid-mean range

    # bf16 MXU weights/taps (f32 accumulate) -> compare with a bf16-aware tolerance.
    ref = reference_forward(raw, x)
    err = float(jnp.max(jnp.abs(out - ref)))
    assert err < 2e-2, f"kernel vs f32 reference max abs err = {err}"
    print("KERNEL_OK")
</pallas_src>

<mosaic_0001>
module attributes {stable_mosaic.version = 11 : i64} {
  func.func @kernel(%arg0: i32, %arg1: memref<3x1024xf32, #tpu.memory_space<vmem>>, %arg2: memref<16x72xbf16, #tpu.memory_space<vmem>>, %arg3: memref<16x1xf32, #tpu.memory_space<vmem>>, %arg4: memref<32x144xbf16, #tpu.memory_space<vmem>>, %arg5: memref<32x1xf32, #tpu.memory_space<vmem>>, %arg6: memref<64x288xbf16, #tpu.memory_space<vmem>>, %arg7: memref<64x1xf32, #tpu.memory_space<vmem>>, %arg8: memref<32x64xbf16, #tpu.memory_space<vmem>>, %arg9: memref<32x1xf32, #tpu.memory_space<vmem>>, %arg10: memref<32x1xf32, #tpu.memory_space<vmem>>, %arg11: memref<1x1xf32, #tpu.memory_space<vmem>>, %arg12: memref<8x128xf32, #tpu.memory_space<vmem>>) attributes {dimension_semantics = [#tpu.dimension_semantics<parallel>], iteration_bounds = array<i64: 2>, scalar_prefetch = 0 : i64, scratch_operands = 0 : i64, tpu.core_type = #tpu.core_type<tc>, window_params = [{transform_indices = @transform_0, window_bounds = array<i64: 3, 1024>}, {pipeline_mode = #tpu.pipeline_mode<synchronous>, transform_indices = @transform_1, window_bounds = array<i64: 16, 72>}, {pipeline_mode = #tpu.pipeline_mode<synchronous>, transform_indices = @transform_2, window_bounds = array<i64: 16, 1>}, {pipeline_mode = #tpu.pipeline_mode<synchronous>, transform_indices = @transform_3, window_bounds = array<i64: 32, 144>}, {pipeline_mode = #tpu.pipeline_mode<synchronous>, transform_indices = @transform_4, window_bounds = array<i64: 32, 1>}, {pipeline_mode = #tpu.pipeline_mode<synchronous>, transform_indices = @transform_5, window_bounds = array<i64: 64, 288>}, {pipeline_mode = #tpu.pipeline_mode<synchronous>, transform_indices = @transform_6, window_bounds = array<i64: 64, 1>}, {pipeline_mode = #tpu.pipeline_mode<synchronous>, transform_indices = @transform_7, window_bounds = array<i64: 32, 64>}, {pipeline_mode = #tpu.pipeline_mode<synchronous>, transform_indices = @transform_8, window_bounds = array<i64: 32, 1>}, {pipeline_mode = #tpu.pipeline_mode<synchronous>, transform_indices = @transform_9, window_bounds = array<i64: 32, 1>}, {pipeline_mode = #tpu.pipeline_mode<synchronous>, transform_indices = @transform_10, window_bounds = array<i64: 1, 1>}, {transform_indices = @transform_11, window_bounds = array<i64: 8, 128>}]} {
    %0 = tpu.iota {dimensions = array<i32: 1>} : vector<1x1024xi32>
    %c15_i32 = arith.constant 15 : i32
    %1 = vector.broadcast %c15_i32 : i32 to vector<1x1024xi32>
    %2 = arith.andi %0, %1 : vector<1x1024xi32>
    %c4_i32 = arith.constant 4 : i32
    %3 = vector.broadcast %c4_i32 : i32 to vector<1x1024xi32>
    %4 = arith.shrsi %0, %3 : vector<1x1024xi32>
    %c15_i32_0 = arith.constant 15 : i32
    %5 = vector.broadcast %c15_i32_0 : i32 to vector<1x1024xi32>
    %6 = arith.andi %4, %5 : vector<1x1024xi32>
    %c0 = arith.constant 0 : index
    %c0_1 = arith.constant 0 : index
    %7 = vector.load %arg1[%c0, %c0_1] : memref<3x1024xf32, #tpu.memory_space<vmem>>, vector<3x1024xf32>
    %cst = arith.constant 0.000000e+00 : f32
    %8 = vector.broadcast %cst : f32 to vector<5x1024xf32>
    %9 = tpu.concatenate %7, %8 in 0 : vector<3x1024xf32>, vector<5x1024xf32> -> vector<8x1024xf32>
    %c1_i32 = arith.constant 1 : i32
    %10 = vector.broadcast %c1_i32 : i32 to vector<1x1024xi32>
    %11 = arith.cmpi sge, %2, %10 : vector<1x1024xi32>
    %12 = arith.extui %11 : vector<1x1024xi1> to vector<1x1024xi32>
    %13 = arith.sitofp %12 : vector<1x1024xi32> to vector<1x1024xf32>
    %c15_i32_2 = arith.constant 15 : i32
    %14 = vector.broadcast %c15_i32_2 : i32 to vector<1x1024xi32>
    %15 = arith.cmpi slt, %2, %14 : vector<1x1024xi32>
    %16 = arith.extui %15 : vector<1x1024xi1> to vector<1x1024xi32>
    %17 = arith.sitofp %16 : vector<1x1024xi32> to vector<1x1024xf32>
    %c1_i32_3 = arith.constant 1 : i32
    %18 = vector.broadcast %c1_i32_3 : i32 to vector<1x1024xi32>
    %19 = arith.cmpi sge, %6, %18 : vector<1x1024xi32>
    %20 = arith.extui %19 : vector<1x1024xi1> to vector<1x1024xi32>
    %21 = arith.sitofp %20 : vector<1x1024xi32> to vector<1x1024xf32>
    %c15_i32_4 = arith.constant 15 : i32
    %22 = vector.broadcast %c15_i32_4 : i32 to vector<1x1024xi32>
    %23 = arith.cmpi slt, %6, %22 : vector<1x1024xi32>
    %24 = arith.extui %23 : vector<1x1024xi1> to vector<1x1024xi32>
    %25 = arith.sitofp %24 : vector<1x1024xi32> to vector<1x1024xf32>
    %26 = arith.mulf %21, %13 : vector<1x1024xf32>
    %27 = arith.mulf %21, %17 : vector<1x1024xf32>
    %28 = arith.mulf %25, %13 : vector<1x1024xf32>
    %29 = arith.mulf %25, %17 : vector<1x1024xf32>
    %c17_i32 = arith.constant 17 : i32
    %30 = tpu.dynamic_rotate %9 by %c17_i32 dim 1 : vector<8x1024xf32>, i32 -> vector<8x1024xf32>
    %31 = vector.broadcast %26 : vector<1x1024xf32> to vector<8x1024xf32>
    %32 = arith.mulf %30, %31 : vector<8x1024xf32>
    %c16_i32 = arith.constant 16 : i32
    %33 = tpu.dynamic_rotate %9 by %c16_i32 dim 1 : vector<8x1024xf32>, i32 -> vector<8x1024xf32>
    %34 = vector.broadcast %21 : vector<1x1024xf32> to vector<8x1024xf32>
    %35 = arith.mulf %33, %34 : vector<8x1024xf32>
    %c15_i32_5 = arith.constant 15 : i32
    %36 = tpu.dynamic_rotate %9 by %c15_i32_5 dim 1 : vector<8x1024xf32>, i32 -> vector<8x1024xf32>
    %37 = vector.broadcast %27 : vector<1x1024xf32> to vector<8x1024xf32>
    %38 = arith.mulf %36, %37 : vector<8x1024xf32>
    %c1_i32_6 = arith.constant 1 : i32
    %39 = tpu.dynamic_rotate %9 by %c1_i32_6 dim 1 : vector<8x1024xf32>, i32 -> vector<8x1024xf32>
    %40 = vector.broadcast %13 : vector<1x1024xf32> to vector<8x1024xf32>
    %41 = arith.mulf %39, %40 : vector<8x1024xf32>
    %c1023_i32 = arith.constant 1023 : i32
    %42 = tpu.dynamic_rotate %9 by %c1023_i32 dim 1 : vector<8x1024xf32>, i32 -> vector<8x1024xf32>
    %43 = vector.broadcast %17 : vector<1x1024xf32> to vector<8x1024xf32>
    %44 = arith.mulf %42, %43 : vector<8x1024xf32>
    %c1009_i32 = arith.constant 1009 : i32
    %45 = tpu.dynamic_rotate %9 by %c1009_i32 dim 1 : vector<8x1024xf32>, i32 -> vector<8x1024xf32>
    %46 = vector.broadcast %28 : vector<1x1024xf32> to vector<8x1024xf32>
    %47 = arith.mulf %45, %46 : vector<8x1024xf32>
    %c1008_i32 = arith.constant 1008 : i32
    %48 = tpu.dynamic_rotate %9 by %c1008_i32 dim 1 : vector<8x1024xf32>, i32 -> vector<8x1024xf32>
    %49 = vector.broadcast %25 : vector<1x1024xf32> to vector<8x1024xf32>
    %50 = arith.mulf %48, %49 : vector<8x1024xf32>
    %c1007_i32 = arith.constant 1007 : i32
    %51 = tpu.dynamic_rotate %9 by %c1007_i32 dim 1 : vector<8x1024xf32>, i32 -> vector<8x1024xf32>
    %52 = vector.broadcast %29 : vector<1x1024xf32> to vector<8x1024xf32>
    %53 = arith.mulf %51, %52 : vector<8x1024xf32>
    %54 = tpu.concatenate %32, %35, %38, %41, %9, %44, %47, %50, %53 in 0 : vector<8x1024xf32>, vector<8x1024xf32>, vector<8x1024xf32>, vector<8x1024xf32>, vector<8x1024xf32>, vector<8x1024xf32>, vector<8x1024xf32>, vector<8x1024xf32>, vector<8x1024xf32> -> vector<72x1024xf32>
    %55 = arith.truncf %54 : vector<72x1024xf32> to vector<72x1024xbf16>
    %c0_7 = arith.constant 0 : index
    %c0_8 = arith.constant 0 : index
    %56 = vector.load %arg2[%c0_7, %c0_8] : memref<16x72xbf16, #tpu.memory_space<vmem>>, vector<16x72xbf16>
    %cst_9 = arith.constant dense<0.000000e+00> : vector<16x1024xf32>
    %57 = tpu.matmul %56, %55, %cst_9 {dimension_numbers = #tpu.dot_dimension_numbers<[1], [0], [0], [1], [0, 0, 1, 1], [], []>} : vector<16x72xbf16>, vector<72x1024xbf16>, vector<16x1024xf32> -> vector<16x1024xf32>
    %c0_10 = arith.constant 0 : index
    %c0_11 = arith.constant 0 : index
    %58 = vector.load %arg3[%c0_10, %c0_11] : memref<16x1xf32, #tpu.memory_space<vmem>>, vector<16x1xf32>
    %59 = vector.broadcast %58 : vector<16x1xf32> to vector<16x1024xf32>
    %60 = arith.addf %57, %59 : vector<16x1024xf32>
    %cst_12 = arith.constant 0.000000e+00 : f32
    %61 = vector.broadcast %cst_12 : f32 to vector<16x1024xf32>
    %62 = arith.maximumf %60, %61 : vector<16x1024xf32>
    %c1023_i32_13 = arith.constant 1023 : i32
    %63 = tpu.dynamic_rotate %62 by %c1023_i32_13 dim 1 : vector<16x1024xf32>, i32 -> vector<16x1024xf32>
    %64 = arith.maximumf %62, %63 : vector<16x1024xf32>
    %c1008_i32_14 = arith.constant 1008 : i32
    %65 = tpu.dynamic_rotate %64 by %c1008_i32_14 dim 1 : vector<16x1024xf32>, i32 -> vector<16x1024xf32>
    %66 = arith.maximumf %64, %65 : vector<16x1024xf32>
    %c2_i32 = arith.constant 2 : i32
    %67 = vector.broadcast %c2_i32 : i32 to vector<1x1024xi32>
    %68 = arith.cmpi sge, %2, %67 : vector<1x1024xi32>
    %69 = arith.extui %68 : vector<1x1024xi1> to vector<1x1024xi32>
    %70 = arith.sitofp %69 : vector<1x1024xi32> to vector<1x1024xf32>
    %c14_i32 = arith.constant 14 : i32
    %71 = vector.broadcast %c14_i32 : i32 to vector<1x1024xi32>
    %72 = arith.cmpi slt, %2, %71 : vector<1x1024xi32>
    %73 = arith.extui %72 : vector<1x1024xi1> to vector<1x1024xi32>
    %74 = arith.sitofp %73 : vector<1x1024xi32> to vector<1x1024xf32>
    %c2_i32_15 = arith.constant 2 : i32
    %75 = vector.broadcast %c2_i32_15 : i32 to vector<1x1024xi32>
    %76 = arith.cmpi sge, %6, %75 : vector<1x1024xi32>
    %77 = arith.extui %76 : vector<1x1024xi1> to vector<1x1024xi32>
    %78 = arith.sitofp %77 : vector<1x1024xi32> to vector<1x1024xf32>
    %c14_i32_16 = arith.constant 14 : i32
    %79 = vector.broadcast %c14_i32_16 : i32 to vector<1x1024xi32>
    %80 = arith.cmpi slt, %6, %79 : vector<1x1024xi32>
    %81 = arith.extui %80 : vector<1x1024xi1> to vector<1x1024xi32>
    %82 = arith.sitofp %81 : vector<1x1024xi32> to vector<1x1024xf32>
    %83 = arith.mulf %78, %70 : vector<1x1024xf32>
    %84 = arith.mulf %78, %74 : vector<1x1024xf32>
    %85 = arith.mulf %82, %70 : vector<1x1024xf32>
    %86 = arith.mulf %82, %74 : vector<1x1024xf32>
    %c34_i32 = arith.constant 34 : i32
    %87 = tpu.dynamic_rotate %66 by %c34_i32 dim 1 : vector<16x1024xf32>, i32 -> vector<16x1024xf32>
    %88 = vector.broadcast %83 : vector<1x1024xf32> to vector<16x1024xf32>
    %89 = arith.mulf %87, %88 : vector<16x1024xf32>
    %90 = arith.truncf %89 : vector<16x1024xf32> to vector<16x1024xbf16>
    %c32_i32 = arith.constant 32 : i32
    %91 = tpu.dynamic_rotate %66 by %c32_i32 dim 1 : vector<16x1024xf32>, i32 -> vector<16x1024xf32>
    %92 = vector.broadcast %78 : vector<1x1024xf32> to vector<16x1024xf32>
    %93 = arith.mulf %91, %92 : vector<16x1024xf32>
    %94 = arith.truncf %93 : vector<16x1024xf32> to vector<16x1024xbf16>
    %c30_i32 = arith.constant 30 : i32
    %95 = tpu.dynamic_rotate %66 by %c30_i32 dim 1 : vector<16x1024xf32>, i32 -> vector<16x1024xf32>
    %96 = vector.broadcast %84 : vector<1x1024xf32> to vector<16x1024xf32>
    %97 = arith.mulf %95, %96 : vector<16x1024xf32>
    %98 = arith.truncf %97 : vector<16x1024xf32> to vector<16x1024xbf16>
    %c2_i32_17 = arith.constant 2 : i32
    %99 = tpu.dynamic_rotate %66 by %c2_i32_17 dim 1 : vector<16x1024xf32>, i32 -> vector<16x1024xf32>
    %100 = vector.broadcast %70 : vector<1x1024xf32> to vector<16x1024xf32>
    %101 = arith.mulf %99, %100 : vector<16x1024xf32>
    %102 = arith.truncf %101 : vector<16x1024xf32> to vector<16x1024xbf16>
    %103 = arith.truncf %66 : vector<16x1024xf32> to vector<16x1024xbf16>
    %c1022_i32 = arith.constant 1022 : i32
    %104 = tpu.dynamic_rotate %66 by %c1022_i32 dim 1 : vector<16x1024xf32>, i32 -> vector<16x1024xf32>
    %105 = vector.broadcast %74 : vector<1x1024xf32> to vector<16x1024xf32>
    %106 = arith.mulf %104, %105 : vector<16x1024xf32>
    %107 = arith.truncf %106 : vector<16x1024xf32> to vector<16x1024xbf16>
    %c994_i32 = arith.constant 994 : i32
    %108 = tpu.dynamic_rotate %66 by %c994_i32 dim 1 : vector<16x1024xf32>, i32 -> vector<16x1024xf32>
    %109 = vector.broadcast %85 : vector<1x1024xf32> to vector<16x1024xf32>
    %110 = arith.mulf %108, %109 : vector<16x1024xf32>
    %111 = arith.truncf %110 : vector<16x1024xf32> to vector<16x1024xbf16>
    %c992_i32 = arith.constant 992 : i32
    %112 = tpu.dynamic_rotate %66 by %c992_i32 dim 1 : vector<16x1024xf32>, i32 -> vector<16x1024xf32>
    %113 = vector.broadcast %82 : vector<1x1024xf32> to vector<16x1024xf32>
    %114 = arith.mulf %112, %113 : vector<16x1024xf32>
    %115 = arith.truncf %114 : vector<16x1024xf32> to vector<16x1024xbf16>
    %c990_i32 = arith.constant 990 : i32
    %116 = tpu.dynamic_rotate %66 by %c990_i32 dim 1 : vector<16x1024xf32>, i32 -> vector<16x1024xf32>
    %117 = vector.broadcast %86 : vector<1x1024xf32> to vector<16x1024xf32>
    %118 = arith.mulf %116, %117 : vector<16x1024xf32>
    %119 = arith.truncf %118 : vector<16x1024xf32> to vector<16x1024xbf16>
    %120 = tpu.concatenate %90, %94, %98, %102, %103, %107, %111, %115, %119 in 0 : vector<16x1024xbf16>, vector<16x1024xbf16>, vector<16x1024xbf16>, vector<16x1024xbf16>, vector<16x1024xbf16>, vector<16x1024xbf16>, vector<16x1024xbf16>, vector<16x1024xbf16>, vector<16x1024xbf16> -> vector<144x1024xbf16>
    %c0_18 = arith.constant 0 : index
    %c0_19 = arith.constant 0 : index
    %121 = vector.load %arg4[%c0_18, %c0_19] : memref<32x144xbf16, #tpu.memory_space<vmem>>, vector<32x144xbf16>
    %cst_20 = arith.constant dense<0.000000e+00> : vector<32x1024xf32>
    %122 = tpu.matmul %121, %120, %cst_20 {dimension_numbers = #tpu.dot_dimension_numbers<[1], [0], [0], [1], [0, 0, 1, 1], [], []>} : vector<32x144xbf16>, vector<144x1024xbf16>, vector<32x1024xf32> -> vector<32x1024xf32>
    %c0_21 = arith.constant 0 : index
    %c0_22 = arith.constant 0 : index
    %123 = vector.load %arg5[%c0_21, %c0_22] : memref<32x1xf32, #tpu.memory_space<vmem>>, vector<32x1xf32>
    %124 = vector.broadcast %123 : vector<32x1xf32> to vector<32x1024xf32>
    %125 = arith.addf %122, %124 : vector<32x1024xf32>
    %cst_23 = arith.constant 0.000000e+00 : f32
    %126 = vector.broadcast %cst_23 : f32 to vector<32x1024xf32>
    %127 = arith.maximumf %125, %126 : vector<32x1024xf32>
    %c1022_i32_24 = arith.constant 1022 : i32
    %128 = tpu.dynamic_rotate %127 by %c1022_i32_24 dim 1 : vector<32x1024xf32>, i32 -> vector<32x1024xf32>
    %129 = arith.maximumf %127, %128 : vector<32x1024xf32>
    %c992_i32_25 = arith.constant 992 : i32
    %130 = tpu.dynamic_rotate %129 by %c992_i32_25 dim 1 : vector<32x1024xf32>, i32 -> vector<32x1024xf32>
    %131 = arith.maximumf %129, %130 : vector<32x1024xf32>
    %c4_i32_26 = arith.constant 4 : i32
    %132 = vector.broadcast %c4_i32_26 : i32 to vector<1x1024xi32>
    %133 = arith.cmpi sge, %2, %132 : vector<1x1024xi32>
    %134 = arith.extui %133 : vector<1x1024xi1> to vector<1x1024xi32>
    %135 = arith.sitofp %134 : vector<1x1024xi32> to vector<1x1024xf32>
    %c12_i32 = arith.constant 12 : i32
    %136 = vector.broadcast %c12_i32 : i32 to vector<1x1024xi32>
    %137 = arith.cmpi slt, %2, %136 : vector<1x1024xi32>
    %138 = arith.extui %137 : vector<1x1024xi1> to vector<1x1024xi32>
    %139 = arith.sitofp %138 : vector<1x1024xi32> to vector<1x1024xf32>
    %c4_i32_27 = arith.constant 4 : i32
    %140 = vector.broadcast %c4_i32_27 : i32 to vector<1x1024xi32>
    %141 = arith.cmpi sge, %6, %140 : vector<1x1024xi32>
    %142 = arith.extui %141 : vector<1x1024xi1> to vector<1x1024xi32>
    %143 = arith.sitofp %142 : vector<1x1024xi32> to vector<1x1024xf32>
    %c12_i32_28 = arith.constant 12 : i32
    %144 = vector.broadcast %c12_i32_28 : i32 to vector<1x1024xi32>
    %145 = arith.cmpi slt, %6, %144 : vector<1x1024xi32>
    %146 = arith.extui %145 : vector<1x1024xi1> to vector<1x1024xi32>
    %147 = arith.sitofp %146 : vector<1x1024xi32> to vector<1x1024xf32>
    %148 = arith.mulf %143, %135 : vector<1x1024xf32>
    %149 = arith.mulf %143, %139 : vector<1x1024xf32>
    %150 = arith.mulf %147, %135 : vector<1x1024xf32>
    %151 = arith.mulf %147, %139 : vector<1x1024xf32>
    %c68_i32 = arith.constant 68 : i32
    %152 = tpu.dynamic_rotate %131 by %c68_i32 dim 1 : vector<32x1024xf32>, i32 -> vector<32x1024xf32>
    %153 = vector.broadcast %148 : vector<1x1024xf32> to vector<32x1024xf32>
    %154 = arith.mulf %152, %153 : vector<32x1024xf32>
    %155 = arith.truncf %154 : vector<32x1024xf32> to vector<32x1024xbf16>
    %c64_i32 = arith.constant 64 : i32
    %156 = tpu.dynamic_rotate %131 by %c64_i32 dim 1 : vector<32x1024xf32>, i32 -> vector<32x1024xf32>
    %157 = vector.broadcast %143 : vector<1x1024xf32> to vector<32x1024xf32>
    %158 = arith.mulf %156, %157 : vector<32x1024xf32>
    %159 = arith.truncf %158 : vector<32x1024xf32> to vector<32x1024xbf16>
    %c60_i32 = arith.constant 60 : i32
    %160 = tpu.dynamic_rotate %131 by %c60_i32 dim 1 : vector<32x1024xf32>, i32 -> vector<32x1024xf32>
    %161 = vector.broadcast %149 : vector<1x1024xf32> to vector<32x1024xf32>
    %162 = arith.mulf %160, %161 : vector<32x1024xf32>
    %163 = arith.truncf %162 : vector<32x1024xf32> to vector<32x1024xbf16>
    %c4_i32_29 = arith.constant 4 : i32
    %164 = tpu.dynamic_rotate %131 by %c4_i32_29 dim 1 : vector<32x1024xf32>, i32 -> vector<32x1024xf32>
    %165 = vector.broadcast %135 : vector<1x1024xf32> to vector<32x1024xf32>
    %166 = arith.mulf %164, %165 : vector<32x1024xf32>
    %167 = arith.truncf %166 : vector<32x1024xf32> to vector<32x1024xbf16>
    %168 = arith.truncf %131 : vector<32x1024xf32> to vector<32x1024xbf16>
    %c1020_i32 = arith.constant 1020 : i32
    %169 = tpu.dynamic_rotate %131 by %c1020_i32 dim 1 : vector<32x1024xf32>, i32 -> vector<32x1024xf32>
    %170 = vector.broadcast %139 : vector<1x1024xf32> to vector<32x1024xf32>
    %171 = arith.mulf %169, %170 : vector<32x1024xf32>
    %172 = arith.truncf %171 : vector<32x1024xf32> to vector<32x1024xbf16>
    %c964_i32 = arith.constant 964 : i32
    %173 = tpu.dynamic_rotate %131 by %c964_i32 dim 1 : vector<32x1024xf32>, i32 -> vector<32x1024xf32>
    %174 = vector.broadcast %150 : vector<1x1024xf32> to vector<32x1024xf32>
    %175 = arith.mulf %173, %174 : vector<32x1024xf32>
    %176 = arith.truncf %175 : vector<32x1024xf32> to vector<32x1024xbf16>
    %c960_i32 = arith.constant 960 : i32
    %177 = tpu.dynamic_rotate %131 by %c960_i32 dim 1 : vector<32x1024xf32>, i32 -> vector<32x1024xf32>
    %178 = vector.broadcast %147 : vector<1x1024xf32> to vector<32x1024xf32>
    %179 = arith.mulf %177, %178 : vector<32x1024xf32>
    %180 = arith.truncf %179 : vector<32x1024xf32> to vector<32x1024xbf16>
    %c956_i32 = arith.constant 956 : i32
    %181 = tpu.dynamic_rotate %131 by %c956_i32 dim 1 : vector<32x1024xf32>, i32 -> vector<32x1024xf32>
    %182 = vector.broadcast %151 : vector<1x1024xf32> to vector<32x1024xf32>
    %183 = arith.mulf %181, %182 : vector<32x1024xf32>
    %184 = arith.truncf %183 : vector<32x1024xf32> to vector<32x1024xbf16>
    %185 = tpu.concatenate %155, %159, %163, %167, %168, %172, %176, %180, %184 in 0 : vector<32x1024xbf16>, vector<32x1024xbf16>, vector<32x1024xbf16>, vector<32x1024xbf16>, vector<32x1024xbf16>, vector<32x1024xbf16>, vector<32x1024xbf16>, vector<32x1024xbf16>, vector<32x1024xbf16> -> vector<288x1024xbf16>
    %c0_30 = arith.constant 0 : index
    %c0_31 = arith.constant 0 : index
    %186 = vector.load %arg6[%c0_30, %c0_31] : memref<64x288xbf16, #tpu.memory_space<vmem>>, vector<64x288xbf16>
    %cst_32 = arith.constant dense<0.000000e+00> : vector<64x1024xf32>
    %187 = tpu.matmul %186, %185, %cst_32 {dimension_numbers = #tpu.dot_dimension_numbers<[1], [0], [0], [1], [0, 0, 1, 1], [], []>} : vector<64x288xbf16>, vector<288x1024xbf16>, vector<64x1024xf32> -> vector<64x1024xf32>
    %c0_33 = arith.constant 0 : index
    %c0_34 = arith.constant 0 : index
    %188 = vector.load %arg7[%c0_33, %c0_34] : memref<64x1xf32, #tpu.memory_space<vmem>>, vector<64x1xf32>
    %189 = vector.broadcast %188 : vector<64x1xf32> to vector<64x1024xf32>
    %190 = arith.addf %187, %189 : vector<64x1024xf32>
    %cst_35 = arith.constant 0.000000e+00 : f32
    %191 = vector.broadcast %cst_35 : f32 to vector<64x1024xf32>
    %192 = arith.maximumf %190, %191 : vector<64x1024xf32>
    %c1020_i32_36 = arith.constant 1020 : i32
    %193 = tpu.dynamic_rotate %192 by %c1020_i32_36 dim 1 : vector<64x1024xf32>, i32 -> vector<64x1024xf32>
    %194 = arith.maximumf %192, %193 : vector<64x1024xf32>
    %c960_i32_37 = arith.constant 960 : i32
    %195 = tpu.dynamic_rotate %194 by %c960_i32_37 dim 1 : vector<64x1024xf32>, i32 -> vector<64x1024xf32>
    %196 = arith.maximumf %194, %195 : vector<64x1024xf32>
    %c7_i32 = arith.constant 7 : i32
    %197 = vector.broadcast %c7_i32 : i32 to vector<1x1024xi32>
    %198 = arith.andi %2, %197 : vector<1x1024xi32>
    %c0_i32 = arith.constant 0 : i32
    %199 = vector.broadcast %c0_i32 : i32 to vector<1x1024xi32>
    %200 = arith.cmpi eq, %198, %199 : vector<1x1024xi32>
    %c7_i32_38 = arith.constant 7 : i32
    %201 = vector.broadcast %c7_i32_38 : i32 to vector<1x1024xi32>
    %202 = arith.andi %6, %201 : vector<1x1024xi32>
    %c0_i32_39 = arith.constant 0 : i32
    %203 = vector.broadcast %c0_i32_39 : i32 to vector<1x1024xi32>
    %204 = arith.cmpi eq, %202, %203 : vector<1x1024xi32>
    %205 = arith.andi %200, %204 : vector<1x1024xi1>
    %cst_40 = arith.constant 2.500000e-01 : f32
    %cst_41 = arith.constant 0.000000e+00 : f32
    %206 = vector.broadcast %cst_40 : f32 to vector<1x1024xf32>
    %207 = vector.broadcast %cst_41 : f32 to vector<1x1024xf32>
    %208 = arith.select %205, %206, %207 : vector<1x1024xi1>, vector<1x1024xf32>
    %209 = vector.broadcast %208 : vector<1x1024xf32> to vector<64x1024xf32>
    %210 = arith.mulf %196, %209 : vector<64x1024xf32>
    %211 = vector.extract_strided_slice %210 {offsets = [0, 0], sizes = [64, 256], strides = [1, 1]} : vector<64x1024xf32> to vector<64x256xf32>
    %cst_42 = arith.constant dense<0.000000e+00> : vector<64xf32>
    %212 = vector.multi_reduction <add>, %211, %cst_42 [1] : vector<64x256xf32> to vector<64xf32>
    %213 = vector.shape_cast %212 : vector<64xf32> to vector<64x1xf32>
    %214 = vector.extract_strided_slice %210 {offsets = [0, 256], sizes = [64, 256], strides = [1, 1]} : vector<64x1024xf32> to vector<64x256xf32>
    %cst_43 = arith.constant dense<0.000000e+00> : vector<64xf32>
    %215 = vector.multi_reduction <add>, %214, %cst_43 [1] : vector<64x256xf32> to vector<64xf32>
    %216 = vector.shape_cast %215 : vector<64xf32> to vector<64x1xf32>
    %217 = vector.extract_strided_slice %210 {offsets = [0, 512], sizes = [64, 256], strides = [1, 1]} : vector<64x1024xf32> to vector<64x256xf32>
    %cst_44 = arith.constant dense<0.000000e+00> : vector<64xf32>
    %218 = vector.multi_reduction <add>, %217, %cst_44 [1] : vector<64x256xf32> to vector<64xf32>
    %219 = vector.shape_cast %218 : vector<64xf32> to vector<64x1xf32>
    %220 = vector.extract_strided_slice %210 {offsets = [0, 768], sizes = [64, 256], strides = [1, 1]} : vector<64x1024xf32> to vector<64x256xf32>
    %cst_45 = arith.constant dense<0.000000e+00> : vector<64xf32>
    %221 = vector.multi_reduction <add>, %220, %cst_45 [1] : vector<64x256xf32> to vector<64xf32>
    %222 = vector.shape_cast %221 : vector<64xf32> to vector<64x1xf32>
    %223 = tpu.concatenate %213, %216, %219, %222 in 1 : vector<64x1xf32>, vector<64x1xf32>, vector<64x1xf32>, vector<64x1xf32> -> vector<64x4xf32>
    %c0_46 = arith.constant 0 : index
    %c0_47 = arith.constant 0 : index
    %224 = vector.load %arg8[%c0_46, %c0_47] : memref<32x64xbf16, #tpu.memory_space<vmem>>, vector<32x64xbf16>
    %225 = arith.truncf %223 : vector<64x4xf32> to vector<64x4xbf16>
    %cst_48 = arith.constant dense<0.000000e+00> : vector<32x4xf32>
    %226 = tpu.matmul %224, %225, %cst_48 {dimension_numbers = #tpu.dot_dimension_numbers<[1], [0], [0], [1], [0, 0, 1, 1], [], []>} : vector<32x64xbf16>, vector<64x4xbf16>, vector<32x4xf32> -> vector<32x4xf32>
    %c0_49 = arith.constant 0 : index
    %c0_50 = arith.constant 0 : index
    %227 = vector.load %arg9[%c0_49, %c0_50] : memref<32x1xf32, #tpu.memory_space<vmem>>, vector<32x1xf32>
    %228 = vector.broadcast %227 : vector<32x1xf32> to vector<32x4xf32>
    %229 = arith.addf %226, %228 : vector<32x4xf32>
    %cst_51 = arith.constant 0.000000e+00 : f32
    %230 = vector.broadcast %cst_51 : f32 to vector<32x4xf32>
    %231 = arith.maximumf %229, %230 : vector<32x4xf32>
    %c0_52 = arith.constant 0 : index
    %c0_53 = arith.constant 0 : index
    %232 = vector.load %arg10[%c0_52, %c0_53] : memref<32x1xf32, #tpu.memory_space<vmem>>, vector<32x1xf32>
    %233 = vector.broadcast %232 : vector<32x1xf32> to vector<32x4xf32>
    %234 = arith.mulf %233, %231 : vector<32x4xf32>
    %cst_54 = arith.constant dense<0.000000e+00> : vector<4xf32>
    %235 = vector.multi_reduction <add>, %234, %cst_54 [0] : vector<32x4xf32> to vector<4xf32>
    %236 = vector.shape_cast %235 : vector<4xf32> to vector<1x4xf32>
    %c0_55 = arith.constant 0 : index
    %c0_56 = arith.constant 0 : index
    %237 = vector.load %arg11[%c0_55, %c0_56] : memref<1x1xf32, #tpu.memory_space<vmem>>, vector<1x1xf32>
    %238 = vector.broadcast %237 : vector<1x1xf32> to vector<1x4xf32>
    %239 = arith.addf %236, %238 : vector<1x4xf32>
    %cst_57 = arith.constant 5.000000e-01 : f32
    %240 = vector.broadcast %cst_57 : f32 to vector<1x4xf32>
    %241 = arith.mulf %240, %239 : vector<1x4xf32>
    %242 = math.tanh %241 : vector<1x4xf32>
    %cst_58 = arith.constant 1.000000e+00 : f32
    %243 = vector.broadcast %cst_58 : f32 to vector<1x4xf32>
    %244 = arith.addf %242, %243 : vector<1x4xf32>
    %cst_59 = arith.constant 5.000000e-01 : f32
    %245 = vector.broadcast %cst_59 : f32 to vector<1x4xf32>
    %246 = arith.mulf %245, %244 : vector<1x4xf32>
    %cst_60 = arith.constant dense<0.000000e+00> : vector<1xf32>
    %247 = vector.multi_reduction <add>, %246, %cst_60 [1] : vector<1x4xf32> to vector<1xf32>
    %248 = vector.shape_cast %247 : vector<1xf32> to vector<1x1xf32>
    %cst_61 = arith.constant 2.500000e-01 : f32
    %249 = vector.broadcast %cst_61 : f32 to vector<1x1xf32>
    %250 = arith.mulf %248, %249 : vector<1x1xf32>
    %251 = vector.shape_cast %250 : vector<1x1xf32> to vector<1x1xf32>
    %252 = vector.broadcast %251 : vector<1x1xf32> to vector<8x128xf32>
    %c0_62 = arith.constant 0 : index
    %c0_63 = arith.constant 0 : index
    %253 = vector.load %arg12[%c0_62, %c0_63] : memref<8x128xf32, #tpu.memory_space<vmem>>, vector<8x128xf32>
    tpu.vector_store %arg12[%c0_62, %c0_63], %252 {strides = array<i32>} : memref<8x128xf32, #tpu.memory_space<vmem>>, vector<8x128xf32>,
    return
  }
  func.func @transform_0(%arg0: i32) -> (i32, i32) {
    %c0_i32 = arith.constant 0 : i32
    %c0_i32_0 = arith.constant 0 : i32
    return %c0_i32, %arg0 : i32, i32
  }
  func.func @transform_1(%arg0: i32) -> (i32, i32) {
    %c0_i32 = arith.constant 0 : i32
    %c0_i32_0 = arith.constant 0 : i32
    %c0_i32_1 = arith.constant 0 : i32
    return %c0_i32, %c0_i32_0 : i32, i32
  }
  func.func @transform_2(%arg0: i32) -> (i32, i32) {
    %c0_i32 = arith.constant 0 : i32
    %c0_i32_0 = arith.constant 0 : i32
    %c0_i32_1 = arith.constant 0 : i32
    return %c0_i32, %c0_i32_0 : i32, i32
  }
  func.func @transform_3(%arg0: i32) -> (i32, i32) {
    %c0_i32 = arith.constant 0 : i32
    %c0_i32_0 = arith.constant 0 : i32
    %c0_i32_1 = arith.constant 0 : i32
    return %c0_i32, %c0_i32_0 : i32, i32
  }
  func.func @transform_4(%arg0: i32) -> (i32, i32) {
    %c0_i32 = arith.constant 0 : i32
    %c0_i32_0 = arith.constant 0 : i32
    %c0_i32_1 = arith.constant 0 : i32
    return %c0_i32, %c0_i32_0 : i32, i32
  }
  func.func @transform_5(%arg0: i32) -> (i32, i32) {
    %c0_i32 = arith.constant 0 : i32
    %c0_i32_0 = arith.constant 0 : i32
    %c0_i32_1 = arith.constant 0 : i32
    return %c0_i32, %c0_i32_0 : i32, i32
  }
  func.func @transform_6(%arg0: i32) -> (i32, i32) {
    %c0_i32 = arith.constant 0 : i32
    %c0_i32_0 = arith.constant 0 : i32
    %c0_i32_1 = arith.constant 0 : i32
    return %c0_i32, %c0_i32_0 : i32, i32
  }
  func.func @transform_7(%arg0: i32) -> (i32, i32) {
    %c0_i32 = arith.constant 0 : i32
    %c0_i32_0 = arith.constant 0 : i32
    %c0_i32_1 = arith.constant 0 : i32
    return %c0_i32, %c0_i32_0 : i32, i32
  }
  func.func @transform_8(%arg0: i32) -> (i32, i32) {
    %c0_i32 = arith.constant 0 : i32
    %c0_i32_0 = arith.constant 0 : i32
    %c0_i32_1 = arith.constant 0 : i32
    return %c0_i32, %c0_i32_0 : i32, i32
  }
  func.func @transform_9(%arg0: i32) -> (i32, i32) {
    %c0_i32 = arith.constant 0 : i32
    %c0_i32_0 = arith.constant 0 : i32
    %c0_i32_1 = arith.constant 0 : i32
    return %c0_i32, %c0_i32_0 : i32, i32
  }
  func.func @transform_10(%arg0: i32) -> (i32, i32) {
    %c0_i32 = arith.constant 0 : i32
    %c0_i32_0 = arith.constant 0 : i32
    %c0_i32_1 = arith.constant 0 : i32
    return %c0_i32, %c0_i32_0 : i32, i32
  }
  func.func @transform_11(%arg0: i32) -> (i32, i32) {
    %c0_i32 = arith.constant 0 : i32
    %c0_i32_0 = arith.constant 0 : i32
    return %arg0, %c0_i32 : i32, i32
  }
}

</mosaic_0001>

<llo_original>
// kernel: engagement_forward.1
$region0: #{engagement_forward.1}
  #allocation0 [shape = 'u32[]', space=smem, size = 0x4, offset = 0x4, fixed_abs, tag = 'smem constant byte address 0x4 - core index']
  #allocation1 [shape = 'u32[144,128]{1,0:T(1,128)}', space=vmem, size = 0x12000, scoped, tag = 'internal scratch']
  #allocation2 [shape = 'f32[1,1]{1,0:T(1,128)S(1)}', space=vmem, size = 0x200, scoped, tag = 'scoped memory for engagement_forward.1']
  %s0 = inlined_call_operand.vmem [shape: f32[3,2048], index: 0, kind: input, shape index: {}]
  %s1 = inlined_call_operand.vmem [shape: bf16[16,72], index: 1, kind: input, shape index: {}]
  %s2 = inlined_call_operand.vmem [shape: f32[16,1], index: 2, kind: input, shape index: {}]
  %s3 = inlined_call_operand.vmem [shape: bf16[32,144], index: 3, kind: input, shape index: {}]
  %s4 = inlined_call_operand.vmem [shape: f32[32,1], index: 4, kind: input, shape index: {}]
  %s5 = inlined_call_operand.vmem [shape: bf16[64,288], index: 5, kind: input, shape index: {}]
  %s6 = inlined_call_operand.vmem [shape: f32[64,1], index: 6, kind: input, shape index: {}]
  %s7 = inlined_call_operand.vmem [shape: bf16[32,64], index: 7, kind: input, shape index: {}]
  %s8 = inlined_call_operand.vmem [shape: f32[32,1], index: 8, kind: input, shape index: {}]
  %s9 = inlined_call_operand.vmem [shape: f32[32,1], index: 9, kind: input, shape index: {}]
  %s10 = inlined_call_operand.<no memory space> [shape: f32[1,1], index: 10, kind: input, shape index: {}]
  %s11 = inlined_call_operand.vmem [shape: f32[16,128], index: 11, kind: output, shape index: {}]
  %s12 = sld [smem:[#allocation0]]
  $region77: #{engagement_forward.1} parent=0
    _
  %s14 = ssub.s32 1, %s12
  %s15 = scalar_select 0, %s14, %s12
  %v16 = vstv %s10
  %17 = vst [vmem:[#allocation2] sm:$0x1] %v16
  loop: start=0, step=1, limit=4
  $region2: #{engagement_forward.1} parent=0 // loop_pre_header
    _
  $region3: #{engagement_forward.1} parent=0 // loop_header
    %s19 = sphi 0, %s23
    %p20 = scmp.ge.s32.totalorder %s19, 4
    %s29 = sphi 0, %s31
    %s32 = sphi 0, %s29
    %s33 = sphi 0, %s32
    %s49 = sphi 0, %s33
    %s53 = sphi 0, %s53
    %s55 = sphi 0, %s53
    %s56 = sphi 0, %s55
    %s70 = sphi 0, %s56
    %s74 = sphi 0, %s74
    %s76 = sphi 0, %s74
    %s77 = sphi 0, %s76
    %s91 = sphi 0, %s77
    %s95 = sphi 0, %s95
    %s97 = sphi 0, %s95
    %s98 = sphi 0, %s97
    %s112 = sphi 0, %s98
    %s116 = sphi 0, %s116
    %s118 = sphi 0, %s116
    %s119 = sphi 0, %s118
    %s133 = sphi 0, %s119
    %s137 = sphi 0, %s137
    %s139 = sphi 0, %s137
    %s140 = sphi 0, %s139
    %s154 = sphi 0, %s140
    %s158 = sphi 0, %s158
    %s160 = sphi 0, %s158
    %s161 = sphi 0, %s160
    %s175 = sphi 0, %s161
    %s179 = sphi 0, %s179
    %s181 = sphi 0, %s179
    %s182 = sphi 0, %s181
    %s196 = sphi 0, %s182
    %s200 = sphi 0, %s200
    %s202 = sphi 0, %s200
    %s203 = sphi 0, %s202
    %s217 = sphi 0, %s203
    %s221 = sphi 0, %s221
    %s223 = sphi 0, %s221
    %s224 = sphi 0, %s223
    %s238 = sphi 0, %s224
    %s242 = sphi 0, %s242
    %s244 = sphi 0, %s242
    %s245 = sphi 0, %s244
    %s259 = sphi 0, %s245
    %s265 = sphi 0, %s267
    %s268 = sphi 0, %s265
    %s269 = sphi 0, %s268
    %s285 = sphi 0, %s269
  $region4: #{engagement_forward.1} parent=0 // loop_header_branch
    %22 = sbr.rel (%p20) target = $region8
  $region5: #{engagement_forward.1} parent=0 // loop_body
    %s24 = ssub.s32 %s19, 1
    %s25 = ssub.s32 %s19, 2
    %s26 = sadd.s32 %s19, 1
    %s27 = ssub.s32 %s19, %s26
    %p28 = scmp.eq.s32.totalorder %s27, 0
    %s30 = sadd.s32 %s29, 1
    %s31 = scalar_select %p28, %s29, %s30
    %p34 = pneg %p28
    %p35 = scmp.eq.s32.totalorder %s19, 1
    %p36 = por %p34, %p35
    %p37 = scmp.ne.s32.totalorder %s29, %s32
    %p38 = scmp.eq.s32.totalorder %s19, 0
    %p39 = por %p37, %p38
    %p40 = scmp.ne.s32.totalorder %s29, %s32
    %p41 = scmp.eq.s32.totalorder %s24, 1
    %p42 = por %p40, %p41
    %p43 = scmp.ne.s32.totalorder %s32, %s33
    %p44 = scmp.eq.s32.totalorder %s24, 0
    %p45 = por %p43, %p44
    %p46 = scmp.ne.s32.totalorder %s32, %s33
    %p47 = scmp.eq.s32.totalorder %s25, 1
    %p48 = por %p46, %p47
    %p50 = scmp.ne.s32.totalorder %s33, %s49
    %p51 = scmp.eq.s32.totalorder %s25, 0
    %p52 = por %p50, %p51
    %s54 = sadd.s32 %s53, 1
    %p57 = scmp.eq.s32.totalorder %s19, 1
    %p58 = scmp.ne.s32.totalorder %s53, %s55
    %p59 = scmp.eq.s32.totalorder %s19, 0
    %p60 = por %p58, %p59
    %p61 = scmp.ne.s32.totalorder %s53, %s55
    %p62 = scmp.eq.s32.totalorder %s24, 1
    %p63 = por %p61, %p62
    %p64 = scmp.ne.s32.totalorder %s55, %s56
    %p65 = scmp.eq.s32.totalorder %s24, 0
    %p66 = por %p64, %p65
    %p67 = scmp.ne.s32.totalorder %s55, %s56
    %p68 = scmp.eq.s32.totalorder %s25, 1
    %p69 = por %p67, %p68
    %p71 = scmp.ne.s32.totalorder %s56, %s70
    %p72 = scmp.eq.s32.totalorder %s25, 0
    %p73 = por %p71, %p72
    %s75 = sadd.s32 %s74, 1
    %p78 = scmp.eq.s32.totalorder %s19, 1
    %p79 = scmp.ne.s32.totalorder %s74, %s76
    %p80 = scmp.eq.s32.totalorder %s19, 0
    %p81 = por %p79, %p80
    %p82 = scmp.ne.s32.totalorder %s74, %s76
    %p83 = scmp.eq.s32.totalorder %s24, 1
    %p84 = por %p82, %p83
    %p85 = scmp.ne.s32.totalorder %s76, %s77
    %p86 = scmp.eq.s32.totalorder %s24, 0
    %p87 = por %p85, %p86
    %p88 = scmp.ne.s32.totalorder %s76, %s77
    %p89 = scmp.eq.s32.totalorder %s25, 1
    %p90 = por %p88, %p89
    %p92 = scmp.ne.s32.totalorder %s77, %s91
    %p93 = scmp.eq.s32.totalorder %s25, 0
    %p94 = por %p92, %p93
    %s96 = sadd.s32 %s95, 1
    %p99 = scmp.eq.s32.totalorder %s19, 1
    %p100 = scmp.ne.s32.totalorder %s95, %s97
    %p101 = scmp.eq.s32.totalorder %s19, 0
    %p102 = por %p100, %p101
    %p103 = scmp.ne.s32.totalorder %s95, %s97
    %p104 = scmp.eq.s32.totalorder %s24, 1
    %p105 = por %p103, %p104
    %p106 = scmp.ne.s32.totalorder %s97, %s98
    %p107 = scmp.eq.s32.totalorder %s24, 0
    %p108 = por %p106, %p107
    %p109 = scmp.ne.s32.totalorder %s97, %s98
    %p110 = scmp.eq.s32.totalorder %s25, 1
    %p111 = por %p109, %p110
    %p113 = scmp.ne.s32.totalorder %s98, %s112
    %p114 = scmp.eq.s32.totalorder %s25, 0
    %p115 = por %p113, %p114
    %s117 = sadd.s32 %s116, 1
    %p120 = scmp.eq.s32.totalorder %s19, 1
    %p121 = scmp.ne.s32.totalorder %s116, %s118
    %p122 = scmp.eq.s32.totalorder %s19, 0
    %p123 = por %p121, %p122
    %p124 = scmp.ne.s32.totalorder %s116, %s118
    %p125 = scmp.eq.s32.totalorder %s24, 1
    %p126 = por %p124, %p125
    %p127 = scmp.ne.s32.totalorder %s118, %s119
    %p128 = scmp.eq.s32.totalorder %s24, 0
    %p129 = por %p127, %p128
    %p130 = scmp.ne.s32.totalorder %s118, %s119
    %p131 = scmp.eq.s32.totalorder %s25, 1
    %p132 = por %p130, %p131
    %p134 = scmp.ne.s32.totalorder %s119, %s133
    %p135 = scmp.eq.s32.totalorder %s25, 0
    %p136 = por %p134, %p135
    %s138 = sadd.s32 %s137, 1
    %p141 = scmp.eq.s32.totalorder %s19, 1
    %p142 = scmp.ne.s32.totalorder %s137, %s139
    %p143 = scmp.eq.s32.totalorder %s19, 0
    %p144 = por %p142, %p143
    %p145 = scmp.ne.s32.totalorder %s137, %s139
    %p146 = scmp.eq.s32.totalorder %s24, 1
    %p147 = por %p145, %p146
    %p148 = scmp.ne.s32.totalorder %s139, %s140
    %p149 = scmp.eq.s32.totalorder %s24, 0
    %p150 = por %p148, %p149
    %p151 = scmp.ne.s32.totalorder %s139, %s140
    %p152 = scmp.eq.s32.totalorder %s25, 1
    %p153 = por %p151, %p152
    %p155 = scmp.ne.s32.totalorder %s140, %s154
    %p156 = scmp.eq.s32.totalorder %s25, 0
    %p157 = por %p155, %p156
    %s159 = sadd.s32 %s158, 1
    %p162 = scmp.eq.s32.totalorder %s19, 1
    %p163 = scmp.ne.s32.totalorder %s158, %s160
    %p164 = scmp.eq.s32.totalorder %s19, 0
    %p165 = por %p163, %p164
    %p166 = scmp.ne.s32.totalorder %s158, %s160
    %p167 = scmp.eq.s32.totalorder %s24, 1
    %p168 = por %p166, %p167
    %p169 = scmp.ne.s32.totalorder %s160, %s161
    %p170 = scmp.eq.s32.totalorder %s24, 0
    %p171 = por %p169, %p170
    %p172 = scmp.ne.s32.totalorder %s160, %s161
    %p173 = scmp.eq.s32.totalorder %s25, 1
    %p174 = por %p172, %p173
    %p176 = scmp.ne.s32.totalorder %s161, %s175
    %p177 = scmp.eq.s32.totalorder %s25, 0
    %p178 = por %p176, %p177
    %s180 = sadd.s32 %s179, 1
    %p183 = scmp.eq.s32.totalorder %s19, 1
    %p184 = scmp.ne.s32.totalorder %s179, %s181
    %p185 = scmp.eq.s32.totalorder %s19, 0
    %p186 = por %p184, %p185
    %p187 = scmp.ne.s32.totalorder %s179, %s181
    %p188 = scmp.eq.s32.totalorder %s24, 1
    %p189 = por %p187, %p188
    %p190 = scmp.ne.s32.totalorder %s181, %s182
    %p191 = scmp.eq.s32.totalorder %s24, 0
    %p192 = por %p190, %p191
    %p193 = scmp.ne.s32.totalorder %s181, %s182
    %p194 = scmp.eq.s32.totalorder %s25, 1
    %p195 = por %p193, %p194
    %p197 = scmp.ne.s32.totalorder %s182, %s196
    %p198 = scmp.eq.s32.totalorder %s25, 0
    %p199 = por %p197, %p198
    %s201 = sadd.s32 %s200, 1
    %p204 = scmp.eq.s32.totalorder %s19, 1
    %p205 = scmp.ne.s32.totalorder %s200, %s202
    %p206 = scmp.eq.s32.totalorder %s19, 0
    %p207 = por %p205, %p206
    %p208 = scmp.ne.s32.totalorder %s200, %s202
    %p209 = scmp.eq.s32.totalorder %s24, 1
    %p210 = por %p208, %p209
    %p211 = scmp.ne.s32.totalorder %s202, %s203
    %p212 = scmp.eq.s32.totalorder %s24, 0
    %p213 = por %p211, %p212
    %p214 = scmp.ne.s32.totalorder %s202, %s203
    %p215 = scmp.eq.s32.totalorder %s25, 1
    %p216 = por %p214, %p215
    %p218 = scmp.ne.s32.totalorder %s203, %s217
    %p219 = scmp.eq.s32.totalorder %s25, 0
    %p220 = por %p218, %p219
    %s222 = sadd.s32 %s221, 1
    %p225 = scmp.eq.s32.totalorder %s19, 1
    %p226 = scmp.ne.s32.totalorder %s221, %s223
    %p227 = scmp.eq.s32.totalorder %s19, 0
    %p228 = por %p226, %p227
    %p229 = scmp.ne.s32.totalorder %s221, %s223
    %p230 = scmp.eq.s32.totalorder %s24, 1
    %p231 = por %p229, %p230
    %p232 = scmp.ne.s32.totalorder %s223, %s224
    %p233 = scmp.eq.s32.totalorder %s24, 0
    %p234 = por %p232, %p233
    %p235 = scmp.ne.s32.totalorder %s223, %s224
    %p236 = scmp.eq.s32.totalorder %s25, 1
    %p237 = por %p235, %p236
    %p239 = scmp.ne.s32.totalorder %s224, %s238
    %p240 = scmp.eq.s32.totalorder %s25, 0
    %p241 = por %p239, %p240
    %s243 = sadd.s32 %s242, 1
    %p246 = scmp.eq.s32.totalorder %s19, 1
    %p247 = scmp.ne.s32.totalorder %s242, %s244
    %p248 = scmp.eq.s32.totalorder %s19, 0
    %p249 = por %p247, %p248
    %p250 = scmp.ne.s32.totalorder %s242, %s244
    %p251 = scmp.eq.s32.totalorder %s24, 1
    %p252 = por %p250, %p251
    %p253 = scmp.ne.s32.totalorder %s244, %s245
    %p254 = scmp.eq.s32.totalorder %s24, 0
    %p255 = por %p253, %p254
    %p256 = scmp.ne.s32.totalorder %s244, %s245
    %p257 = scmp.eq.s32.totalorder %s25, 1
    %p258 = por %p256, %p257
    %p260 = scmp.ne.s32.totalorder %s245, %s259
    %p261 = scmp.eq.s32.totalorder %s25, 0
    %p262 = por %p260, %p261
    %s263 = ssub.s32 %s19, %s26
    %p264 = scmp.eq.s32.totalorder %s263, 0
    %s266 = sadd.s32 %s265, 1
    %s267 = scalar_select %p264, %s265, %s266
    %p270 = pneg %p264
    %p271 = scmp.eq.s32.totalorder %s19, 1
    %p272 = por %p270, %p271
    %p273 = scmp.ne.s32.totalorder %s265, %s268
    %p274 = scmp.eq.s32.totalorder %s19, 0
    %p275 = por %p273, %p274
    %p276 = scmp.ne.s32.totalorder %s265, %s268
    %p277 = scmp.eq.s32.totalorder %s24, 1
    %p278 = por %p276, %p277
    %p279 = scmp.ne.s32.totalorder %s268, %s269
    %p280 = scmp.eq.s32.totalorder %s24, 0
    %p281 = por %p279, %p280
    %p282 = scmp.ne.s32.totalorder %s268, %s269
    %p283 = scmp.eq.s32.totalorder %s25, 1
    %p284 = por %p282, %p283
    %p286 = scmp.ne.s32.totalorder %s269, %s285
    %p287 = scmp.eq.s32.totalorder %s25, 0
    %p288 = por %p286, %p287
    %p289 = scmp.le.s32.totalorder 1, %s19
    %p290 = scmp.lt.s32.totalorder %s19, 3
    %p291 = pnand %p289, %p290
    %p292 = pneg %p291
    // Predicated region
    $region9: #{engagement_forward.1} parent=5 // pred_check
      _
    $region10: #{engagement_forward.1} parent=5 // pred_check_branch
      %294 = sbr.rel (%p291) target = $region12
    $region11: #{engagement_forward.1} parent=5 // pred_region
      %s295 = ssub.s32 %s19, 1
      // Predicated region
      $region13: #{engagement_forward.1} parent=11 // pred_check
        %p296 = pneg %p66
      $region14: #{engagement_forward.1} parent=11 // pred_check_branch
        %298 = sbr.rel (%p296) target = $region16
      $region15: #{engagement_forward.1} parent=11 // pred_region
        _
      $region16: #{engagement_forward.1} parent=11 // pred_fallthru
        _
      // Predicated region
      $region17: #{engagement_forward.1} parent=11 // pred_check
        %p299 = pneg %p87
      $region18: #{engagement_forward.1} parent=11 // pred_check_branch
        %301 = sbr.rel (%p299) target = $region20
      $region19: #{engagement_forward.1} parent=11 // pred_region
        _
      $region20: #{engagement_forward.1} parent=11 // pred_fallthru
        _
      // Predicated region
      $region21: #{engagement_forward.1} parent=11 // pred_check
        %p302 = pneg %p108
      $region22: #{engagement_forward.1} parent=11 // pred_check_branch
        %304 = sbr.rel (%p302) target = $region24
      $region23: #{engagement_forward.1} parent=11 // pred_region
        _
      $region24: #{engagement_forward.1} parent=11 // pred_fallthru
        _
      // Predicated region
      $region25: #{engagement_forward.1} parent=11 // pred_check
        %p305 = pneg %p129
      $region26: #{engagement_forward.1} parent=11 // pred_check_branch
        %307 = sbr.rel (%p305) target = $region28
      $region27: #{engagement_forward.1} parent=11 // pred_region
        _
      $region28: #{engagement_forward.1} parent=11 // pred_fallthru
        _
      // Predicated region
      $region29: #{engagement_forward.1} parent=11 // pred_check
        %p308 = pneg %p150
      $region30: #{engagement_forward.1} parent=11 // pred_check_branch
        %310 = sbr.rel (%p308) target = $region32
      $region31: #{engagement_forward.1} parent=11 // pred_region
        _
      $region32: #{engagement_forward.1} parent=11 // pred_fallthru
        _
      // Predicated region
      $region33: #{engagement_forward.1} parent=11 // pred_check
        %p311 = pneg %p171
      $region34: #{engagement_forward.1} parent=11 // pred_check_branch
        %313 = sbr.rel (%p311) target = $region36
      $region35: #{engagement_forward.1} parent=11 // pred_region
        _
      $region36: #{engagement_forward.1} parent=11 // pred_fallthru
        _
      // Predicated region
      $region37: #{engagement_forward.1} parent=11 // pred_check
        %p314 = pneg %p192
      $region38: #{engagement_forward.1} parent=11 // pred_check_branch
        %316 = sbr.rel (%p314) target = $region40
      $region39: #{engagement_forward.1} parent=11 // pred_region
        _
      $region40: #{engagement_forward.1} parent=11 // pred_fallthru
        _
      // Predicated region
      $region41: #{engagement_forward.1} parent=11 // pred_check
        %p317 = pneg %p213
      $region42: #{engagement_forward.1} parent=11 // pred_check_branch
        %319 = sbr.rel (%p317) target = $region44
      $region43: #{engagement_forward.1} parent=11 // pred_region
        _
      $region44: #{engagement_forward.1} parent=11 // pred_fallthru
        _
      // Predicated region
      $region45: #{engagement_forward.1} parent=11 // pred_check
        %p320 = pneg %p234
      $region46: #{engagement_forward.1} parent=11 // pred_check_branch
        %322 = sbr.rel (%p320) target = $region48
      $region47: #{engagement_forward.1} parent=11 // pred_region
        _
      $region48: #{engagement_forward.1} parent=11 // pred_fallthru
        _
      // Predicated region
      $region49: #{engagement_forward.1} parent=11 // pred_check
        %p323 = pneg %p255
      $region50: #{engagement_forward.1} parent=11 // pred_check_branch
        %325 = sbr.rel (%p323) target = $region52
      $region51: #{engagement_forward.1} parent=11 // pred_region
        _
      $region52: #{engagement_forward.1} parent=11 // pred_fallthru
        _
    $region12: #{engagement_forward.1} parent=5 // pred_fallthru
      _
    %p326 = scmp.lt.s32.totalorder %s19, 2
    // Predicated region
    $region53: #{engagement_forward.1} parent=5 // pred_check
      %p327 = pneg %p326
    $region54: #{engagement_forward.1} parent=5 // pred_check_branch
      %329 = sbr.rel (%p327) target = $region56
    $region55: #{engagement_forward.1} parent=5 // pred_region
      // Predicated region
      $region57: #{engagement_forward.1} parent=55 // pred_check
        %p330 = pneg %p39
      $region58: #{engagement_forward.1} parent=55 // pred_check_branch
        %332 = sbr.rel (%p330) target = $region60
      $region59: #{engagement_forward.1} parent=55 // pred_region
        %s333 = smul.u32 8, %s19
        %p334 = scmp.lt.s32.totalorder %s333, 15
        %s335 = scalar_select %p334, %s333, 15
        %s336 = smul.addr %s335, 4
        %s337 = scalar_lea.vmem %s0, %s336
        %s338 = smul.u32 8, %s19
      $region60: #{engagement_forward.1} parent=55 // pred_fallthru
        _
    $region56: #{engagement_forward.1} parent=5 // pred_fallthru
      _
    %p339 = scmp.le.s32.totalorder 1, %s19
    %p340 = scmp.lt.s32.totalorder %s19, 3
    %p341 = pnand %p339, %p340
    %p342 = pneg %p341
    // Predicated region
    $region61: #{engagement_forward.1} parent=5 // pred_check
      _
    $region62: #{engagement_forward.1} parent=5 // pred_check_branch
      %344 = sbr.rel (%p341) target = $region64
    $region63: #{engagement_forward.1} parent=5 // pred_region
      %s345 = ssub.s32 %s19, 1
      %s346 = smul.u32 8, %s24
      %p347 = scmp.lt.s32.totalorder %s346, 15
      %s348 = scalar_select %p347, %s346, 15
      %s349 = smul.addr %s348, 4
      %s350 = scalar_lea.vmem %s0, %s349
      %p351 = pneg %p45
      %p352 = pneg %p42
      %p353 = pneg %p66
      %p354 = pneg %p63
      %p355 = pneg %p87
      %p356 = pneg %p84
      %p357 = pneg %p108
      %p358 = pneg %p105
      %p359 = pneg %p129
      %p360 = pneg %p126
      %p361 = pneg %p150
      %p362 = pneg %p147
      %p363 = pneg %p171
      %p364 = pneg %p168
      %p365 = pneg %p192
      %p366 = pneg %p189
      %p367 = pneg %p213
      %p368 = pneg %p210
      %p369 = pneg %p234
      %p370 = pneg %p231
      %p371 = pneg %p255
      %p372 = pneg %p252
      %p373 = pneg %p281
      %p374 = pneg %p278
      %p375 = scmp.lt.s32.totalorder %s24, 1
      %s376 = scalar_select %p375, %s24, 1
      %s377 = smul.addr %s376, 8
      %s378 = scalar_lea.vmem %s11, %s377
      %s379 = smul.u32 8, %s24
      %p380 = scmp.lt.s32.totalorder %s379, 15
      %s381 = scalar_select %p380, %s379, 15
      %s382 = smul.addr %s381, 4
      %s383 = scalar_lea.vmem %s0, %s382
      %s384 = smul.u32 8, %s24
      %p385 = scmp.lt.s32.totalorder %s24, 1
      %s386 = scalar_select %p385, %s24, 1
      %s387 = smul.addr %s386, 8
      %s388 = scalar_lea.vmem %s11, %s387
      %v390 = vlaneseq
      %v391 = vand.u32 %v390, 127
      %v392 = vadd.s32 %v391, 128
      %v393 = vadd.s32 %v391, 256
      %v394 = vadd.s32 %v391, 384
      %v395 = vadd.s32 %v391, 512
      %v396 = vadd.s32 %v391, 640
      %v397 = vadd.s32 %v391, 768
      %v398 = vadd.s32 %v391, 896
      %v399 = vand.u32 %v391, 15
      %v400 = vand.u32 %v392, 15
      %v401 = vand.u32 %v393, 15
      %v402 = vand.u32 %v394, 15
      %v403 = vand.u32 %v395, 15
      %v404 = vand.u32 %v396, 15
      %v405 = vand.u32 %v397, 15
      %v406 = vand.u32 %v398, 15
      %v407 = vshra.s32 %v391, 4
      %v408 = vshra.s32 %v392, 4
      %v409 = vshra.s32 %v393, 4
      %v410 = vshra.s32 %v394, 4
      %v411 = vshra.s32 %v395, 4
      %v412 = vshra.s32 %v396, 4
      %v413 = vshra.s32 %v397, 4
      %v414 = vshra.s32 %v398, 4
      %v415 = vand.u32 %v407, 15
      %v416 = vand.u32 %v408, 15
      %v417 = vand.u32 %v409, 15
      %v418 = vand.u32 %v410, 15
      %v419 = vand.u32 %v411, 15
      %v420 = vand.u32 %v412, 15
      %v421 = vand.u32 %v413, 15
      %v422 = vand.u32 %v414, 15
      %v423 = vld [vmem:[%s383] sm:$0x77]
      %v424 = vld [vmem:[%s383 + $0x8] sm:$0x77]
      %v425 = vld [vmem:[%s383 + $0x10] sm:$0x77]
      %v426 = vld [vmem:[%s383 + $0x18] sm:$0x77]
      %v431 = vcombine.high %v423, %v423
      %v432 = vcombine.high %v424, %v424
      %v433 = vcombine.high %v425, %v425
      %v434 = vcombine.high %v426, %v426
      %vm439 = vcmask 1042432
      %v440 = vsel %vm439, %v423, 0.0
      %v441 = vsel %vm439, %v431, 0.0
      %v442 = vsel %vm439, %v424, 0.0
      %v443 = vsel %vm439, %v432, 0.0
      %v444 = vsel %vm439, %v425, 0.0
      %v445 = vsel %vm439, %v433, 0.0
      %v446 = vsel %vm439, %v426, 0.0
      %v447 = vsel %vm439, %v434, 0.0
      %vm448 = vcmp.ge.s32.totalorder %v399, 1
      %vm449 = vcmp.ge.s32.totalorder %v400, 1
      %vm450 = vcmp.ge.s32.totalorder %v401, 1
      %vm451 = vcmp.ge.s32.totalorder %v402, 1
      %vm452 = vcmp.ge.s32.totalorder %v403, 1
      %vm453 = vcmp.ge.s32.totalorder %v404, 1
      %vm454 = vcmp.ge.s32.totalorder %v405, 1
      %vm455 = vcmp.ge.s32.totalorder %v406, 1
      %v456 = vsel %vm448, 1, 0
      %v457 = vsel %vm449, 1, 0
      %v458 = vsel %vm450, 1, 0
      %v459 = vsel %vm451, 1, 0
      %v460 = vsel %vm452, 1, 0
      %v461 = vsel %vm453, 1, 0
      %v462 = vsel %vm454, 1, 0
      %v463 = vsel %vm455, 1, 0
      %v464 = vcvt.s32.f32 %v456
      %v465 = vcvt.s32.f32 %v457
      %v466 = vcvt.s32.f32 %v458
      %v467 = vcvt.s32.f32 %v459
      %v468 = vcvt.s32.f32 %v460
      %v469 = vcvt.s32.f32 %v461
      %v470 = vcvt.s32.f32 %v462
      %v471 = vcvt.s32.f32 %v463
      %vm472 = vcmp.lt.s32.totalorder %v399, 15
      %vm473 = vcmp.lt.s32.totalorder %v400, 15
      %vm474 = vcmp.lt.s32.totalorder %v401, 15
      %vm475 = vcmp.lt.s32.totalorder %v402, 15
      %vm476 = vcmp.lt.s32.totalorder %v403, 15
      %vm477 = vcmp.lt.s32.totalorder %v404, 15
      %vm478 = vcmp.lt.s32.totalorder %v405, 15
      %vm479 = vcmp.lt.s32.totalorder %v406, 15
      %v480 = vsel %vm472, 1, 0
      %v481 = vsel %vm473, 1, 0
      %v482 = vsel %vm474, 1, 0
      %v483 = vsel %vm475, 1, 0
      %v484 = vsel %vm476, 1, 0
      %v485 = vsel %vm477, 1, 0
      %v486 = vsel %vm478, 1, 0
      %v487 = vsel %vm479, 1, 0
      %v488 = vcvt.s32.f32 %v480
      %v489 = vcvt.s32.f32 %v481
      %v490 = vcvt.s32.f32 %v482
      %v491 = vcvt.s32.f32 %v483
      %v492 = vcvt.s32.f32 %v484
      %v493 = vcvt.s32.f32 %v485
      %v494 = vcvt.s32.f32 %v486
      %v495 = vcvt.s32.f32 %v487
      %vm496 = vcmp.ge.s32.totalorder %v415, 1
      %vm497 = vcmp.ge.s32.totalorder %v416, 1
      %vm498 = vcmp.ge.s32.totalorder %v417, 1
      %vm499 = vcmp.ge.s32.totalorder %v418, 1
      %vm500 = vcmp.ge.s32.totalorder %v419, 1
      %vm501 = vcmp.ge.s32.totalorder %v420, 1
      %vm502 = vcmp.ge.s32.totalorder %v421, 1
      %vm503 = vcmp.ge.s32.totalorder %v422, 1
      %v504 = vsel %vm496, 1, 0
      %v505 = vsel %vm497, 1, 0
      %v506 = vsel %vm498, 1, 0
      %v507 = vsel %vm499, 1, 0
      %v508 = vsel %vm500, 1, 0
      %v509 = vsel %vm501, 1, 0
      %v510 = vsel %vm502, 1, 0
      %v511 = vsel %vm503, 1, 0
      %v512 = vcvt.s32.f32 %v504
      %v513 = vcvt.s32.f32 %v505
      %v514 = vcvt.s32.f32 %v506
      %v515 = vcvt.s32.f32 %v507
      %v516 = vcvt.s32.f32 %v508
      %v517 = vcvt.s32.f32 %v509
      %v518 = vcvt.s32.f32 %v510
      %v519 = vcvt.s32.f32 %v511
      %vm520 = vcmp.lt.s32.totalorder %v415, 15
      %vm521 = vcmp.lt.s32.totalorder %v416, 15
      %vm522 = vcmp.lt.s32.totalorder %v417, 15
      %vm523 = vcmp.lt.s32.totalorder %v418, 15
      %vm524 = vcmp.lt.s32.totalorder %v419, 15
      %vm525 = vcmp.lt.s32.totalorder %v420, 15
      %vm526 = vcmp.lt.s32.totalorder %v421, 15
      %vm527 = vcmp.lt.s32.totalorder %v422, 15
      %v528 = vsel %vm520, 1, 0
      %v529 = vsel %vm521, 1, 0
      %v530 = vsel %vm522, 1, 0
      %v531 = vsel %vm523, 1, 0
      %v532 = vsel %vm524, 1, 0
      %v533 = vsel %vm525, 1, 0
      %v534 = vsel %vm526, 1, 0
      %v535 = vsel %vm527, 1, 0
      %v536 = vcvt.s32.f32 %v528
      %v537 = vcvt.s32.f32 %v529
      %v538 = vcvt.s32.f32 %v530
      %v539 = vcvt.s32.f32 %v531
      %v540 = vcvt.s32.f32 %v532
      %v541 = vcvt.s32.f32 %v533
      %v542 = vcvt.s32.f32 %v534
      %v543 = vcvt.s32.f32 %v535
      %v544 = vmul.f32 %v512, %v464
      %v545 = vmul.f32 %v513, %v465
      %v546 = vmul.f32 %v514, %v466
      %v547 = vmul.f32 %v515, %v467
      %v548 = vmul.f32 %v516, %v468
      %v549 = vmul.f32 %v517, %v469
      %v550 = vmul.f32 %v518, %v470
      %v551 = vmul.f32 %v519, %v471
      %v552 = vmul.f32 %v512, %v488
      %v553 = vmul.f32 %v513, %v489
      %v554 = vmul.f32 %v514, %v490
      %v555 = vmul.f32 %v515, %v491
      %v556 = vmul.f32 %v516, %v492
      %v557 = vmul.f32 %v517, %v493
      %v558 = vmul.f32 %v518, %v494
      %v559 = vmul.f32 %v519, %v495
      %v560 = vmul.f32 %v536, %v464
      %v561 = vmul.f32 %v537, %v465
      %v562 = vmul.f32 %v538, %v466
      %v563 = vmul.f32 %v539, %v467
      %v564 = vmul.f32 %v540, %v468
      %v565 = vmul.f32 %v541, %v469
      %v566 = vmul.f32 %v542, %v470
      %v567 = vmul.f32 %v543, %v471
      %v568 = vmul.f32 %v536, %v488
      %v569 = vmul.f32 %v537, %v489
      %v570 = vmul.f32 %v538, %v490
      %v571 = vmul.f32 %v539, %v491
      %v572 = vmul.f32 %v540, %v492
      %v573 = vmul.f32 %v541, %v493
      %v574 = vmul.f32 %v542, %v494
      %v575 = vmul.f32 %v543, %v495
      %576 = vrot.lane.b32.xlu0 %v440, 17
      %v577 = vpop.permute.xlu0 %576
      %578 = vrot.lane.b32.xlu0 %v441, 17
      %v579 = vpop.permute.xlu0 %578
      %580 = vrot.lane.b32.xlu0 %v442, 17
      %v581 = vpop.permute.xlu0 %580
      %582 = vrot.lane.b32.xlu0 %v443, 17
      %v583 = vpop.permute.xlu0 %582
      %584 = vrot.lane.b32.xlu0 %v444, 17
      %v585 = vpop.permute.xlu0 %584
      %586 = vrot.lane.b32.xlu0 %v445, 17
      %v587 = vpop.permute.xlu0 %586
      %588 = vrot.lane.b32.xlu0 %v446, 17
      %v589 = vpop.permute.xlu0 %588
      %590 = vrot.lane.b32.xlu0 %v447, 17
      %v591 = vpop.permute.xlu0 %590
      %vm592 = vcmp.lt.s32.totalorder %v391, 17
      %v593 = vsel %vm592, %v589, %v591
      %v594 = vsel %vm592, %v587, %v589
      %v595 = vsel %vm592, %v585, %v587
      %v596 = vsel %vm592, %v583, %v585
      %v597 = vsel %vm592, %v581, %v583
      %v598 = vsel %vm592, %v579, %v581
      %v599 = vsel %vm592, %v577, %v579
      %v600 = vsel %vm592, %v591, %v577
      %v601 = vmul.f32 %v600, %v544
      %v602 = vmul.f32 %v599, %v545
      %v603 = vmul.f32 %v598, %v546
      %v604 = vmul.f32 %v597, %v547
      %v605 = vmul.f32 %v596, %v548
      %v606 = vmul.f32 %v595, %v549
      %v607 = vmul.f32 %v594, %v550
      %v608 = vmul.f32 %v593, %v551
      %609 = vrot.lane.b32.xlu0 %v440, 16
      %v610 = vpop.permute.xlu0 %609
      %611 = vrot.lane.b32.xlu0 %v441, 16
      %v612 = vpop.permute.xlu0 %611
      %613 = vrot.lane.b32.xlu0 %v442, 16
      %v614 = vpop.permute.xlu0 %613
      %615 = vrot.lane.b32.xlu0 %v443, 16
      %v616 = vpop.permute.xlu0 %615
      %617 = vrot.lane.b32.xlu0 %v444, 16
      %v618 = vpop.permute.xlu0 %617
      %619 = vrot.lane.b32.xlu0 %v445, 16
      %v620 = vpop.permute.xlu0 %619
      %621 = vrot.lane.b32.xlu0 %v446, 16
      %v622 = vpop.permute.xlu0 %621
      %623 = vrot.lane.b32.xlu0 %v447, 16
      %v624 = vpop.permute.xlu0 %623
      %vm625 = vcmp.lt.s32.totalorder %v391, 16
      %v626 = vsel %vm625, %v622, %v624
      %v627 = vsel %vm625, %v620, %v622
      %v628 = vsel %vm625, %v618, %v620
      %v629 = vsel %vm625, %v616, %v618
      %v630 = vsel %vm625, %v614, %v616
      %v631 = vsel %vm625, %v612, %v614
      %v632 = vsel %vm625, %v610, %v612
      %v633 = vsel %vm625, %v624, %v610
      %v634 = vmul.f32 %v633, %v512
      %v635 = vmul.f32 %v632, %v513
      %v636 = vmul.f32 %v631, %v514
      %v637 = vmul.f32 %v630, %v515
      %v638 = vmul.f32 %v629, %v516
      %v639 = vmul.f32 %v628, %v517
      %v640 = vmul.f32 %v627, %v518
      %v641 = vmul.f32 %v626, %v519
      %642 = vrot.lane.b32.xlu0 %v440, 15
      %v643 = vpop.permute.xlu0 %642
      %644 = vrot.lane.b32.xlu0 %v441, 15
      %v645 = vpop.permute.xlu0 %644
      %646 = vrot.lane.b32.xlu0 %v442, 15
      %v647 = vpop.permute.xlu0 %646
      %648 = vrot.lane.b32.xlu0 %v443, 15
      %v649 = vpop.permute.xlu0 %648
      %650 = vrot.lane.b32.xlu0 %v444, 15
      %v651 = vpop.permute.xlu0 %650
      %652 = vrot.lane.b32.xlu0 %v445, 15
      %v653 = vpop.permute.xlu0 %652
      %654 = vrot.lane.b32.xlu0 %v446, 15
      %v655 = vpop.permute.xlu0 %654
      %656 = vrot.lane.b32.xlu0 %v447, 15
      %v657 = vpop.permute.xlu0 %656
      %vm658 = vcmp.lt.s32.totalorder %v391, 15
      %v659 = vsel %vm658, %v655, %v657
      %v660 = vsel %vm658, %v653, %v655
      %v661 = vsel %vm658, %v651, %v653
      %v662 = vsel %vm658, %v649, %v651
      %v663 = vsel %vm658, %v647, %v649
      %v664 = vsel %vm658, %v645, %v647
      %v665 = vsel %vm658, %v643, %v645
      %v666 = vsel %vm658, %v657, %v643
      %v667 = vmul.f32 %v666, %v552
      %v668 = vmul.f32 %v665, %v553
      %v669 = vmul.f32 %v664, %v554
      %v670 = vmul.f32 %v663, %v555
      %v671 = vmul.f32 %v662, %v556
      %v672 = vmul.f32 %v661, %v557
      %v673 = vmul.f32 %v660, %v558
      %v674 = vmul.f32 %v659, %v559
      %675 = vrot.lane.b32.xlu0 %v440, 1
      %v676 = vpop.permute.xlu0 %675
      %677 = vrot.lane.b32.xlu0 %v441, 1
      %v678 = vpop.permute.xlu0 %677
      %679 = vrot.lane.b32.xlu0 %v442, 1
      %v680 = vpop.permute.xlu0 %679
      %681 = vrot.lane.b32.xlu0 %v443, 1
      %v682 = vpop.permute.xlu0 %681
      %683 = vrot.lane.b32.xlu0 %v444, 1
      %v684 = vpop.permute.xlu0 %683
      %685 = vrot.lane.b32.xlu0 %v445, 1
      %v686 = vpop.permute.xlu0 %685
      %687 = vrot.lane.b32.xlu0 %v446, 1
      %v688 = vpop.permute.xlu0 %687
      %689 = vrot.lane.b32.xlu0 %v447, 1
      %v690 = vpop.permute.xlu0 %689
      %vm691 = vcmp.lt.s32.totalorder %v391, 1
      %v692 = vsel %vm691, %v688, %v690
      %v693 = vsel %vm691, %v686, %v688
      %v694 = vsel %vm691, %v684, %v686
      %v695 = vsel %vm691, %v682, %v684
      %v696 = vsel %vm691, %v680, %v682
      %v697 = vsel %vm691, %v678, %v680
      %v698 = vsel %vm691, %v676, %v678
      %v699 = vsel %vm691, %v690, %v676
      %v700 = vmul.f32 %v699, %v464
      %v701 = vmul.f32 %v698, %v465
      %v702 = vmul.f32 %v697, %v466
      %v703 = vmul.f32 %v696, %v467
      %v704 = vmul.f32 %v695, %v468
      %v705 = vmul.f32 %v694, %v469
      %v706 = vmul.f32 %v693, %v470
      %v707 = vmul.f32 %v692, %v471
      %708 = vrot.lane.b32.xlu0 %v440, 127
      %v709 = vpop.permute.xlu0 %708
      %710 = vrot.lane.b32.xlu0 %v441, 127
      %v711 = vpop.permute.xlu0 %710
      %712 = vrot.lane.b32.xlu0 %v442, 127
      %v713 = vpop.permute.xlu0 %712
      %714 = vrot.lane.b32.xlu0 %v443, 127
      %v715 = vpop.permute.xlu0 %714
      %716 = vrot.lane.b32.xlu0 %v444, 127
      %v717 = vpop.permute.xlu0 %716
      %718 = vrot.lane.b32.xlu0 %v445, 127
      %v719 = vpop.permute.xlu0 %718
      %720 = vrot.lane.b32.xlu0 %v446, 127
      %v721 = vpop.permute.xlu0 %720
      %722 = vrot.lane.b32.xlu0 %v447, 127
      %v723 = vpop.permute.xlu0 %722
      %vm724 = vcmp.lt.s32.totalorder %v391, 127
      %v725 = vsel %vm724, %v721, %v723
      %v726 = vsel %vm724, %v719, %v721
      %v727 = vsel %vm724, %v717, %v719
      %v728 = vsel %vm724, %v715, %v717
      %v729 = vsel %vm724, %v713, %v715
      %v730 = vsel %vm724, %v711, %v713
      %v731 = vsel %vm724, %v709, %v711
      %v732 = vsel %vm724, %v723, %v709
      %v733 = vmul.f32 %v731, %v488
      %v734 = vmul.f32 %v730, %v489
      %v735 = vmul.f32 %v729, %v490
      %v736 = vmul.f32 %v728, %v491
      %v737 = vmul.f32 %v727, %v492
      %v738 = vmul.f32 %v726, %v493
      %v739 = vmul.f32 %v725, %v494
      %v740 = vmul.f32 %v732, %v495
      %741 = vrot.lane.b32.xlu0 %v440, 113
      %v742 = vpop.permute.xlu0 %741
      %743 = vrot.lane.b32.xlu0 %v441, 113
      %v744 = vpop.permute.xlu0 %743
      %745 = vrot.lane.b32.xlu0 %v442, 113
      %v746 = vpop.permute.xlu0 %745
      %747 = vrot.lane.b32.xlu0 %v443, 113
      %v748 = vpop.permute.xlu0 %747
      %749 = vrot.lane.b32.xlu0 %v444, 113
      %v750 = vpop.permute.xlu0 %749
      %751 = vrot.lane.b32.xlu0 %v445, 113
      %v752 = vpop.permute.xlu0 %751
      %753 = vrot.lane.b32.xlu0 %v446, 113
      %v754 = vpop.permute.xlu0 %753
      %755 = vrot.lane.b32.xlu0 %v447, 113
      %v756 = vpop.permute.xlu0 %755
      %vm757 = vcmp.lt.s32.totalorder %v391, 113
      %v758 = vsel %vm757, %v754, %v756
      %v759 = vsel %vm757, %v752, %v754
      %v760 = vsel %vm757, %v750, %v752
      %v761 = vsel %vm757, %v748, %v750
      %v762 = vsel %vm757, %v746, %v748
      %v763 = vsel %vm757, %v744, %v746
      %v764 = vsel %vm757, %v742, %v744
      %v765 = vsel %vm757, %v756, %v742
      %v766 = vmul.f32 %v764, %v560
      %v767 = vmul.f32 %v763, %v561
      %v768 = vmul.f32 %v762, %v562
      %v769 = vmul.f32 %v761, %v563
      %v770 = vmul.f32 %v760, %v564
      %v771 = vmul.f32 %v759, %v565
      %v772 = vmul.f32 %v758, %v566
      %v773 = vmul.f32 %v765, %v567
      %774 = vrot.lane.b32.xlu0 %v440, 112
      %v775 = vpop.permute.xlu0 %774
      %776 = vrot.lane.b32.xlu0 %v441, 112
      %v777 = vpop.permute.xlu0 %776
      %778 = vrot.lane.b32.xlu0 %v442, 112
      %v779 = vpop.permute.xlu0 %778
      %780 = vrot.lane.b32.xlu0 %v443, 112
      %v781 = vpop.permute.xlu0 %780
      %782 = vrot.lane.b32.xlu0 %v444, 112
      %v783 = vpop.permute.xlu0 %782
      %784 = vrot.lane.b32.xlu0 %v445, 112
      %v785 = vpop.permute.xlu0 %784
      %786 = vrot.lane.b32.xlu0 %v446, 112
      %v787 = vpop.permute.xlu0 %786
      %788 = vrot.lane.b32.xlu0 %v447, 112
      %v789 = vpop.permute.xlu0 %788
      %vm790 = vcmp.lt.s32.totalorder %v391, 112
      %v791 = vsel %vm790, %v787, %v789
      %v792 = vsel %vm790, %v785, %v787
      %v793 = vsel %vm790, %v783, %v785
      %v794 = vsel %vm790, %v781, %v783
      %v795 = vsel %vm790, %v779, %v781
      %v796 = vsel %vm790, %v777, %v779
      %v797 = vsel %vm790, %v775, %v777
      %v798 = vsel %vm790, %v789, %v775
      %v799 = vmul.f32 %v797, %v536
      %v800 = vmul.f32 %v796, %v537
      %v801 = vmul.f32 %v795, %v538
      %v802 = vmul.f32 %v794, %v539
      %v803 = vmul.f32 %v793, %v540
      %v804 = vmul.f32 %v792, %v541
      %v805 = vmul.f32 %v791, %v542
      %v806 = vmul.f32 %v798, %v543
      %807 = vrot.lane.b32.xlu0 %v440, 111
      %v808 = vpop.permute.xlu0 %807
      %809 = vrot.lane.b32.xlu0 %v441, 111
      %v810 = vpop.permute.xlu0 %809
      %811 = vrot.lane.b32.xlu0 %v442, 111
      %v812 = vpop.permute.xlu0 %811
      %813 = vrot.lane.b32.xlu0 %v443, 111
      %v814 = vpop.permute.xlu0 %813
      %815 = vrot.lane.b32.xlu0 %v444, 111
      %v816 = vpop.permute.xlu0 %815
      %817 = vrot.lane.b32.xlu0 %v445, 111
      %v818 = vpop.permute.xlu0 %817
      %819 = vrot.lane.b32.xlu0 %v446, 111
      %v820 = vpop.permute.xlu0 %819
      %821 = vrot.lane.b32.xlu0 %v447, 111
      %v822 = vpop.permute.xlu0 %821
      %vm823 = vcmp.lt.s32.totalorder %v391, 111
      %v824 = vsel %vm823, %v820, %v822
      %v825 = vsel %vm823, %v818, %v820
      %v826 = vsel %vm823, %v816, %v818
      %v827 = vsel %vm823, %v814, %v816
      %v828 = vsel %vm823, %v812, %v814
      %v829 = vsel %vm823, %v810, %v812
      %v830 = vsel %vm823, %v808, %v810
      %v831 = vsel %vm823, %v822, %v808
      %v832 = vmul.f32 %v830, %v568
      %v833 = vmul.f32 %v829, %v569
      %v834 = vmul.f32 %v828, %v570
      %v835 = vmul.f32 %v827, %v571
      %v836 = vmul.f32 %v826, %v572
      %v837 = vmul.f32 %v825, %v573
      %v838 = vmul.f32 %v824, %v574
      %v839 = vmul.f32 %v831, %v575
      %v840 = vpack.c.bf16 %v634, %v601
      %v841 = vpack.c.bf16 %v635, %v602
      %v842 = vpack.c.bf16 %v636, %v603
      %v843 = vpack.c.bf16 %v637, %v604
      %v844 = vpack.c.bf16 %v638, %v605
      %v845 = vpack.c.bf16 %v639, %v606
      %v846 = vpack.c.bf16 %v640, %v607
      %v847 = vpack.c.bf16 %v641, %v608
      %v848 = vpack.c.bf16 %v700, %v667
      %v849 = vpack.c.bf16 %v701, %v668
      %v850 = vpack.c.bf16 %v702, %v669
      %v851 = vpack.c.bf16 %v703, %v670
      %v852 = vpack.c.bf16 %v704, %v671
      %v853 = vpack.c.bf16 %v705, %v672
      %v854 = vpack.c.bf16 %v706, %v673
      %v855 = vpack.c.bf16 %v707, %v674
      %v856 = vpack.c.bf16 %v733, %v440
      %v857 = vpack.c.bf16 %v734, %v441
      %v858 = vpack.c.bf16 %v735, %v442
      %v859 = vpack.c.bf16 %v736, %v443
      %v860 = vpack.c.bf16 %v737, %v444
      %v861 = vpack.c.bf16 %v738, %v445
      %v862 = vpack.c.bf16 %v739, %v446
      %v863 = vpack.c.bf16 %v740, %v447
      %v864 = vpack.c.bf16 %v799, %v766
      %v865 = vpack.c.bf16 %v800, %v767
      %v866 = vpack.c.bf16 %v801, %v768
      %v867 = vpack.c.bf16 %v802, %v769
      %v868 = vpack.c.bf16 %v803, %v770
      %v869 = vpack.c.bf16 %v804, %v771
      %v870 = vpack.c.bf16 %v805, %v772
      %v871 = vpack.c.bf16 %v806, %v773
      %v872 = vpack.c.bf16 %v832, %v832
      %v873 = vpack.c.bf16 %v833, %v833
      %v874 = vpack.c.bf16 %v834, %v834
      %v875 = vpack.c.bf16 %v835, %v835
      %v876 = vpack.c.bf16 %v836, %v836
      %v877 = vpack.c.bf16 %v837, %v837
      %v878 = vpack.c.bf16 %v838, %v838
      %v879 = vpack.c.bf16 %v839, %v839
      %v880 = vld [vmem:[%s1] sm:$0xf]
      %v881 = vld [vmem:[%s1 + $0x4] sm:$0xf]
      %v882 = vld [vmem:[%s2] sm:$0xff]
      %v883 = vld [vmem:[%s2 + $0x8] sm:$0xff]
      %885 = vset.pattern.permute.xlu0 0
      %886 = vperm.xlu0 %885, %v882
      %v887 = vpop.permute.xlu0 %886
      %890 = vset.pattern.permute.xlu0 0
      %891 = vperm.xlu0 %890, %v883
      %v892 = vpop.permute.xlu0 %891
      %v896 = vunpack.c.l.b16 %v880
      %v897 = vunpack.c.l.b16 %v881
      %v898 = vpack.c.b16 %v897, %v896
      %vm899 = vcmask 588800
      %v901 = vsel %vm899, %v898, 0
      %vm903 = vcmask 1043456
      %v905 = vsel %vm903, %v872, 0
      %v908 = vsel %vm903, %v873, 0
      %v911 = vsel %vm903, %v874, 0
      %v914 = vsel %vm903, %v875, 0
      %v917 = vsel %vm903, %v876, 0
      %v920 = vsel %vm903, %v877, 0
      %v923 = vsel %vm903, %v878, 0
      %v926 = vsel %vm903, %v879, 0
      %928 = vmatprep.subr.bf16.mxu0 0
      %929 = vmatpush1.bf16.msra.mxu0 0
      %930 = vmatprep.subr.bf16.mxu0 0
      %931 = vmatpush1.bf16.msra.mxu0 0
      %932 = vmatprep.subr.bf16.mxu0 0
      %933 = vmatpush1.bf16.msra.mxu0 0
      %934 = vmatprep.subr.bf16.mxu0 %v908
      %935 = vmatpush1.bf16.msra.mxu0 %v905
      %936 = vmatprep.subr.bf16.mxu0 %v865
      %937 = vmatpush1.bf16.msra.mxu0 %v864
      %938 = vmatprep.subr.bf16.mxu0 %v857
      %939 = vmatpush1.bf16.msra.mxu0 %v856
      %940 = vmatprep.subr.bf16.mxu0 %v849
      %941 = vmatpush1.bf16.msra.mxu0 %v848
      %942 = vmatprep.subr.bf16.mxu0 %v841
      %943 = vmatpush1.bf16.msra.mxu0 %v840
      %944 = vmatprep.subr.bf16.mxu0 0
      %945 = vmatpush2.bf16.msra.mxu0 0
      %946 = vmatprep.subr.bf16.mxu0 0
      %947 = vmatpush2.bf16.msra.mxu0 0
      %948 = vmatprep.subr.bf16.mxu0 0
      %949 = vmatpush2.bf16.msra.mxu0 0
      %950 = vmatprep.subr.bf16.mxu0 0
      %951 = vmatpush2.bf16.msra.mxu0 0
      %952 = vmatprep.subr.bf16.mxu0 0
      %953 = vmatpush2.bf16.msra.mxu0 0
      %954 = vmatprep.subr.bf16.mxu0 0
      %955 = vmatpush2.bf16.msra.mxu0 0
      %956 = vmatprep.subr.bf16.mxu0 0
      %957 = vmatpush2.bf16.msra.mxu0 0
      %958 = vmatprep.subr.bf16.mxu0 0
      %959 = vmatpush2.bf16.msra.mxu0 0
      %960 = vmatprep.mubr.bf16.mxu0 0
      %961 = vmatmul.mubr.bf16.gmra.mxu0 %v901
      %v962 = vpop.f32.mrf.mxu0
      %v963 = vadd.f32 %v887, %v962
      %v964 = vpop.f32.mrf.mxu0
      %v965 = vadd.f32 %v887, %v964
      %v966 = vpop.f32.mrf.mxu0
      %v967 = vadd.f32 %v892, %v966
      %v968 = vpop.f32.mrf.mxu0
      %v969 = vadd.f32 %v892, %v968
      %970 = vdwg.mxu0
      %971 = vmatprep.subr.bf16.mxu0 0
      %972 = vmatpush1.bf16.msra.mxu0 0
      %973 = vmatprep.subr.bf16.mxu0 0
      %974 = vmatpush1.bf16.msra.mxu0 0
      %975 = vmatprep.subr.bf16.mxu0 0
      %976 = vmatpush1.bf16.msra.mxu0 0
      %977 = vmatprep.subr.bf16.mxu0 %v914
      %978 = vmatpush1.bf16.msra.mxu0 %v911
      %979 = vmatprep.subr.bf16.mxu0 %v867
      %980 = vmatpush1.bf16.msra.mxu0 %v866
      %981 = vmatprep.subr.bf16.mxu0 %v859
      %982 = vmatpush1.bf16.msra.mxu0 %v858
      %983 = vmatprep.subr.bf16.mxu0 %v851
      %984 = vmatpush1.bf16.msra.mxu0 %v850
      %985 = vmatprep.subr.bf16.mxu0 %v843
      %986 = vmatpush1.bf16.msra.mxu0 %v842
      %987 = vmatprep.subr.bf16.mxu0 0
      %988 = vmatpush2.bf16.msra.mxu0 0
      %989 = vmatprep.subr.bf16.mxu0 0
      %990 = vmatpush2.bf16.msra.mxu0 0
      %991 = vmatprep.subr.bf16.mxu0 0
      %992 = vmatpush2.bf16.msra.mxu0 0
      %993 = vmatprep.subr.bf16.mxu0 0
      %994 = vmatpush2.bf16.msra.mxu0 0
      %995 = vmatprep.subr.bf16.mxu0 0
      %996 = vmatpush2.bf16.msra.mxu0 0
      %997 = vmatprep.subr.bf16.mxu0 0
      %998 = vmatpush2.bf16.msra.mxu0 0
      %999 = vmatprep.subr.bf16.mxu0 0
      %1000 = vmatpush2.bf16.msra.mxu0 0
      %1001 = vmatprep.subr.bf16.mxu0 0
      %1002 = vmatpush2.bf16.msra.mxu0 0
      %1003 = vmatprep.mubr.bf16.mxu0 0
      %1004 = vmatmul.mubr.bf16.gmra.mxu0 %v901
      %v1005 = vpop.f32.mrf.mxu0
      %v1006 = vadd.f32 %v887, %v1005
      %v1007 = vpop.f32.mrf.mxu0
      %v1008 = vadd.f32 %v887, %v1007
      %v1009 = vpop.f32.mrf.mxu0
      %v1010 = vadd.f32 %v892, %v1009
      %v1011 = vpop.f32.mrf.mxu0
      %v1012 = vadd.f32 %v892, %v1011
      %1013 = vdwg.mxu0
      %1014 = vmatprep.subr.bf16.mxu0 0
      %1015 = vmatpush1.bf16.msra.mxu0 0
      %1016 = vmatprep.subr.bf16.mxu0 0
      %1017 = vmatpush1.bf16.msra.mxu0 0
      %1018 = vmatprep.subr.bf16.mxu0 0
      %1019 = vmatpush1.bf16.msra.mxu0 0
      %1020 = vmatprep.subr.bf16.mxu0 %v920
      %1021 = vmatpush1.bf16.msra.mxu0 %v917
      %1022 = vmatprep.subr.bf16.mxu0 %v869
      %1023 = vmatpush1.bf16.msra.mxu0 %v868
      %1024 = vmatprep.subr.bf16.mxu0 %v861
      %1025 = vmatpush1.bf16.msra.mxu0 %v860
      %1026 = vmatprep.subr.bf16.mxu0 %v853
      %1027 = vmatpush1.bf16.msra.mxu0 %v852
      %1028 = vmatprep.subr.bf16.mxu0 %v845
      %1029 = vmatpush1.bf16.msra.mxu0 %v844
      %1030 = vmatprep.subr.bf16.mxu0 0
      %1031 = vmatpush2.bf16.msra.mxu0 0
      %1032 = vmatprep.subr.bf16.mxu0 0
      %1033 = vmatpush2.bf16.msra.mxu0 0
      %1034 = vmatprep.subr.bf16.mxu0 0
      %1035 = vmatpush2.bf16.msra.mxu0 0
      %1036 = vmatprep.subr.bf16.mxu0 0
      %1037 = vmatpush2.bf16.msra.mxu0 0
      %1038 = vmatprep.subr.bf16.mxu0 0
      %1039 = vmatpush2.bf16.msra.mxu0 0
      %1040 = vmatprep.subr.bf16.mxu0 0
      %1041 = vmatpush2.bf16.msra.mxu0 0
      %1042 = vmatprep.subr.bf16.mxu0 0
      %1043 = vmatpush2.bf16.msra.mxu0 0
      %1044 = vmatprep.subr.bf16.mxu0 0
      %1045 = vmatpush2.bf16.msra.mxu0 0
      %1046 = vmatprep.mubr.bf16.mxu0 0
      %1047 = vmatmul.mubr.bf16.gmra.mxu0 %v901
      %v1048 = vpop.f32.mrf.mxu0
      %v1049 = vadd.f32 %v887, %v1048
      %v1050 = vpop.f32.mrf.mxu0
      %v1051 = vadd.f32 %v887, %v1050
      %v1052 = vpop.f32.mrf.mxu0
      %v1053 = vadd.f32 %v892, %v1052
      %v1054 = vpop.f32.mrf.mxu0
      %v1055 = vadd.f32 %v892, %v1054
      %1056 = vdwg.mxu0
      %1057 = vmatprep.subr.bf16.mxu0 0
      %1058 = vmatpush1.bf16.msra.mxu0 0
      %1059 = vmatprep.subr.bf16.mxu0 0
      %1060 = vmatpush1.bf16.msra.mxu0 0
      %1061 = vmatprep.subr.bf16.mxu0 0
      %1062 = vmatpush1.bf16.msra.mxu0 0
      %1063 = vmatprep.subr.bf16.mxu0 %v926
      %1064 = vmatpush1.bf16.msra.mxu0 %v923
      %1065 = vmatprep.subr.bf16.mxu0 %v871
      %1066 = vmatpush1.bf16.msra.mxu0 %v870
      %1067 = vmatprep.subr.bf16.mxu0 %v863
      %1068 = vmatpush1.bf16.msra.mxu0 %v862
      %1069 = vmatprep.subr.bf16.mxu0 %v855
      %1070 = vmatpush1.bf16.msra.mxu0 %v854
      %1071 = vmatprep.subr.bf16.mxu0 %v847
      %1072 = vmatpush1.bf16.msra.mxu0 %v846
      %1073 = vmatprep.subr.bf16.mxu0 0
      %1074 = vmatpush2.bf16.msra.mxu0 0
      %1075 = vmatprep.subr.bf16.mxu0 0
      %1076 = vmatpush2.bf16.msra.mxu0 0
      %1077 = vmatprep.subr.bf16.mxu0 0
      %1078 = vmatpush2.bf16.msra.mxu0 0
      %1079 = vmatprep.subr.bf16.mxu0 0
      %1080 = vmatpush2.bf16.msra.mxu0 0
      %1081 = vmatprep.subr.bf16.mxu0 0
      %1082 = vmatpush2.bf16.msra.mxu0 0
      %1083 = vmatprep.subr.bf16.mxu0 0
      %1084 = vmatpush2.bf16.msra.mxu0 0
      %1085 = vmatprep.subr.bf16.mxu0 0
      %1086 = vmatpush2.bf16.msra.mxu0 0
      %1087 = vmatprep.subr.bf16.mxu0 0
      %1088 = vmatpush2.bf16.msra.mxu0 0
      %1089 = vmatprep.mubr.bf16.mxu0 0
      %1090 = vmatmul.mubr.bf16.gmra.mxu0 %v901
      %v1091 = vpop.f32.mrf.mxu0
      %v1092 = vadd.f32 %v887, %v1091
      %v1093 = vpop.f32.mrf.mxu0
      %v1094 = vadd.f32 %v887, %v1093
      %v1095 = vpop.f32.mrf.mxu0
      %v1096 = vadd.f32 %v892, %v1095
      %v1097 = vpop.f32.mrf.mxu0
      %v1098 = vadd.f32 %v892, %v1097
      %1099 = vdwg.mxu0
      %v1100 = vmax.f32 %v963, 0.0
      %v1101 = vmax.f32 %v965, 0.0
      %v1102 = vmax.f32 %v1006, 0.0
      %v1103 = vmax.f32 %v1008, 0.0
      %v1104 = vmax.f32 %v1049, 0.0
      %v1105 = vmax.f32 %v1051, 0.0
      %v1106 = vmax.f32 %v1092, 0.0
      %v1107 = vmax.f32 %v1094, 0.0
      %v1108 = vmax.f32 %v967, 0.0
      %v1109 = vmax.f32 %v969, 0.0
      %v1110 = vmax.f32 %v1010, 0.0
      %v1111 = vmax.f32 %v1012, 0.0
      %v1112 = vmax.f32 %v1053, 0.0
      %v1113 = vmax.f32 %v1055, 0.0
      %v1114 = vmax.f32 %v1096, 0.0
      %v1115 = vmax.f32 %v1098, 0.0
      %1116 = vrot.lane.b32.xlu0 %v1100, 127
      %v1117 = vpop.permute.xlu0 %1116
      %1118 = vrot.lane.b32.xlu0 %v1108, 127
      %v1119 = vpop.permute.xlu0 %1118
      %1120 = vrot.lane.b32.xlu0 %v1101, 127
      %v1121 = vpop.permute.xlu0 %1120
      %1122 = vrot.lane.b32.xlu0 %v1109, 127
      %v1123 = vpop.permute.xlu0 %1122
      %1124 = vrot.lane.b32.xlu0 %v1102, 127
      %v1125 = vpop.permute.xlu0 %1124
      %1126 = vrot.lane.b32.xlu0 %v1110, 127
      %v1127 = vpop.permute.xlu0 %1126
      %1128 = vrot.lane.b32.xlu0 %v1103, 127
      %v1129 = vpop.permute.xlu0 %1128
      %1130 = vrot.lane.b32.xlu0 %v1111, 127
      %v1131 = vpop.permute.xlu0 %1130
      %1132 = vrot.lane.b32.xlu0 %v1104, 127
      %v1133 = vpop.permute.xlu0 %1132
      %1134 = vrot.lane.b32.xlu0 %v1112, 127
      %v1135 = vpop.permute.xlu0 %1134
      %1136 = vrot.lane.b32.xlu0 %v1105, 127
      %v1137 = vpop.permute.xlu0 %1136
      %1138 = vrot.lane.b32.xlu0 %v1113, 127
      %v1139 = vpop.permute.xlu0 %1138
      %1140 = vrot.lane.b32.xlu0 %v1106, 127
      %v1141 = vpop.permute.xlu0 %1140
      %1142 = vrot.lane.b32.xlu0 %v1114, 127
      %v1143 = vpop.permute.xlu0 %1142
      %1144 = vrot.lane.b32.xlu0 %v1107, 127
      %v1145 = vpop.permute.xlu0 %1144
      %1146 = vrot.lane.b32.xlu0 %v1115, 127
      %v1147 = vpop.permute.xlu0 %1146
      %v1148 = vsel %vm724, %v1141, %v1145
      %v1149 = vsel %vm724, %v1143, %v1147
      %v1150 = vsel %vm724, %v1137, %v1141
      %v1151 = vsel %vm724, %v1139, %v1143
      %v1152 = vsel %vm724, %v1133, %v1137
      %v1153 = vsel %vm724, %v1135, %v1139
      %v1154 = vsel %vm724, %v1129, %v1133
      %v1155 = vsel %vm724, %v1131, %v1135
      %v1156 = vsel %vm724, %v1125, %v1129
      %v1157 = vsel %vm724, %v1127, %v1131
      %v1158 = vsel %vm724, %v1121, %v1125
      %v1159 = vsel %vm724, %v1123, %v1127
      %v1160 = vsel %vm724, %v1117, %v1121
      %v1161 = vsel %vm724, %v1119, %v1123
      %v1162 = vsel %vm724, %v1145, %v1117
      %v1163 = vsel %vm724, %v1147, %v1119
      %v1164 = vmax.f32 %v1100, %v1160
      %v1165 = vmax.f32 %v1101, %v1158
      %v1166 = vmax.f32 %v1102, %v1156
      %v1167 = vmax.f32 %v1103, %v1154
      %v1168 = vmax.f32 %v1104, %v1152
      %v1169 = vmax.f32 %v1105, %v1150
      %v1170 = vmax.f32 %v1106, %v1148
      %v1171 = vmax.f32 %v1107, %v1162
      %v1172 = vmax.f32 %v1108, %v1161
      %v1173 = vmax.f32 %v1109, %v1159
      %v1174 = vmax.f32 %v1110, %v1157
      %v1175 = vmax.f32 %v1111, %v1155
      %v1176 = vmax.f32 %v1112, %v1153
      %v1177 = vmax.f32 %v1113, %v1151
      %v1178 = vmax.f32 %v1114, %v1149
      %v1179 = vmax.f32 %v1115, %v1163
      %1180 = vrot.lane.b32.xlu0 %v1164, 112
      %v1181 = vpop.permute.xlu0 %1180
      %1182 = vrot.lane.b32.xlu0 %v1172, 112
      %v1183 = vpop.permute.xlu0 %1182
      %1184 = vrot.lane.b32.xlu0 %v1165, 112
      %v1185 = vpop.permute.xlu0 %1184
      %1186 = vrot.lane.b32.xlu0 %v1173, 112
      %v1187 = vpop.permute.xlu0 %1186
      %1188 = vrot.lane.b32.xlu0 %v1166, 112
      %v1189 = vpop.permute.xlu0 %1188
      %1190 = vrot.lane.b32.xlu0 %v1174, 112
      %v1191 = vpop.permute.xlu0 %1190
      %1192 = vrot.lane.b32.xlu0 %v1167, 112
      %v1193 = vpop.permute.xlu0 %1192
      %1194 = vrot.lane.b32.xlu0 %v1175, 112
      %v1195 = vpop.permute.xlu0 %1194
      %1196 = vrot.lane.b32.xlu0 %v1168, 112
      %v1197 = vpop.permute.xlu0 %1196
      %1198 = vrot.lane.b32.xlu0 %v1176, 112
      %v1199 = vpop.permute.xlu0 %1198
      %1200 = vrot.lane.b32.xlu0 %v1169, 112
      %v1201 = vpop.permute.xlu0 %1200
      %1202 = vrot.lane.b32.xlu0 %v1177, 112
      %v1203 = vpop.permute.xlu0 %1202
      %1204 = vrot.lane.b32.xlu0 %v1170, 112
      %v1205 = vpop.permute.xlu0 %1204
      %1206 = vrot.lane.b32.xlu0 %v1178, 112
      %v1207 = vpop.permute.xlu0 %1206
      %1208 = vrot.lane.b32.xlu0 %v1171, 112
      %v1209 = vpop.permute.xlu0 %1208
      %1210 = vrot.lane.b32.xlu0 %v1179, 112
      %v1211 = vpop.permute.xlu0 %1210
      %v1212 = vsel %vm790, %v1205, %v1209
      %v1213 = vsel %vm790, %v1207, %v1211
      %v1214 = vsel %vm790, %v1201, %v1205
      %v1215 = vsel %vm790, %v1203, %v1207
      %v1216 = vsel %vm790, %v1197, %v1201
      %v1217 = vsel %vm790, %v1199, %v1203
      %v1218 = vsel %vm790, %v1193, %v1197
      %v1219 = vsel %vm790, %v1195, %v1199
      %v1220 = vsel %vm790, %v1189, %v1193
      %v1221 = vsel %vm790, %v1191, %v1195
      %v1222 = vsel %vm790, %v1185, %v1189
      %v1223 = vsel %vm790, %v1187, %v1191
      %v1224 = vsel %vm790, %v1181, %v1185
      %v1225 = vsel %vm790, %v1183, %v1187
      %v1226 = vsel %vm790, %v1209, %v1181
      %v1227 = vsel %vm790, %v1211, %v1183
      %v1228 = vmax.f32 %v1164, %v1224
      %v1229 = vmax.f32 %v1165, %v1222
      %v1230 = vmax.f32 %v1166, %v1220
      %v1231 = vmax.f32 %v1167, %v1218
      %v1232 = vmax.f32 %v1168, %v1216
      %v1233 = vmax.f32 %v1169, %v1214
      %v1234 = vmax.f32 %v1170, %v1212
      %v1235 = vmax.f32 %v1171, %v1226
      %v1236 = vmax.f32 %v1172, %v1225
      %v1237 = vmax.f32 %v1173, %v1223
      %v1238 = vmax.f32 %v1174, %v1221
      %v1239 = vmax.f32 %v1175, %v1219
      %v1240 = vmax.f32 %v1176, %v1217
      %v1241 = vmax.f32 %v1177, %v1215
      %v1242 = vmax.f32 %v1178, %v1213
      %v1243 = vmax.f32 %v1179, %v1227
      %vm1244 = vcmp.ge.s32.totalorder %v399, 2
      %vm1245 = vcmp.ge.s32.totalorder %v400, 2
      %vm1246 = vcmp.ge.s32.totalorder %v401, 2
      %vm1247 = vcmp.ge.s32.totalorder %v402, 2
      %vm1248 = vcmp.ge.s32.totalorder %v403, 2
      %vm1249 = vcmp.ge.s32.totalorder %v404, 2
      %vm1250 = vcmp.ge.s32.totalorder %v405, 2
      %vm1251 = vcmp.ge.s32.totalorder %v406, 2
      %v1252 = vsel %vm1244, 1, 0
      %v1253 = vsel %vm1245, 1, 0
      %v1254 = vsel %vm1246, 1, 0
      %v1255 = vsel %vm1247, 1, 0
      %v1256 = vsel %vm1248, 1, 0
      %v1257 = vsel %vm1249, 1, 0
      %v1258 = vsel %vm1250, 1, 0
      %v1259 = vsel %vm1251, 1, 0
      %v1260 = vcvt.s32.f32 %v1252
      %v1261 = vcvt.s32.f32 %v1253
      %v1262 = vcvt.s32.f32 %v1254
      %v1263 = vcvt.s32.f32 %v1255
      %v1264 = vcvt.s32.f32 %v1256
      %v1265 = vcvt.s32.f32 %v1257
      %v1266 = vcvt.s32.f32 %v1258
      %v1267 = vcvt.s32.f32 %v1259
      %vm1268 = vcmp.lt.s32.totalorder %v399, 14
      %vm1269 = vcmp.lt.s32.totalorder %v400, 14
      %vm1270 = vcmp.lt.s32.totalorder %v401, 14
      %vm1271 = vcmp.lt.s32.totalorder %v402, 14
      %vm1272 = vcmp.lt.s32.totalorder %v403, 14
      %vm1273 = vcmp.lt.s32.totalorder %v404, 14
      %vm1274 = vcmp.lt.s32.totalorder %v405, 14
      %vm1275 = vcmp.lt.s32.totalorder %v406, 14
      %v1276 = vsel %vm1268, 1, 0
      %v1277 = vsel %vm1269, 1, 0
      %v1278 = vsel %vm1270, 1, 0
      %v1279 = vsel %vm1271, 1, 0
      %v1280 = vsel %vm1272, 1, 0
      %v1281 = vsel %vm1273, 1, 0
      %v1282 = vsel %vm1274, 1, 0
      %v1283 = vsel %vm1275, 1, 0
      %v1284 = vcvt.s32.f32 %v1276
      %v1285 = vcvt.s32.f32 %v1277
      %v1286 = vcvt.s32.f32 %v1278
      %v1287 = vcvt.s32.f32 %v1279
      %v1288 = vcvt.s32.f32 %v1280
      %v1289 = vcvt.s32.f32 %v1281
      %v1290 = vcvt.s32.f32 %v1282
      %v1291 = vcvt.s32.f32 %v1283
      %vm1292 = vcmp.ge.s32.totalorder %v415, 2
      %vm1293 = vcmp.ge.s32.totalorder %v416, 2
      %vm1294 = vcmp.ge.s32.totalorder %v417, 2
      %vm1295 = vcmp.ge.s32.totalorder %v418, 2
      %vm1296 = vcmp.ge.s32.totalorder %v419, 2
      %vm1297 = vcmp.ge.s32.totalorder %v420, 2
      %vm1298 = vcmp.ge.s32.totalorder %v421, 2
      %vm1299 = vcmp.ge.s32.totalorder %v422, 2
      %v1300 = vsel %vm1292, 1, 0
      %v1301 = vsel %vm1293, 1, 0
      %v1302 = vsel %vm1294, 1, 0
      %v1303 = vsel %vm1295, 1, 0
      %v1304 = vsel %vm1296, 1, 0
      %v1305 = vsel %vm1297, 1, 0
      %v1306 = vsel %vm1298, 1, 0
      %v1307 = vsel %vm1299, 1, 0
      %v1308 = vcvt.s32.f32 %v1300
      %v1309 = vcvt.s32.f32 %v1301
      %v1310 = vcvt.s32.f32 %v1302
      %v1311 = vcvt.s32.f32 %v1303
      %v1312 = vcvt.s32.f32 %v1304
      %v1313 = vcvt.s32.f32 %v1305
      %v1314 = vcvt.s32.f32 %v1306
      %v1315 = vcvt.s32.f32 %v1307
      %vm1316 = vcmp.lt.s32.totalorder %v415, 14
      %vm1317 = vcmp.lt.s32.totalorder %v416, 14
      %vm1318 = vcmp.lt.s32.totalorder %v417, 14
      %vm1319 = vcmp.lt.s32.totalorder %v418, 14
      %vm1320 = vcmp.lt.s32.totalorder %v419, 14
      %vm1321 = vcmp.lt.s32.totalorder %v420, 14
      %vm1322 = vcmp.lt.s32.totalorder %v421, 14
      %vm1323 = vcmp.lt.s32.totalorder %v422, 14
      %v1324 = vsel %vm1316, 1, 0
      %v1325 = vsel %vm1317, 1, 0
      %v1326 = vsel %vm1318, 1, 0
      %v1327 = vsel %vm1319, 1, 0
      %v1328 = vsel %vm1320, 1, 0
      %v1329 = vsel %vm1321, 1, 0
      %v1330 = vsel %vm1322, 1, 0
      %v1331 = vsel %vm1323, 1, 0
      %v1332 = vcvt.s32.f32 %v1324
      %v1333 = vcvt.s32.f32 %v1325
      %v1334 = vcvt.s32.f32 %v1326
      %v1335 = vcvt.s32.f32 %v1327
      %v1336 = vcvt.s32.f32 %v1328
      %v1337 = vcvt.s32.f32 %v1329
      %v1338 = vcvt.s32.f32 %v1330
      %v1339 = vcvt.s32.f32 %v1331
      %v1340 = vmul.f32 %v1308, %v1260
      %v1341 = vmul.f32 %v1309, %v1261
      %v1342 = vmul.f32 %v1310, %v1262
      %v1343 = vmul.f32 %v1311, %v1263
      %v1344 = vmul.f32 %v1312, %v1264
      %v1345 = vmul.f32 %v1313, %v1265
      %v1346 = vmul.f32 %v1314, %v1266
      %v1347 = vmul.f32 %v1315, %v1267
      %v1348 = vmul.f32 %v1308, %v1284
      %v1349 = vmul.f32 %v1309, %v1285
      %v1350 = vmul.f32 %v1310, %v1286
      %v1351 = vmul.f32 %v1311, %v1287
      %v1352 = vmul.f32 %v1312, %v1288
      %v1353 = vmul.f32 %v1313, %v1289
      %v1354 = vmul.f32 %v1314, %v1290
      %v1355 = vmul.f32 %v1315, %v1291
      %v1356 = vmul.f32 %v1332, %v1260
      %v1357 = vmul.f32 %v1333, %v1261
      %v1358 = vmul.f32 %v1334, %v1262
      %v1359 = vmul.f32 %v1335, %v1263
      %v1360 = vmul.f32 %v1336, %v1264
      %v1361 = vmul.f32 %v1337, %v1265
      %v1362 = vmul.f32 %v1338, %v1266
      %v1363 = vmul.f32 %v1339, %v1267
      %v1364 = vmul.f32 %v1332, %v1284
      %v1365 = vmul.f32 %v1333, %v1285
      %v1366 = vmul.f32 %v1334, %v1286
      %v1367 = vmul.f32 %v1335, %v1287
      %v1368 = vmul.f32 %v1336, %v1288
      %v1369 = vmul.f32 %v1337, %v1289
      %v1370 = vmul.f32 %v1338, %v1290
      %v1371 = vmul.f32 %v1339, %v1291
      %1372 = vrot.lane.b32.xlu0 %v1228, 34
      %v1373 = vpop.permute.xlu0 %1372
      %1374 = vrot.lane.b32.xlu0 %v1236, 34
      %v1375 = vpop.permute.xlu0 %1374
      %1376 = vrot.lane.b32.xlu0 %v1229, 34
      %v1377 = vpop.permute.xlu0 %1376
      %1378 = vrot.lane.b32.xlu0 %v1237, 34
      %v1379 = vpop.permute.xlu0 %1378
      %1380 = vrot.lane.b32.xlu0 %v1230, 34
      %v1381 = vpop.permute.xlu0 %1380
      %1382 = vrot.lane.b32.xlu0 %v1238, 34
      %v1383 = vpop.permute.xlu0 %1382
      %1384 = vrot.lane.b32.xlu0 %v1231, 34
      %v1385 = vpop.permute.xlu0 %1384
      %1386 = vrot.lane.b32.xlu0 %v1239, 34
      %v1387 = vpop.permute.xlu0 %1386
      %1388 = vrot.lane.b32.xlu0 %v1232, 34
      %v1389 = vpop.permute.xlu0 %1388
      %1390 = vrot.lane.b32.xlu0 %v1240, 34
      %v1391 = vpop.permute.xlu0 %1390
      %1392 = vrot.lane.b32.xlu0 %v1233, 34
      %v1393 = vpop.permute.xlu0 %1392
      %1394 = vrot.lane.b32.xlu0 %v1241, 34
      %v1395 = vpop.permute.xlu0 %1394
      %1396 = vrot.lane.b32.xlu0 %v1234, 34
      %v1397 = vpop.permute.xlu0 %1396
      %1398 = vrot.lane.b32.xlu0 %v1242, 34
      %v1399 = vpop.permute.xlu0 %1398
      %1400 = vrot.lane.b32.xlu0 %v1235, 34
      %v1401 = vpop.permute.xlu0 %1400
      %1402 = vrot.lane.b32.xlu0 %v1243, 34
      %v1403 = vpop.permute.xlu0 %1402
      %vm1404 = vcmp.lt.s32.totalorder %v391, 34
      %v1405 = vsel %vm1404, %v1397, %v1401
      %v1406 = vsel %vm1404, %v1399, %v1403
      %v1407 = vsel %vm1404, %v1393, %v1397
      %v1408 = vsel %vm1404, %v1395, %v1399
      %v1409 = vsel %vm1404, %v1389, %v1393
      %v1410 = vsel %vm1404, %v1391, %v1395
      %v1411 = vsel %vm1404, %v1385, %v1389
      %v1412 = vsel %vm1404, %v1387, %v1391
      %v1413 = vsel %vm1404, %v1381, %v1385
      %v1414 = vsel %vm1404, %v1383, %v1387
      %v1415 = vsel %vm1404, %v1377, %v1381
      %v1416 = vsel %vm1404, %v1379, %v1383
      %v1417 = vsel %vm1404, %v1373, %v1377
      %v1418 = vsel %vm1404, %v1375, %v1379
      %v1419 = vsel %vm1404, %v1401, %v1373
      %v1420 = vsel %vm1404, %v1403, %v1375
      %v1421 = vmul.f32 %v1419, %v1340
      %v1422 = vmul.f32 %v1417, %v1341
      %v1423 = vmul.f32 %v1415, %v1342
      %v1424 = vmul.f32 %v1413, %v1343
      %v1425 = vmul.f32 %v1411, %v1344
      %v1426 = vmul.f32 %v1409, %v1345
      %v1427 = vmul.f32 %v1407, %v1346
      %v1428 = vmul.f32 %v1405, %v1347
      %v1429 = vmul.f32 %v1420, %v1340
      %v1430 = vmul.f32 %v1418, %v1341
      %v1431 = vmul.f32 %v1416, %v1342
      %v1432 = vmul.f32 %v1414, %v1343
      %v1433 = vmul.f32 %v1412, %v1344
      %v1434 = vmul.f32 %v1410, %v1345
      %v1435 = vmul.f32 %v1408, %v1346
      %v1436 = vmul.f32 %v1406, %v1347
      %v1437 = vpack.c.bf16 %v1429, %v1421
      %v1438 = vpack.c.bf16 %v1430, %v1422
      %v1439 = vpack.c.bf16 %v1431, %v1423
      %v1440 = vpack.c.bf16 %v1432, %v1424
      %v1441 = vpack.c.bf16 %v1433, %v1425
      %v1442 = vpack.c.bf16 %v1434, %v1426
      %v1443 = vpack.c.bf16 %v1435, %v1427
      %v1444 = vpack.c.bf16 %v1436, %v1428
      %1445 = vrot.lane.b32.xlu0 %v1228, 32
      %v1446 = vpop.permute.xlu0 %1445
      %1447 = vrot.lane.b32.xlu0 %v1236, 32
      %v1448 = vpop.permute.xlu0 %1447
      %1449 = vrot.lane.b32.xlu0 %v1229, 32
      %v1450 = vpop.permute.xlu0 %1449
      %1451 = vrot.lane.b32.xlu0 %v1237, 32
      %v1452 = vpop.permute.xlu0 %1451
      %1453 = vrot.lane.b32.xlu0 %v1230, 32
      %v1454 = vpop.permute.xlu0 %1453
      %1455 = vrot.lane.b32.xlu0 %v1238, 32
      %v1456 = vpop.permute.xlu0 %1455
      %1457 = vrot.lane.b32.xlu0 %v1231, 32
      %v1458 = vpop.permute.xlu0 %1457
      %1459 = vrot.lane.b32.xlu0 %v1239, 32
      %v1460 = vpop.permute.xlu0 %1459
      %1461 = vrot.lane.b32.xlu0 %v1232, 32
      %v1462 = vpop.permute.xlu0 %1461
      %1463 = vrot.lane.b32.xlu0 %v1240, 32
      %v1464 = vpop.permute.xlu0 %1463
      %1465 = vrot.lane.b32.xlu0 %v1233, 32
      %v1466 = vpop.permute.xlu0 %1465
      %1467 = vrot.lane.b32.xlu0 %v1241, 32
      %v1468 = vpop.permute.xlu0 %1467
      %1469 = vrot.lane.b32.xlu0 %v1234, 32
      %v1470 = vpop.permute.xlu0 %1469
      %1471 = vrot.lane.b32.xlu0 %v1242, 32
      %v1472 = vpop.permute.xlu0 %1471
      %1473 = vrot.lane.b32.xlu0 %v1235, 32
      %v1474 = vpop.permute.xlu0 %1473
      %1475 = vrot.lane.b32.xlu0 %v1243, 32
      %v1476 = vpop.permute.xlu0 %1475
      %vm1477 = vcmp.lt.s32.totalorder %v391, 32
      %v1478 = vsel %vm1477, %v1470, %v1474
      %v1479 = vsel %vm1477, %v1472, %v1476
      %v1480 = vsel %vm1477, %v1466, %v1470
      %v1481 = vsel %vm1477, %v1468, %v1472
      %v1482 = vsel %vm1477, %v1462, %v1466
      %v1483 = vsel %vm1477, %v1464, %v1468
      %v1484 = vsel %vm1477, %v1458, %v1462
      %v1485 = vsel %vm1477, %v1460, %v1464
      %v1486 = vsel %vm1477, %v1454, %v1458
      %v1487 = vsel %vm1477, %v1456, %v1460
      %v1488 = vsel %vm1477, %v1450, %v1454
      %v1489 = vsel %vm1477, %v1452, %v1456
      %v1490 = vsel %vm1477, %v1446, %v1450
      %v1491 = vsel %vm1477, %v1448, %v1452
      %v1492 = vsel %vm1477, %v1474, %v1446
      %v1493 = vsel %vm1477, %v1476, %v1448
      %v1494 = vmul.f32 %v1492, %v1308
      %v1495 = vmul.f32 %v1490, %v1309
      %v1496 = vmul.f32 %v1488, %v1310
      %v1497 = vmul.f32 %v1486, %v1311
      %v1498 = vmul.f32 %v1484, %v1312
      %v1499 = vmul.f32 %v1482, %v1313
      %v1500 = vmul.f32 %v1480, %v1314
      %v1501 = vmul.f32 %v1478, %v1315
      %v1502 = vmul.f32 %v1493, %v1308
      %v1503 = vmul.f32 %v1491, %v1309
      %v1504 = vmul.f32 %v1489, %v1310
      %v1505 = vmul.f32 %v1487, %v1311
      %v1506 = vmul.f32 %v1485, %v1312
      %v1507 = vmul.f32 %v1483, %v1313
      %v1508 = vmul.f32 %v1481, %v1314
      %v1509 = vmul.f32 %v1479, %v1315
      %v1510 = vpack.c.bf16 %v1502, %v1494
      %v1511 = vpack.c.bf16 %v1503, %v1495
      %v1512 = vpack.c.bf16 %v1504, %v1496
      %v1513 = vpack.c.bf16 %v1505, %v1497
      %v1514 = vpack.c.bf16 %v1506, %v1498
      %v1515 = vpack.c.bf16 %v1507, %v1499
      %v1516 = vpack.c.bf16 %v1508, %v1500
      %v1517 = vpack.c.bf16 %v1509, %v1501
      %1518 = vrot.lane.b32.xlu0 %v1228, 30
      %v1519 = vpop.permute.xlu0 %1518
      %1520 = vrot.lane.b32.xlu0 %v1236, 30
      %v1521 = vpop.permute.xlu0 %1520
      %1522 = vrot.lane.b32.xlu0 %v1229, 30
      %v1523 = vpop.permute.xlu0 %1522
      %1524 = vrot.lane.b32.xlu0 %v1237, 30
      %v1525 = vpop.permute.xlu0 %1524
      %1526 = vrot.lane.b32.xlu0 %v1230, 30
      %v1527 = vpop.permute.xlu0 %1526
      %1528 = vrot.lane.b32.xlu0 %v1238, 30
      %v1529 = vpop.permute.xlu0 %1528
      %1530 = vrot.lane.b32.xlu0 %v1231, 30
      %v1531 = vpop.permute.xlu0 %1530
      %1532 = vrot.lane.b32.xlu0 %v1239, 30
      %v1533 = vpop.permute.xlu0 %1532
      %1534 = vrot.lane.b32.xlu0 %v1232, 30
      %v1535 = vpop.permute.xlu0 %1534
      %1536 = vrot.lane.b32.xlu0 %v1240, 30
      %v1537 = vpop.permute.xlu0 %1536
      %1538 = vrot.lane.b32.xlu0 %v1233, 30
      %v1539 = vpop.permute.xlu0 %1538
      %1540 = vrot.lane.b32.xlu0 %v1241, 30
      %v1541 = vpop.permute.xlu0 %1540
      %1542 = vrot.lane.b32.xlu0 %v1234, 30
      %v1543 = vpop.permute.xlu0 %1542
      %1544 = vrot.lane.b32.xlu0 %v1242, 30
      %v1545 = vpop.permute.xlu0 %1544
      %1546 = vrot.lane.b32.xlu0 %v1235, 30
      %v1547 = vpop.permute.xlu0 %1546
      %1548 = vrot.lane.b32.xlu0 %v1243, 30
      %v1549 = vpop.permute.xlu0 %1548
      %vm1550 = vcmp.lt.s32.totalorder %v391, 30
      %v1551 = vsel %vm1550, %v1543, %v1547
      %v1552 = vsel %vm1550, %v1545, %v1549
      %v1553 = vsel %vm1550, %v1539, %v1543
      %v1554 = vsel %vm1550, %v1541, %v1545
      %v1555 = vsel %vm1550, %v1535, %v1539
      %v1556 = vsel %vm1550, %v1537, %v1541
      %v1557 = vsel %vm1550, %v1531, %v1535
      %v1558 = vsel %vm1550, %v1533, %v1537
      %v1559 = vsel %vm1550, %v1527, %v1531
      %v1560 = vsel %vm1550, %v1529, %v1533
      %v1561 = vsel %vm1550, %v1523, %v1527
      %v1562 = vsel %vm1550, %v1525, %v1529
      %v1563 = vsel %vm1550, %v1519, %v1523
      %v1564 = vsel %vm1550, %v1521, %v1525
      %v1565 = vsel %vm1550, %v1547, %v1519
      %v1566 = vsel %vm1550, %v1549, %v1521
      %v1567 = vmul.f32 %v1565, %v1348
      %v1568 = vmul.f32 %v1563, %v1349
      %v1569 = vmul.f32 %v1561, %v1350
      %v1570 = vmul.f32 %v1559, %v1351
      %v1571 = vmul.f32 %v1557, %v1352
      %v1572 = vmul.f32 %v1555, %v1353
      %v1573 = vmul.f32 %v1553, %v1354
      %v1574 = vmul.f32 %v1551, %v1355
      %v1575 = vmul.f32 %v1566, %v1348
      %v1576 = vmul.f32 %v1564, %v1349
      %v1577 = vmul.f32 %v1562, %v1350
      %v1578 = vmul.f32 %v1560, %v1351
      %v1579 = vmul.f32 %v1558, %v1352
      %v1580 = vmul.f32 %v1556, %v1353
      %v1581 = vmul.f32 %v1554, %v1354
      %v1582 = vmul.f32 %v1552, %v1355
      %v1583 = vpack.c.bf16 %v1575, %v1567
      %v1584 = vpack.c.bf16 %v1576, %v1568
      %v1585 = vpack.c.bf16 %v1577, %v1569
      %v1586 = vpack.c.bf16 %v1578, %v1570
      %v1587 = vpack.c.bf16 %v1579, %v1571
      %v1588 = vpack.c.bf16 %v1580, %v1572
      %v1589 = vpack.c.bf16 %v1581, %v1573
      %v1590 = vpack.c.bf16 %v1582, %v1574
      %1591 = vrot.lane.b32.xlu0 %v1228, 2
      %v1592 = vpop.permute.xlu0 %1591
      %1593 = vrot.lane.b32.xlu0 %v1236, 2
      %v1594 = vpop.permute.xlu0 %1593
      %1595 = vrot.lane.b32.xlu0 %v1229, 2
      %v1596 = vpop.permute.xlu0 %1595
      %1597 = vrot.lane.b32.xlu0 %v1237, 2
      %v1598 = vpop.permute.xlu0 %1597
      %1599 = vrot.lane.b32.xlu0 %v1230, 2
      %v1600 = vpop.permute.xlu0 %1599
      %1601 = vrot.lane.b32.xlu0 %v1238, 2
      %v1602 = vpop.permute.xlu0 %1601
      %1603 = vrot.lane.b32.xlu0 %v1231, 2
      %v1604 = vpop.permute.xlu0 %1603
      %1605 = vrot.lane.b32.xlu0 %v1239, 2
      %v1606 = vpop.permute.xlu0 %1605
      %1607 = vrot.lane.b32.xlu0 %v1232, 2
      %v1608 = vpop.permute.xlu0 %1607
      %1609 = vrot.lane.b32.xlu0 %v1240, 2
      %v1610 = vpop.permute.xlu0 %1609
      %1611 = vrot.lane.b32.xlu0 %v1233, 2
      %v1612 = vpop.permute.xlu0 %1611
      %1613 = vrot.lane.b32.xlu0 %v1241, 2
      %v1614 = vpop.permute.xlu0 %1613
      %1615 = vrot.lane.b32.xlu0 %v1234, 2
      %v1616 = vpop.permute.xlu0 %1615
      %1617 = vrot.lane.b32.xlu0 %v1242, 2
      %v1618 = vpop.permute.xlu0 %1617
      %1619 = vrot.lane.b32.xlu0 %v1235, 2
      %v1620 = vpop.permute.xlu0 %1619
      %1621 = vrot.lane.b32.xlu0 %v1243, 2
      %v1622 = vpop.permute.xlu0 %1621
      %vm1623 = vcmp.lt.s32.totalorder %v391, 2
      %v1624 = vsel %vm1623, %v1616, %v1620
      %v1625 = vsel %vm1623, %v1618, %v1622
      %v1626 = vsel %vm1623, %v1612, %v1616
      %v1627 = vsel %vm1623, %v1614, %v1618
      %v1628 = vsel %vm1623, %v1608, %v1612
      %v1629 = vsel %vm1623, %v1610, %v1614
      %v1630 = vsel %vm1623, %v1604, %v1608
      %v1631 = vsel %vm1623, %v1606, %v1610
      %v1632 = vsel %vm1623, %v1600, %v1604
      %v1633 = vsel %vm1623, %v1602, %v1606
      %v1634 = vsel %vm1623, %v1596, %v1600
      %v1635 = vsel %vm1623, %v1598, %v1602
      %v1636 = vsel %vm1623, %v1592, %v1596
      %v1637 = vsel %vm1623, %v1594, %v1598
      %v1638 = vsel %vm1623, %v1620, %v1592
      %v1639 = vsel %vm1623, %v1622, %v1594
      %v1640 = vmul.f32 %v1638, %v1260
      %v1641 = vmul.f32 %v1636, %v1261
      %v1642 = vmul.f32 %v1634, %v1262
      %v1643 = vmul.f32 %v1632, %v1263
      %v1644 = vmul.f32 %v1630, %v1264
      %v1645 = vmul.f32 %v1628, %v1265
      %v1646 = vmul.f32 %v1626, %v1266
      %v1647 = vmul.f32 %v1624, %v1267
      %v1648 = vmul.f32 %v1639, %v1260
      %v1649 = vmul.f32 %v1637, %v1261
      %v1650 = vmul.f32 %v1635, %v1262
      %v1651 = vmul.f32 %v1633, %v1263
      %v1652 = vmul.f32 %v1631, %v1264
      %v1653 = vmul.f32 %v1629, %v1265
      %v1654 = vmul.f32 %v1627, %v1266
      %v1655 = vmul.f32 %v1625, %v1267
      %v1656 = vpack.c.bf16 %v1648, %v1640
      %v1657 = vpack.c.bf16 %v1649, %v1641
      %v1658 = vpack.c.bf16 %v1650, %v1642
      %v1659 = vpack.c.bf16 %v1651, %v1643
      %v1660 = vpack.c.bf16 %v1652, %v1644
      %v1661 = vpack.c.bf16 %v1653, %v1645
      %v1662 = vpack.c.bf16 %v1654, %v1646
      %v1663 = vpack.c.bf16 %v1655, %v1647
      %v1664 = vpack.c.bf16 %v1236, %v1228
      %v1665 = vpack.c.bf16 %v1237, %v1229
      %v1666 = vpack.c.bf16 %v1238, %v1230
      %v1667 = vpack.c.bf16 %v1239, %v1231
      %v1668 = vpack.c.bf16 %v1240, %v1232
      %v1669 = vpack.c.bf16 %v1241, %v1233
      %v1670 = vpack.c.bf16 %v1242, %v1234
      %v1671 = vpack.c.bf16 %v1243, %v1235
      %1672 = vrot.lane.b32.xlu0 %v1228, 126
      %v1673 = vpop.permute.xlu0 %1672
      %1674 = vrot.lane.b32.xlu0 %v1236, 126
      %v1675 = vpop.permute.xlu0 %1674
      %1676 = vrot.lane.b32.xlu0 %v1229, 126
      %v1677 = vpop.permute.xlu0 %1676
      %1678 = vrot.lane.b32.xlu0 %v1237, 126
      %v1679 = vpop.permute.xlu0 %1678
      %1680 = vrot.lane.b32.xlu0 %v1230, 126
      %v1681 = vpop.permute.xlu0 %1680
      %1682 = vrot.lane.b32.xlu0 %v1238, 126
      %v1683 = vpop.permute.xlu0 %1682
      %1684 = vrot.lane.b32.xlu0 %v1231, 126
      %v1685 = vpop.permute.xlu0 %1684
      %1686 = vrot.lane.b32.xlu0 %v1239, 126
      %v1687 = vpop.permute.xlu0 %1686
      %1688 = vrot.lane.b32.xlu0 %v1232, 126
      %v1689 = vpop.permute.xlu0 %1688
      %1690 = vrot.lane.b32.xlu0 %v1240, 126
      %v1691 = vpop.permute.xlu0 %1690
      %1692 = vrot.lane.b32.xlu0 %v1233, 126
      %v1693 = vpop.permute.xlu0 %1692
      %1694 = vrot.lane.b32.xlu0 %v1241, 126
      %v1695 = vpop.permute.xlu0 %1694
      %1696 = vrot.lane.b32.xlu0 %v1234, 126
      %v1697 = vpop.permute.xlu0 %1696
      %1698 = vrot.lane.b32.xlu0 %v1242, 126
      %v1699 = vpop.permute.xlu0 %1698
      %1700 = vrot.lane.b32.xlu0 %v1235, 126
      %v1701 = vpop.permute.xlu0 %1700
      %1702 = vrot.lane.b32.xlu0 %v1243, 126
      %v1703 = vpop.permute.xlu0 %1702
      %vm1704 = vcmp.lt.s32.totalorder %v391, 126
      %v1705 = vsel %vm1704, %v1697, %v1701
      %v1706 = vsel %vm1704, %v1699, %v1703
      %v1707 = vsel %vm1704, %v1693, %v1697
      %v1708 = vsel %vm1704, %v1695, %v1699
      %v1709 = vsel %vm1704, %v1689, %v1693
      %v1710 = vsel %vm1704, %v1691, %v1695
      %v1711 = vsel %vm1704, %v1685, %v1689
      %v1712 = vsel %vm1704, %v1687, %v1691
      %v1713 = vsel %vm1704, %v1681, %v1685
      %v1714 = vsel %vm1704, %v1683, %v1687
      %v1715 = vsel %vm1704, %v1677, %v1681
      %v1716 = vsel %vm1704, %v1679, %v1683
      %v1717 = vsel %vm1704, %v1673, %v1677
      %v1718 = vsel %vm1704, %v1675, %v1679
      %v1719 = vsel %vm1704, %v1701, %v1673
      %v1720 = vsel %vm1704, %v1703, %v1675
      %v1721 = vmul.f32 %v1717, %v1284
      %v1722 = vmul.f32 %v1715, %v1285
      %v1723 = vmul.f32 %v1713, %v1286
      %v1724 = vmul.f32 %v1711, %v1287
      %v1725 = vmul.f32 %v1709, %v1288
      %v1726 = vmul.f32 %v1707, %v1289
      %v1727 = vmul.f32 %v1705, %v1290
      %v1728 = vmul.f32 %v1719, %v1291
      %v1729 = vmul.f32 %v1718, %v1284
      %v1730 = vmul.f32 %v1716, %v1285
      %v1731 = vmul.f32 %v1714, %v1286
      %v1732 = vmul.f32 %v1712, %v1287
      %v1733 = vmul.f32 %v1710, %v1288
      %v1734 = vmul.f32 %v1708, %v1289
      %v1735 = vmul.f32 %v1706, %v1290
      %v1736 = vmul.f32 %v1720, %v1291
      %v1737 = vpack.c.bf16 %v1729, %v1721
      %v1738 = vpack.c.bf16 %v1730, %v1722
      %v1739 = vpack.c.bf16 %v1731, %v1723
      %v1740 = vpack.c.bf16 %v1732, %v1724
      %v1741 = vpack.c.bf16 %v1733, %v1725
      %v1742 = vpack.c.bf16 %v1734, %v1726
      %v1743 = vpack.c.bf16 %v1735, %v1727
      %v1744 = vpack.c.bf16 %v1736, %v1728
      %1745 = vrot.lane.b32.xlu0 %v1228, 98
      %v1746 = vpop.permute.xlu0 %1745
      %1747 = vrot.lane.b32.xlu0 %v1236, 98
      %v1748 = vpop.permute.xlu0 %1747
      %1749 = vrot.lane.b32.xlu0 %v1229, 98
      %v1750 = vpop.permute.xlu0 %1749
      %1751 = vrot.lane.b32.xlu0 %v1237, 98
      %v1752 = vpop.permute.xlu0 %1751
      %1753 = vrot.lane.b32.xlu0 %v1230, 98
      %v1754 = vpop.permute.xlu0 %1753
      %1755 = vrot.lane.b32.xlu0 %v1238, 98
      %v1756 = vpop.permute.xlu0 %1755
      %1757 = vrot.lane.b32.xlu0 %v1231, 98
      %v1758 = vpop.permute.xlu0 %1757
      %1759 = vrot.lane.b32.xlu0 %v1239, 98
      %v1760 = vpop.permute.xlu0 %1759
      %1761 = vrot.lane.b32.xlu0 %v1232, 98
      %v1762 = vpop.permute.xlu0 %1761
      %1763 = vrot.lane.b32.xlu0 %v1240, 98
      %v1764 = vpop.permute.xlu0 %1763
      %1765 = vrot.lane.b32.xlu0 %v1233, 98
      %v1766 = vpop.permute.xlu0 %1765
      %1767 = vrot.lane.b32.xlu0 %v1241, 98
      %v1768 = vpop.permute.xlu0 %1767
      %1769 = vrot.lane.b32.xlu0 %v1234, 98
      %v1770 = vpop.permute.xlu0 %1769
      %1771 = vrot.lane.b32.xlu0 %v1242, 98
      %v1772 = vpop.permute.xlu0 %1771
      %1773 = vrot.lane.b32.xlu0 %v1235, 98
      %v1774 = vpop.permute.xlu0 %1773
      %1775 = vrot.lane.b32.xlu0 %v1243, 98
      %v1776 = vpop.permute.xlu0 %1775
      %vm1777 = vcmp.lt.s32.totalorder %v391, 98
      %v1778 = vsel %vm1777, %v1770, %v1774
      %v1779 = vsel %vm1777, %v1772, %v1776
      %v1780 = vsel %vm1777, %v1766, %v1770
      %v1781 = vsel %vm1777, %v1768, %v1772
      %v1782 = vsel %vm1777, %v1762, %v1766
      %v1783 = vsel %vm1777, %v1764, %v1768
      %v1784 = vsel %vm1777, %v1758, %v1762
      %v1785 = vsel %vm1777, %v1760, %v1764
      %v1786 = vsel %vm1777, %v1754, %v1758
      %v1787 = vsel %vm1777, %v1756, %v1760
      %v1788 = vsel %vm1777, %v1750, %v1754
      %v1789 = vsel %vm1777, %v1752, %v1756
      %v1790 = vsel %vm1777, %v1746, %v1750
      %v1791 = vsel %vm1777, %v1748, %v1752
      %v1792 = vsel %vm1777, %v1774, %v1746
      %v1793 = vsel %vm1777, %v1776, %v1748
      %v1794 = vmul.f32 %v1790, %v1356
      %v1795 = vmul.f32 %v1788, %v1357
      %v1796 = vmul.f32 %v1786, %v1358
      %v1797 = vmul.f32 %v1784, %v1359
      %v1798 = vmul.f32 %v1782, %v1360
      %v1799 = vmul.f32 %v1780, %v1361
      %v1800 = vmul.f32 %v1778, %v1362
      %v1801 = vmul.f32 %v1792, %v1363
      %v1802 = vmul.f32 %v1791, %v1356
      %v1803 = vmul.f32 %v1789, %v1357
      %v1804 = vmul.f32 %v1787, %v1358
      %v1805 = vmul.f32 %v1785, %v1359
      %v1806 = vmul.f32 %v1783, %v1360
      %v1807 = vmul.f32 %v1781, %v1361
      %v1808 = vmul.f32 %v1779, %v1362
      %v1809 = vmul.f32 %v1793, %v1363
      %v1810 = vpack.c.bf16 %v1802, %v1794
      %v1811 = vpack.c.bf16 %v1803, %v1795
      %v1812 = vpack.c.bf16 %v1804, %v1796
      %v1813 = vpack.c.bf16 %v1805, %v1797
      %v1814 = vpack.c.bf16 %v1806, %v1798
      %v1815 = vpack.c.bf16 %v1807, %v1799
      %v1816 = vpack.c.bf16 %v1808, %v1800
      %v1817 = vpack.c.bf16 %v1809, %v1801
      %1818 = vrot.lane.b32.xlu0 %v1228, 96
      %v1819 = vpop.permute.xlu0 %1818
      %1820 = vrot.lane.b32.xlu0 %v1236, 96
      %v1821 = vpop.permute.xlu0 %1820
      %1822 = vrot.lane.b32.xlu0 %v1229, 96
      %v1823 = vpop.permute.xlu0 %1822
      %1824 = vrot.lane.b32.xlu0 %v1237, 96
      %v1825 = vpop.permute.xlu0 %1824
      %1826 = vrot.lane.b32.xlu0 %v1230, 96
      %v1827 = vpop.permute.xlu0 %1826
      %1828 = vrot.lane.b32.xlu0 %v1238, 96
      %v1829 = vpop.permute.xlu0 %1828
      %1830 = vrot.lane.b32.xlu0 %v1231, 96
      %v1831 = vpop.permute.xlu0 %1830
      %1832 = vrot.lane.b32.xlu0 %v1239, 96
      %v1833 = vpop.permute.xlu0 %1832
      %1834 = vrot.lane.b32.xlu0 %v1232, 96
      %v1835 = vpop.permute.xlu0 %1834
      %1836 = vrot.lane.b32.xlu0 %v1240, 96
      %v1837 = vpop.permute.xlu0 %1836
      %1838 = vrot.lane.b32.xlu0 %v1233, 96
      %v1839 = vpop.permute.xlu0 %1838
      %1840 = vrot.lane.b32.xlu0 %v1241, 96
      %v1841 = vpop.permute.xlu0 %1840
      %1842 = vrot.lane.b32.xlu0 %v1234, 96
      %v1843 = vpop.permute.xlu0 %1842
      %1844 = vrot.lane.b32.xlu0 %v1242, 96
      %v1845 = vpop.permute.xlu0 %1844
      %1846 = vrot.lane.b32.xlu0 %v1235, 96
      %v1847 = vpop.permute.xlu0 %1846
      %1848 = vrot.lane.b32.xlu0 %v1243, 96
      %v1849 = vpop.permute.xlu0 %1848
      %vm1850 = vcmp.lt.s32.totalorder %v391, 96
      %v1851 = vsel %vm1850, %v1843, %v1847
      %v1852 = vsel %vm1850, %v1845, %v1849
      %v1853 = vsel %vm1850, %v1839, %v1843
      %v1854 = vsel %vm1850, %v1841, %v1845
      %v1855 = vsel %vm1850, %v1835, %v1839
      %v1856 = vsel %vm1850, %v1837, %v1841
      %v1857 = vsel %vm1850, %v1831, %v1835
      %v1858 = vsel %vm1850, %v1833, %v1837
      %v1859 = vsel %vm1850, %v1827, %v1831
      %v1860 = vsel %vm1850, %v1829, %v1833
      %v1861 = vsel %vm1850, %v1823, %v1827
      %v1862 = vsel %vm1850, %v1825, %v1829
      %v1863 = vsel %vm1850, %v1819, %v1823
      %v1864 = vsel %vm1850, %v1821, %v1825
      %v1865 = vsel %vm1850, %v1847, %v1819
      %v1866 = vsel %vm1850, %v1849, %v1821
      %v1867 = vmul.f32 %v1863, %v1332
      %v1868 = vmul.f32 %v1861, %v1333
      %v1869 = vmul.f32 %v1859, %v1334
      %v1870 = vmul.f32 %v1857, %v1335
      %v1871 = vmul.f32 %v1855, %v1336
      %v1872 = vmul.f32 %v1853, %v1337
      %v1873 = vmul.f32 %v1851, %v1338
      %v1874 = vmul.f32 %v1865, %v1339
      %v1875 = vmul.f32 %v1864, %v1332
      %v1876 = vmul.f32 %v1862, %v1333
      %v1877 = vmul.f32 %v1860, %v1334
      %v1878 = vmul.f32 %v1858, %v1335
      %v1879 = vmul.f32 %v1856, %v1336
      %v1880 = vmul.f32 %v1854, %v1337
      %v1881 = vmul.f32 %v1852, %v1338
      %v1882 = vmul.f32 %v1866, %v1339
      %v1883 = vpack.c.bf16 %v1875, %v1867
      %v1884 = vpack.c.bf16 %v1876, %v1868
      %v1885 = vpack.c.bf16 %v1877, %v1869
      %v1886 = vpack.c.bf16 %v1878, %v1870
      %v1887 = vpack.c.bf16 %v1879, %v1871
      %v1888 = vpack.c.bf16 %v1880, %v1872
      %v1889 = vpack.c.bf16 %v1881, %v1873
      %v1890 = vpack.c.bf16 %v1882, %v1874
      %1891 = vrot.lane.b32.xlu0 %v1228, 94
      %v1892 = vpop.permute.xlu0 %1891
      %1893 = vrot.lane.b32.xlu0 %v1236, 94
      %v1894 = vpop.permute.xlu0 %1893
      %1895 = vrot.lane.b32.xlu0 %v1229, 94
      %v1896 = vpop.permute.xlu0 %1895
      %1897 = vrot.lane.b32.xlu0 %v1237, 94
      %v1898 = vpop.permute.xlu0 %1897
      %1899 = vrot.lane.b32.xlu0 %v1230, 94
      %v1900 = vpop.permute.xlu0 %1899
      %1901 = vrot.lane.b32.xlu0 %v1238, 94
      %v1902 = vpop.permute.xlu0 %1901
      %1903 = vrot.lane.b32.xlu0 %v1231, 94
      %v1904 = vpop.permute.xlu0 %1903
      %1905 = vrot.lane.b32.xlu0 %v1239, 94
      %v1906 = vpop.permute.xlu0 %1905
      %1907 = vrot.lane.b32.xlu0 %v1232, 94
      %v1908 = vpop.permute.xlu0 %1907
      %1909 = vrot.lane.b32.xlu0 %v1240, 94
      %v1910 = vpop.permute.xlu0 %1909
      %1911 = vrot.lane.b32.xlu0 %v1233, 94
      %v1912 = vpop.permute.xlu0 %1911
      %1913 = vrot.lane.b32.xlu0 %v1241, 94
      %v1914 = vpop.permute.xlu0 %1913
      %1915 = vrot.lane.b32.xlu0 %v1234, 94
      %v1916 = vpop.permute.xlu0 %1915
      %1917 = vrot.lane.b32.xlu0 %v1242, 94
      %v1918 = vpop.permute.xlu0 %1917
      %1919 = vrot.lane.b32.xlu0 %v1235, 94
      %v1920 = vpop.permute.xlu0 %1919
      %1921 = vrot.lane.b32.xlu0 %v1243, 94
      %v1922 = vpop.permute.xlu0 %1921
      %vm1923 = vcmp.lt.s32.totalorder %v391, 94
      %v1924 = vsel %vm1923, %v1916, %v1920
      %v1925 = vsel %vm1923, %v1918, %v1922
      %v1926 = vsel %vm1923, %v1912, %v1916
      %v1927 = vsel %vm1923, %v1914, %v1918
      %v1928 = vsel %vm1923, %v1908, %v1912
      %v1929 = vsel %vm1923, %v1910, %v1914
      %v1930 = vsel %vm1923, %v1904, %v1908
      %v1931 = vsel %vm1923, %v1906, %v1910
      %v1932 = vsel %vm1923, %v1900, %v1904
      %v1933 = vsel %vm1923, %v1902, %v1906
      %v1934 = vsel %vm1923, %v1896, %v1900
      %v1935 = vsel %vm1923, %v1898, %v1902
      %v1936 = vsel %vm1923, %v1892, %v1896
      %v1937 = vsel %vm1923, %v1894, %v1898
      %v1938 = vsel %vm1923, %v1920, %v1892
      %v1939 = vsel %vm1923, %v1922, %v1894
      %v1940 = vmul.f32 %v1936, %v1364
      %v1941 = vmul.f32 %v1934, %v1365
      %v1942 = vmul.f32 %v1932, %v1366
      %v1943 = vmul.f32 %v1930, %v1367
      %v1944 = vmul.f32 %v1928, %v1368
      %v1945 = vmul.f32 %v1926, %v1369
      %v1946 = vmul.f32 %v1924, %v1370
      %v1947 = vmul.f32 %v1938, %v1371
      %v1948 = vmul.f32 %v1937, %v1364
      %v1949 = vmul.f32 %v1935, %v1365
      %v1950 = vmul.f32 %v1933, %v1366
      %v1951 = vmul.f32 %v1931, %v1367
      %v1952 = vmul.f32 %v1929, %v1368
      %v1953 = vmul.f32 %v1927, %v1369
      %v1954 = vmul.f32 %v1925, %v1370
      %v1955 = vmul.f32 %v1939, %v1371
      %v1956 = vpack.c.bf16 %v1948, %v1940
      %v1957 = vpack.c.bf16 %v1949, %v1941
      %v1958 = vpack.c.bf16 %v1950, %v1942
      %v1959 = vpack.c.bf16 %v1951, %v1943
      %v1960 = vpack.c.bf16 %v1952, %v1944
      %v1961 = vpack.c.bf16 %v1953, %v1945
      %v1962 = vpack.c.bf16 %v1954, %v1946
      %v1963 = vpack.c.bf16 %v1955, %v1947
      %v1964 = vld [vmem:[%s3] sm:$0xff]
      %v1965 = vld [vmem:[%s3 + $0x8] sm:$0xff]
      %v1966 = vld [vmem:[%s3 + $0x10] sm:$0xff]
      %v1967 = vld [vmem:[%s3 + $0x18] sm:$0xff]
      %v1968 = vld [vmem:[%s4] sm:$0xff]
      %v1969 = vld [vmem:[%s4 + $0x8] sm:$0xff]
      %v1970 = vld [vmem:[%s4 + $0x10] sm:$0xff]
      %v1971 = vld [vmem:[%s4 + $0x18] sm:$0xff]
      %1973 = vset.pattern.permute.xlu0 0
      %1974 = vperm.xlu0 %1973, %v1968
      %v1975 = vpop.permute.xlu0 %1974
      %1978 = vset.pattern.permute.xlu0 0
      %1979 = vperm.xlu0 %1978, %v1969
      %v1980 = vpop.permute.xlu0 %1979
      %1983 = vset.pattern.permute.xlu0 0
      %1984 = vperm.xlu0 %1983, %v1970
      %v1985 = vpop.permute.xlu0 %1984
      %1988 = vset.pattern.permute.xlu0 0
      %1989 = vperm.xlu0 %1988, %v1971
      %v1990 = vpop.permute.xlu0 %1989
      %v1996 = vunpack.c.l.b16 %v1964
      %v1997 = vunpack.c.h.b16 %v1964
      %v1998 = vunpack.c.l.b16 %v1965
      %v1999 = vunpack.c.h.b16 %v1965
      %v2000 = vunpack.c.l.b16 %v1966
      %v2001 = vunpack.c.h.b16 %v1966
      %v2002 = vunpack.c.l.b16 %v1967
      %v2003 = vunpack.c.h.b16 %v1967
      %v2004 = vpack.c.b16 %v1998, %v1996
      %v2005 = vpack.c.b16 %v1999, %v1997
      %v2006 = vpack.c.b16 %v2002, %v2000
      %v2007 = vpack.c.b16 %v2003, %v2001
      %vm2010 = vcmask 130048
      %v2012 = vsel %vm2010, %v2005, 0
      %v2015 = vsel %vm2010, %v2007, 0
      %2017 = vmatprep.subr.bf16.mxu0 %v1884
      %2018 = vmatpush1.bf16.msra.mxu0 %v1883
      %2019 = vmatprep.subr.bf16.mxu0 %v1811
      %2020 = vmatpush1.bf16.msra.mxu0 %v1810
      %2021 = vmatprep.subr.bf16.mxu0 %v1738
      %2022 = vmatpush1.bf16.msra.mxu0 %v1737
      %2023 = vmatprep.subr.bf16.mxu0 %v1665
      %2024 = vmatpush1.bf16.msra.mxu0 %v1664
      %2025 = vmatprep.subr.bf16.mxu0 %v1657
      %2026 = vmatpush1.bf16.msra.mxu0 %v1656
      %2027 = vmatprep.subr.bf16.mxu0 %v1584
      %2028 = vmatpush1.bf16.msra.mxu0 %v1583
      %2029 = vmatprep.subr.bf16.mxu0 %v1511
      %2030 = vmatpush1.bf16.msra.mxu0 %v1510
      %2031 = vmatprep.subr.bf16.mxu0 %v1438
      %2032 = vmatpush1.bf16.msra.mxu0 %v1437
      %2033 = vmatprep.subr.bf16.mxu0 0
      %2034 = vmatpush2.bf16.msra.mxu0 0
      %2035 = vmatprep.subr.bf16.mxu0 0
      %2036 = vmatpush2.bf16.msra.mxu0 0
      %2037 = vmatprep.subr.bf16.mxu0 0
      %2038 = vmatpush2.bf16.msra.mxu0 0
      %2039 = vmatprep.subr.bf16.mxu0 0
      %2040 = vmatpush2.bf16.msra.mxu0 0
      %2041 = vmatprep.subr.bf16.mxu0 0
      %2042 = vmatpush2.bf16.msra.mxu0 0
      %2043 = vmatprep.subr.bf16.mxu0 0
      %2044 = vmatpush2.bf16.msra.mxu0 0
      %2045 = vmatprep.subr.bf16.mxu0 0
      %2046 = vmatpush2.bf16.msra.mxu0 0
      %2047 = vmatprep.subr.bf16.mxu0 %v1957
      %2048 = vmatpush2.bf16.msra.mxu0 %v1956
      %2049 = vmatprep.mubr.bf16.mxu0 %v2012
      %2050 = vmatmul.mubr.bf16.gmra.mxu0 %v2004
      %v2051 = vpop.f32.mrf.mxu0
      %v2052 = vadd.f32 %v1975, %v2051
      %v2053 = vpop.f32.mrf.mxu0
      %v2054 = vadd.f32 %v1975, %v2053
      %v2055 = vpop.f32.mrf.mxu0
      %v2056 = vadd.f32 %v1980, %v2055
      %v2057 = vpop.f32.mrf.mxu0
      %v2058 = vadd.f32 %v1980, %v2057
      %2059 = vmatprep.mubr.bf16.mxu0 %v2015
      %2060 = vmatmul.mubr.bf16.gmra.mxu0 %v2006
      %v2061 = vpop.f32.mrf.mxu0
      %v2062 = vadd.f32 %v1985, %v2061
      %v2063 = vpop.f32.mrf.mxu0
      %v2064 = vadd.f32 %v1985, %v2063
      %v2065 = vpop.f32.mrf.mxu0
      %v2066 = vadd.f32 %v1990, %v2065
      %v2067 = vpop.f32.mrf.mxu0
      %v2068 = vadd.f32 %v1990, %v2067
      %2069 = vdwg.mxu0
      %2070 = vmatprep.subr.bf16.mxu0 %v1886
      %2071 = vmatpush1.bf16.msra.mxu0 %v1885
      %2072 = vmatprep.subr.bf16.mxu0 %v1813
      %2073 = vmatpush1.bf16.msra.mxu0 %v1812
      %2074 = vmatprep.subr.bf16.mxu0 %v1740
      %2075 = vmatpush1.bf16.msra.mxu0 %v1739
      %2076 = vmatprep.subr.bf16.mxu0 %v1667
      %2077 = vmatpush1.bf16.msra.mxu0 %v1666
      %2078 = vmatprep.subr.bf16.mxu0 %v1659
      %2079 = vmatpush1.bf16.msra.mxu0 %v1658
      %2080 = vmatprep.subr.bf16.mxu0 %v1586
      %2081 = vmatpush1.bf16.msra.mxu0 %v1585
      %2082 = vmatprep.subr.bf16.mxu0 %v1513
      %2083 = vmatpush1.bf16.msra.mxu0 %v1512
      %2084 = vmatprep.subr.bf16.mxu0 %v1440
      %2085 = vmatpush1.bf16.msra.mxu0 %v1439
      %2086 = vmatprep.subr.bf16.mxu0 0
      %2087 = vmatpush2.bf16.msra.mxu0 0
      %2088 = vmatprep.subr.bf16.mxu0 0
      %2089 = vmatpush2.bf16.msra.mxu0 0
      %2090 = vmatprep.subr.bf16.mxu0 0
      %2091 = vmatpush2.bf16.msra.mxu0 0
      %2092 = vmatprep.subr.bf16.mxu0 0
      %2093 = vmatpush2.bf16.msra.mxu0 0
      %2094 = vmatprep.subr.bf16.mxu0 0
      %2095 = vmatpush2.bf16.msra.mxu0 0
      %2096 = vmatprep.subr.bf16.mxu0 0
      %2097 = vmatpush2.bf16.msra.mxu0 0
      %2098 = vmatprep.subr.bf16.mxu0 0
      %2099 = vmatpush2.bf16.msra.mxu0 0
      %2100 = vmatprep.subr.bf16.mxu0 %v1959
      %2101 = vmatpush2.bf16.msra.mxu0 %v1958
      %2102 = vmatprep.mubr.bf16.mxu0 %v2012
      %2103 = vmatmul.mubr.bf16.gmra.mxu0 %v2004
      %v2104 = vpop.f32.mrf.mxu0
      %v2105 = vadd.f32 %v1975, %v2104
      %v2106 = vpop.f32.mrf.mxu0
      %v2107 = vadd.f32 %v1975, %v2106
      %v2108 = vpop.f32.mrf.mxu0
      %v2109 = vadd.f32 %v1980, %v2108
      %v2110 = vpop.f32.mrf.mxu0
      %v2111 = vadd.f32 %v1980, %v2110
      %2112 = vmatprep.mubr.bf16.mxu0 %v2015
      %2113 = vmatmul.mubr.bf16.gmra.mxu0 %v2006
      %v2114 = vpop.f32.mrf.mxu0
      %v2115 = vadd.f32 %v1985, %v2114
      %v2116 = vpop.f32.mrf.mxu0
      %v2117 = vadd.f32 %v1985, %v2116
      %v2118 = vpop.f32.mrf.mxu0
      %v2119 = vadd.f32 %v1990, %v2118
      %v2120 = vpop.f32.mrf.mxu0
      %v2121 = vadd.f32 %v1990, %v2120
      %2122 = vdwg.mxu0
      %2123 = vmatprep.subr.bf16.mxu0 %v1888
      %2124 = vmatpush1.bf16.msra.mxu0 %v1887
      %2125 = vmatprep.subr.bf16.mxu0 %v1815
      %2126 = vmatpush1.bf16.msra.mxu0 %v1814
      %2127 = vmatprep.subr.bf16.mxu0 %v1742
      %2128 = vmatpush1.bf16.msra.mxu0 %v1741
      %2129 = vmatprep.subr.bf16.mxu0 %v1669
      %2130 = vmatpush1.bf16.msra.mxu0 %v1668
      %2131 = vmatprep.subr.bf16.mxu0 %v1661
      %2132 = vmatpush1.bf16.msra.mxu0 %v1660
      %2133 = vmatprep.subr.bf16.mxu0 %v1588
      %2134 = vmatpush1.bf16.msra.mxu0 %v1587
      %2135 = vmatprep.subr.bf16.mxu0 %v1515
      %2136 = vmatpush1.bf16.msra.mxu0 %v1514
      %2137 = vmatprep.subr.bf16.mxu0 %v1442
      %2138 = vmatpush1.bf16.msra.mxu0 %v1441
      %2139 = vmatprep.subr.bf16.mxu0 0
      %2140 = vmatpush2.bf16.msra.mxu0 0
      %2141 = vmatprep.subr.bf16.mxu0 0
      %2142 = vmatpush2.bf16.msra.mxu0 0
      %2143 = vmatprep.subr.bf16.mxu0 0
      %2144 = vmatpush2.bf16.msra.mxu0 0
      %2145 = vmatprep.subr.bf16.mxu0 0
      %2146 = vmatpush2.bf16.msra.mxu0 0
      %2147 = vmatprep.subr.bf16.mxu0 0
      %2148 = vmatpush2.bf16.msra.mxu0 0
      %2149 = vmatprep.subr.bf16.mxu0 0
      %2150 = vmatpush2.bf16.msra.mxu0 0
      %2151 = vmatprep.subr.bf16.mxu0 0
      %2152 = vmatpush2.bf16.msra.mxu0 0
      %2153 = vmatprep.subr.bf16.mxu0 %v1961
      %2154 = vmatpush2.bf16.msra.mxu0 %v1960
      %2155 = vmatprep.mubr.bf16.mxu0 %v2012
      %2156 = vmatmul.mubr.bf16.gmra.mxu0 %v2004
      %v2157 = vpop.f32.mrf.mxu0
      %v2158 = vadd.f32 %v1975, %v2157
      %v2159 = vpop.f32.mrf.mxu0
      %v2160 = vadd.f32 %v1975, %v2159
      %v2161 = vpop.f32.mrf.mxu0
      %v2162 = vadd.f32 %v1980, %v2161
      %v2163 = vpop.f32.mrf.mxu0
      %v2164 = vadd.f32 %v1980, %v2163
      %2165 = vmatprep.mubr.bf16.mxu0 %v2015
      %2166 = vmatmul.mubr.bf16.gmra.mxu0 %v2006
      %v2167 = vpop.f32.mrf.mxu0
      %v2168 = vadd.f32 %v1985, %v2167
      %v2169 = vpop.f32.mrf.mxu0
      %v2170 = vadd.f32 %v1985, %v2169
      %v2171 = vpop.f32.mrf.mxu0
      %v2172 = vadd.f32 %v1990, %v2171
      %v2173 = vpop.f32.mrf.mxu0
      %v2174 = vadd.f32 %v1990, %v2173
      %2175 = vdwg.mxu0
      %2176 = vmatprep.subr.bf16.mxu0 %v1890
      %2177 = vmatpush1.bf16.msra.mxu0 %v1889
      %2178 = vmatprep.subr.bf16.mxu0 %v1817
      %2179 = vmatpush1.bf16.msra.mxu0 %v1816
      %2180 = vmatprep.subr.bf16.mxu0 %v1744
      %2181 = vmatpush1.bf16.msra.mxu0 %v1743
      %2182 = vmatprep.subr.bf16.mxu0 %v1671
      %2183 = vmatpush1.bf16.msra.mxu0 %v1670
      %2184 = vmatprep.subr.bf16.mxu0 %v1663
      %2185 = vmatpush1.bf16.msra.mxu0 %v1662
      %2186 = vmatprep.subr.bf16.mxu0 %v1590
      %2187 = vmatpush1.bf16.msra.mxu0 %v1589
      %2188 = vmatprep.subr.bf16.mxu0 %v1517
      %2189 = vmatpush1.bf16.msra.mxu0 %v1516
      %2190 = vmatprep.subr.bf16.mxu0 %v1444
      %2191 = vmatpush1.bf16.msra.mxu0 %v1443
      %2192 = vmatprep.subr.bf16.mxu0 0
      %2193 = vmatpush2.bf16.msra.mxu0 0
      %2194 = vmatprep.subr.bf16.mxu0 0
      %2195 = vmatpush2.bf16.msra.mxu0 0
      %2196 = vmatprep.subr.bf16.mxu0 0
      %2197 = vmatpush2.bf16.msra.mxu0 0
      %2198 = vmatprep.subr.bf16.mxu0 0
      %2199 = vmatpush2.bf16.msra.mxu0 0
      %2200 = vmatprep.subr.bf16.mxu0 0
      %2201 = vmatpush2.bf16.msra.mxu0 0
      %2202 = vmatprep.subr.bf16.mxu0 0
      %2203 = vmatpush2.bf16.msra.mxu0 0
      %2204 = vmatprep.subr.bf16.mxu0 0
      %2205 = vmatpush2.bf16.msra.mxu0 0
      %2206 = vmatprep.subr.bf16.mxu0 %v1963
      %2207 = vmatpush2.bf16.msra.mxu0 %v1962
      %2208 = vmatprep.mubr.bf16.mxu0 %v2012
      %2209 = vmatmul.mubr.bf16.gmra.mxu0 %v2004
      %v2210 = vpop.f32.mrf.mxu0
      %v2211 = vadd.f32 %v1975, %v2210
      %v2212 = vpop.f32.mrf.mxu0
      %v2213 = vadd.f32 %v1975, %v2212
      %v2214 = vpop.f32.mrf.mxu0
      %v2215 = vadd.f32 %v1980, %v2214
      %v2216 = vpop.f32.mrf.mxu0
      %v2217 = vadd.f32 %v1980, %v2216
      %2218 = vmatprep.mubr.bf16.mxu0 %v2015
      %2219 = vmatmul.mubr.bf16.gmra.mxu0 %v2006
      %v2220 = vpop.f32.mrf.mxu0
      %v2221 = vadd.f32 %v1985, %v2220
      %v2222 = vpop.f32.mrf.mxu0
      %v2223 = vadd.f32 %v1985, %v2222
      %v2224 = vpop.f32.mrf.mxu0
      %v2225 = vadd.f32 %v1990, %v2224
      %v2226 = vpop.f32.mrf.mxu0
      %v2227 = vadd.f32 %v1990, %v2226
      %2228 = vdwg.mxu0
      %v2229 = vmax.f32 %v2052, 0.0
      %v2230 = vmax.f32 %v2054, 0.0
      %v2231 = vmax.f32 %v2105, 0.0
      %v2232 = vmax.f32 %v2107, 0.0
      %v2233 = vmax.f32 %v2158, 0.0
      %v2234 = vmax.f32 %v2160, 0.0
      %v2235 = vmax.f32 %v2211, 0.0
      %v2236 = vmax.f32 %v2213, 0.0
      %v2237 = vmax.f32 %v2056, 0.0
      %v2238 = vmax.f32 %v2058, 0.0
      %v2239 = vmax.f32 %v2109, 0.0
      %v2240 = vmax.f32 %v2111, 0.0
      %v2241 = vmax.f32 %v2162, 0.0
      %v2242 = vmax.f32 %v2164, 0.0
      %v2243 = vmax.f32 %v2215, 0.0
      %v2244 = vmax.f32 %v2217, 0.0
      %v2245 = vmax.f32 %v2062, 0.0
      %v2246 = vmax.f32 %v2064, 0.0
      %v2247 = vmax.f32 %v2115, 0.0
      %v2248 = vmax.f32 %v2117, 0.0
      %v2249 = vmax.f32 %v2168, 0.0
      %v2250 = vmax.f32 %v2170, 0.0
      %v2251 = vmax.f32 %v2221, 0.0
      %v2252 = vmax.f32 %v2223, 0.0
      %v2253 = vmax.f32 %v2066, 0.0
      %v2254 = vmax.f32 %v2068, 0.0
      %v2255 = vmax.f32 %v2119, 0.0
      %v2256 = vmax.f32 %v2121, 0.0
      %v2257 = vmax.f32 %v2172, 0.0
      %v2258 = vmax.f32 %v2174, 0.0
      %v2259 = vmax.f32 %v2225, 0.0
      %v2260 = vmax.f32 %v2227, 0.0
      %2261 = vrot.lane.b32.xlu0 %v2229, 126
      %v2262 = vpop.permute.xlu0 %2261
      %2263 = vrot.lane.b32.xlu0 %v2237, 126
      %v2264 = vpop.permute.xlu0 %2263
      %2265 = vrot.lane.b32.xlu0 %v2245, 126
      %v2266 = vpop.permute.xlu0 %2265
      %2267 = vrot.lane.b32.xlu0 %v2253, 126
      %v2268 = vpop.permute.xlu0 %2267
      %2269 = vrot.lane.b32.xlu0 %v2230, 126
      %v2270 = vpop.permute.xlu0 %2269
      %2271 = vrot.lane.b32.xlu0 %v2238, 126
      %v2272 = vpop.permute.xlu0 %2271
      %2273 = vrot.lane.b32.xlu0 %v2246, 126
      %v2274 = vpop.permute.xlu0 %2273
      %2275 = vrot.lane.b32.xlu0 %v2254, 126
      %v2276 = vpop.permute.xlu0 %2275
      %2277 = vrot.lane.b32.xlu0 %v2231, 126
      %v2278 = vpop.permute.xlu0 %2277
      %2279 = vrot.lane.b32.xlu0 %v2239, 126
      %v2280 = vpop.permute.xlu0 %2279
      %2281 = vrot.lane.b32.xlu0 %v2247, 126
      %v2282 = vpop.permute.xlu0 %2281
      %2283 = vrot.lane.b32.xlu0 %v2255, 126
      %v2284 = vpop.permute.xlu0 %2283
      %2285 = vrot.lane.b32.xlu0 %v2232, 126
      %v2286 = vpop.permute.xlu0 %2285
      %2287 = vrot.lane.b32.xlu0 %v2240, 126
      %v2288 = vpop.permute.xlu0 %2287
      %2289 = vrot.lane.b32.xlu0 %v2248, 126
      %v2290 = vpop.permute.xlu0 %2289
      %2291 = vrot.lane.b32.xlu0 %v2256, 126
      %v2292 = vpop.permute.xlu0 %2291
      %2293 = vrot.lane.b32.xlu0 %v2233, 126
      %v2294 = vpop.permute.xlu0 %2293
      %2295 = vrot.lane.b32.xlu0 %v2241, 126
      %v2296 = vpop.permute.xlu0 %2295
      %2297 = vrot.lane.b32.xlu0 %v2249, 126
      %v2298 = vpop.permute.xlu0 %2297
      %2299 = vrot.lane.b32.xlu0 %v2257, 126
      %v2300 = vpop.permute.xlu0 %2299
      %2301 = vrot.lane.b32.xlu0 %v2234, 126
      %v2302 = vpop.permute.xlu0 %2301
      %2303 = vrot.lane.b32.xlu0 %v2242, 126
      %v2304 = vpop.permute.xlu0 %2303
      %2305 = vrot.lane.b32.xlu0 %v2250, 126
      %v2306 = vpop.permute.xlu0 %2305
      %2307 = vrot.lane.b32.xlu0 %v2258, 126
      %v2308 = vpop.permute.xlu0 %2307
      %2309 = vrot.lane.b32.xlu0 %v2235, 126
      %v2310 = vpop.permute.xlu0 %2309
      %2311 = vrot.lane.b32.xlu0 %v2243, 126
      %v2312 = vpop.permute.xlu0 %2311
      %2313 = vrot.lane.b32.xlu0 %v2251, 126
      %v2314 = vpop.permute.xlu0 %2313
      %2315 = vrot.lane.b32.xlu0 %v2259, 126
      %v2316 = vpop.permute.xlu0 %2315
      %2317 = vrot.lane.b32.xlu0 %v2236, 126
      %v2318 = vpop.permute.xlu0 %2317
      %2319 = vrot.lane.b32.xlu0 %v2244, 126
      %v2320 = vpop.permute.xlu0 %2319
      %2321 = vrot.lane.b32.xlu0 %v2252, 126
      %v2322 = vpop.permute.xlu0 %2321
      %2323 = vrot.lane.b32.xlu0 %v2260, 126
      %v2324 = vpop.permute.xlu0 %2323
      %v2325 = vsel %vm1704, %v2310, %v2318
      %v2326 = vsel %vm1704, %v2312, %v2320
      %v2327 = vsel %vm1704, %v2314, %v2322
      %v2328 = vsel %vm1704, %v2316, %v2324
      %v2329 = vsel %vm1704, %v2302, %v2310
      %v2330 = vsel %vm1704, %v2304, %v2312
      %v2331 = vsel %vm1704, %v2306, %v2314
      %v2332 = vsel %vm1704, %v2308, %v2316
      %v2333 = vsel %vm1704, %v2294, %v2302
      %v2334 = vsel %vm1704, %v2296, %v2304
      %v2335 = vsel %vm1704, %v2298, %v2306
      %v2336 = vsel %vm1704, %v2300, %v2308
      %v2337 = vsel %vm1704, %v2286, %v2294
      %v2338 = vsel %vm1704, %v2288, %v2296
      %v2339 = vsel %vm1704, %v2290, %v2298
      %v2340 = vsel %vm1704, %v2292, %v2300
      %v2341 = vsel %vm1704, %v2278, %v2286
      %v2342 = vsel %vm1704, %v2280, %v2288
      %v2343 = vsel %vm1704, %v2282, %v2290
      %v2344 = vsel %vm1704, %v2284, %v2292
      %v2345 = vsel %vm1704, %v2270, %v2278
      %v2346 = vsel %vm1704, %v2272, %v2280
      %v2347 = vsel %vm1704, %v2274, %v2282
      %v2348 = vsel %vm1704, %v2276, %v2284
      %v2349 = vsel %vm1704, %v2262, %v2270
      %v2350 = vsel %vm1704, %v2264, %v2272
      %v2351 = vsel %vm1704, %v2266, %v2274
      %v2352 = vsel %vm1704, %v2268, %v2276
      %v2353 = vsel %vm1704, %v2318, %v2262
      %v2354 = vsel %vm1704, %v2320, %v2264
      %v2355 = vsel %vm1704, %v2322, %v2266
      %v2356 = vsel %vm1704, %v2324, %v2268
      %v2357 = vmax.f32 %v2229, %v2349
      %v2358 = vmax.f32 %v2230, %v2345
      %v2359 = vmax.f32 %v2231, %v2341
      %v2360 = vmax.f32 %v2232, %v2337
      %v2361 = vmax.f32 %v2233, %v2333
      %v2362 = vmax.f32 %v2234, %v2329
      %v2363 = vmax.f32 %v2235, %v2325
      %v2364 = vmax.f32 %v2236, %v2353
      %v2365 = vmax.f32 %v2237, %v2350
      %v2366 = vmax.f32 %v2238, %v2346
      %v2367 = vmax.f32 %v2239, %v2342
      %v2368 = vmax.f32 %v2240, %v2338
      %v2369 = vmax.f32 %v2241, %v2334
      %v2370 = vmax.f32 %v2242, %v2330
      %v2371 = vmax.f32 %v2243, %v2326
      %v2372 = vmax.f32 %v2244, %v2354
      %v2373 = vmax.f32 %v2245, %v2351
      %v2374 = vmax.f32 %v2246, %v2347
      %v2375 = vmax.f32 %v2247, %v2343
      %v2376 = vmax.f32 %v2248, %v2339
      %v2377 = vmax.f32 %v2249, %v2335
      %v2378 = vmax.f32 %v2250, %v2331
      %v2379 = vmax.f32 %v2251, %v2327
      %v2380 = vmax.f32 %v2252, %v2355
      %v2381 = vmax.f32 %v2253, %v2352
      %v2382 = vmax.f32 %v2254, %v2348
      %v2383 = vmax.f32 %v2255, %v2344
      %v2384 = vmax.f32 %v2256, %v2340
      %v2385 = vmax.f32 %v2257, %v2336
      %v2386 = vmax.f32 %v2258, %v2332
      %v2387 = vmax.f32 %v2259, %v2328
      %v2388 = vmax.f32 %v2260, %v2356
      %2389 = vrot.lane.b32.xlu0 %v2357, 96
      %v2390 = vpop.permute.xlu0 %2389
      %2391 = vrot.lane.b32.xlu0 %v2365, 96
      %v2392 = vpop.permute.xlu0 %2391
      %2393 = vrot.lane.b32.xlu0 %v2373, 96
      %v2394 = vpop.permute.xlu0 %2393
      %2395 = vrot.lane.b32.xlu0 %v2381, 96
      %v2396 = vpop.permute.xlu0 %2395
      %2397 = vrot.lane.b32.xlu0 %v2358, 96
      %v2398 = vpop.permute.xlu0 %2397
      %2399 = vrot.lane.b32.xlu0 %v2366, 96
      %v2400 = vpop.permute.xlu0 %2399
      %2401 = vrot.lane.b32.xlu0 %v2374, 96
      %v2402 = vpop.permute.xlu0 %2401
      %2403 = vrot.lane.b32.xlu0 %v2382, 96
      %v2404 = vpop.permute.xlu0 %2403
      %2405 = vrot.lane.b32.xlu0 %v2359, 96
      %v2406 = vpop.permute.xlu0 %2405
      %2407 = vrot.lane.b32.xlu0 %v2367, 96
      %v2408 = vpop.permute.xlu0 %2407
      %2409 = vrot.lane.b32.xlu0 %v2375, 96
      %v2410 = vpop.permute.xlu0 %2409
      %2411 = vrot.lane.b32.xlu0 %v2383, 96
      %v2412 = vpop.permute.xlu0 %2411
      %2413 = vrot.lane.b32.xlu0 %v2360, 96
      %v2414 = vpop.permute.xlu0 %2413
      %2415 = vrot.lane.b32.xlu0 %v2368, 96
      %v2416 = vpop.permute.xlu0 %2415
      %2417 = vrot.lane.b32.xlu0 %v2376, 96
      %v2418 = vpop.permute.xlu0 %2417
      %2419 = vrot.lane.b32.xlu0 %v2384, 96
      %v2420 = vpop.permute.xlu0 %2419
      %2421 = vrot.lane.b32.xlu0 %v2361, 96
      %v2422 = vpop.permute.xlu0 %2421
      %2423 = vrot.lane.b32.xlu0 %v2369, 96
      %v2424 = vpop.permute.xlu0 %2423
      %2425 = vrot.lane.b32.xlu0 %v2377, 96
      %v2426 = vpop.permute.xlu0 %2425
      %2427 = vrot.lane.b32.xlu0 %v2385, 96
      %v2428 = vpop.permute.xlu0 %2427
      %2429 = vrot.lane.b32.xlu0 %v2362, 96
      %v2430 = vpop.permute.xlu0 %2429
      %2431 = vrot.lane.b32.xlu0 %v2370, 96
      %v2432 = vpop.permute.xlu0 %2431
      %2433 = vrot.lane.b32.xlu0 %v2378, 96
      %v2434 = vpop.permute.xlu0 %2433
      %2435 = vrot.lane.b32.xlu0 %v2386, 96
      %v2436 = vpop.permute.xlu0 %2435
      %2437 = vrot.lane.b32.xlu0 %v2363, 96
      %v2438 = vpop.permute.xlu0 %2437
      %2439 = vrot.lane.b32.xlu0 %v2371, 96
      %v2440 = vpop.permute.xlu0 %2439
      %2441 = vrot.lane.b32.xlu0 %v2379, 96
      %v2442 = vpop.permute.xlu0 %2441
      %2443 = vrot.lane.b32.xlu0 %v2387, 96
      %v2444 = vpop.permute.xlu0 %2443
      %2445 = vrot.lane.b32.xlu0 %v2364, 96
      %v2446 = vpop.permute.xlu0 %2445
      %2447 = vrot.lane.b32.xlu0 %v2372, 96
      %v2448 = vpop.permute.xlu0 %2447
      %2449 = vrot.lane.b32.xlu0 %v2380, 96
      %v2450 = vpop.permute.xlu0 %2449
      %2451 = vrot.lane.b32.xlu0 %v2388, 96
      %v2452 = vpop.permute.xlu0 %2451
      %v2453 = vsel %vm1850, %v2438, %v2446
      %v2454 = vsel %vm1850, %v2440, %v2448
      %v2455 = vsel %vm1850, %v2442, %v2450
      %v2456 = vsel %vm1850, %v2444, %v2452
      %v2457 = vsel %vm1850, %v2430, %v2438
      %v2458 = vsel %vm1850, %v2432, %v2440
      %v2459 = vsel %vm1850, %v2434, %v2442
      %v2460 = vsel %vm1850, %v2436, %v2444
      %v2461 = vsel %vm1850, %v2422, %v2430
      %v2462 = vsel %vm1850, %v2424, %v2432
      %v2463 = vsel %vm1850, %v2426, %v2434
      %v2464 = vsel %vm1850, %v2428, %v2436
      %v2465 = vsel %vm1850, %v2414, %v2422
      %v2466 = vsel %vm1850, %v2416, %v2424
      %v2467 = vsel %vm1850, %v2418, %v2426
      %v2468 = vsel %vm1850, %v2420, %v2428
      %v2469 = vsel %vm1850, %v2406, %v2414
      %v2470 = vsel %vm1850, %v2408, %v2416
      %v2471 = vsel %vm1850, %v2410, %v2418
      %v2472 = vsel %vm1850, %v2412, %v2420
      %v2473 = vsel %vm1850, %v2398, %v2406
      %v2474 = vsel %vm1850, %v2400, %v2408
      %v2475 = vsel %vm1850, %v2402, %v2410
      %v2476 = vsel %vm1850, %v2404, %v2412
      %v2477 = vsel %vm1850, %v2390, %v2398
      %v2478 = vsel %vm1850, %v2392, %v2400
      %v2479 = vsel %vm1850, %v2394, %v2402
      %v2480 = vsel %vm1850, %v2396, %v2404
      %v2481 = vsel %vm1850, %v2446, %v2390
      %v2482 = vsel %vm1850, %v2448, %v2392
      %v2483 = vsel %vm1850, %v2450, %v2394
      %v2484 = vsel %vm1850, %v2452, %v2396
      %v2485 = vmax.f32 %v2357, %v2477
      %v2486 = vmax.f32 %v2358, %v2473
      %v2487 = vmax.f32 %v2359, %v2469
      %v2488 = vmax.f32 %v2360, %v2465
      %v2489 = vmax.f32 %v2361, %v2461
      %v2490 = vmax.f32 %v2362, %v2457
      %v2491 = vmax.f32 %v2363, %v2453
      %v2492 = vmax.f32 %v2364, %v2481
      %v2493 = vmax.f32 %v2365, %v2478
      %v2494 = vmax.f32 %v2366, %v2474
      %v2495 = vmax.f32 %v2367, %v2470
      %v2496 = vmax.f32 %v2368, %v2466
      %v2497 = vmax.f32 %v2369, %v2462
      %v2498 = vmax.f32 %v2370, %v2458
      %v2499 = vmax.f32 %v2371, %v2454
      %v2500 = vmax.f32 %v2372, %v2482
      %v2501 = vmax.f32 %v2373, %v2479
      %v2502 = vmax.f32 %v2374, %v2475
      %v2503 = vmax.f32 %v2375, %v2471
      %v2504 = vmax.f32 %v2376, %v2467
      %v2505 = vmax.f32 %v2377, %v2463
      %v2506 = vmax.f32 %v2378, %v2459
      %v2507 = vmax.f32 %v2379, %v2455
      %v2508 = vmax.f32 %v2380, %v2483
      %v2509 = vmax.f32 %v2381, %v2480
      %v2510 = vmax.f32 %v2382, %v2476
      %v2511 = vmax.f32 %v2383, %v2472
      %v2512 = vmax.f32 %v2384, %v2468
      %v2513 = vmax.f32 %v2385, %v2464
      %v2514 = vmax.f32 %v2386, %v2460
      %v2515 = vmax.f32 %v2387, %v2456
      %v2516 = vmax.f32 %v2388, %v2484
      %vm2517 = vcmp.ge.s32.totalorder %v399, 4
      %vm2518 = vcmp.ge.s32.totalorder %v400, 4
      %vm2519 = vcmp.ge.s32.totalorder %v401, 4
      %vm2520 = vcmp.ge.s32.totalorder %v402, 4
      %vm2521 = vcmp.ge.s32.totalorder %v403, 4
      %vm2522 = vcmp.ge.s32.totalorder %v404, 4
      %vm2523 = vcmp.ge.s32.totalorder %v405, 4
      %vm2524 = vcmp.ge.s32.totalorder %v406, 4
      %v2525 = vsel %vm2517, 1, 0
      %v2526 = vsel %vm2518, 1, 0
      %v2527 = vsel %vm2519, 1, 0
      %v2528 = vsel %vm2520, 1, 0
      %v2529 = vsel %vm2521, 1, 0
      %v2530 = vsel %vm2522, 1, 0
      %v2531 = vsel %vm2523, 1, 0
      %v2532 = vsel %vm2524, 1, 0
      %v2533 = vcvt.s32.f32 %v2525
      %v2534 = vcvt.s32.f32 %v2526
      %v2535 = vcvt.s32.f32 %v2527
      %v2536 = vcvt.s32.f32 %v2528
      %v2537 = vcvt.s32.f32 %v2529
      %v2538 = vcvt.s32.f32 %v2530
      %v2539 = vcvt.s32.f32 %v2531
      %v2540 = vcvt.s32.f32 %v2532
      %vm2541 = vcmp.lt.s32.totalorder %v399, 12
      %vm2542 = vcmp.lt.s32.totalorder %v400, 12
      %vm2543 = vcmp.lt.s32.totalorder %v401, 12
      %vm2544 = vcmp.lt.s32.totalorder %v402, 12
      %vm2545 = vcmp.lt.s32.totalorder %v403, 12
      %vm2546 = vcmp.lt.s32.totalorder %v404, 12
      %vm2547 = vcmp.lt.s32.totalorder %v405, 12
      %vm2548 = vcmp.lt.s32.totalorder %v406, 12
      %v2549 = vsel %vm2541, 1, 0
      %v2550 = vsel %vm2542, 1, 0
      %v2551 = vsel %vm2543, 1, 0
      %v2552 = vsel %vm2544, 1, 0
      %v2553 = vsel %vm2545, 1, 0
      %v2554 = vsel %vm2546, 1, 0
      %v2555 = vsel %vm2547, 1, 0
      %v2556 = vsel %vm2548, 1, 0
      %v2557 = vcvt.s32.f32 %v2549
      %v2558 = vcvt.s32.f32 %v2550
      %v2559 = vcvt.s32.f32 %v2551
      %v2560 = vcvt.s32.f32 %v2552
      %v2561 = vcvt.s32.f32 %v2553
      %v2562 = vcvt.s32.f32 %v2554
      %v2563 = vcvt.s32.f32 %v2555
      %v2564 = vcvt.s32.f32 %v2556
      %vm2565 = vcmp.ge.s32.totalorder %v415, 4
      %vm2566 = vcmp.ge.s32.totalorder %v416, 4
      %vm2567 = vcmp.ge.s32.totalorder %v417, 4
      %vm2568 = vcmp.ge.s32.totalorder %v418, 4
      %vm2569 = vcmp.ge.s32.totalorder %v419, 4
      %vm2570 = vcmp.ge.s32.totalorder %v420, 4
      %vm2571 = vcmp.ge.s32.totalorder %v421, 4
      %vm2572 = vcmp.ge.s32.totalorder %v422, 4
      %v2573 = vsel %vm2565, 1, 0
      %v2574 = vsel %vm2566, 1, 0
      %v2575 = vsel %vm2567, 1, 0
      %v2576 = vsel %vm2568, 1, 0
      %v2577 = vsel %vm2569, 1, 0
      %v2578 = vsel %vm2570, 1, 0
      %v2579 = vsel %vm2571, 1, 0
      %v2580 = vsel %vm2572, 1, 0
      %v2581 = vcvt.s32.f32 %v2573
      %v2582 = vcvt.s32.f32 %v2574
      %v2583 = vcvt.s32.f32 %v2575
      %v2584 = vcvt.s32.f32 %v2576
      %v2585 = vcvt.s32.f32 %v2577
      %v2586 = vcvt.s32.f32 %v2578
      %v2587 = vcvt.s32.f32 %v2579
      %v2588 = vcvt.s32.f32 %v2580
      %vm2589 = vcmp.lt.s32.totalorder %v415, 12
      %vm2590 = vcmp.lt.s32.totalorder %v416, 12
      %vm2591 = vcmp.lt.s32.totalorder %v417, 12
      %vm2592 = vcmp.lt.s32.totalorder %v418, 12
      %vm2593 = vcmp.lt.s32.totalorder %v419, 12
      %vm2594 = vcmp.lt.s32.totalorder %v420, 12
      %vm2595 = vcmp.lt.s32.totalorder %v421, 12
      %vm2596 = vcmp.lt.s32.totalorder %v422, 12
      %v2597 = vsel %vm2589, 1, 0
      %v2598 = vsel %vm2590, 1, 0
      %v2599 = vsel %vm2591, 1, 0
      %v2600 = vsel %vm2592, 1, 0
      %v2601 = vsel %vm2593, 1, 0
      %v2602 = vsel %vm2594, 1, 0
      %v2603 = vsel %vm2595, 1, 0
      %v2604 = vsel %vm2596, 1, 0
      %v2605 = vcvt.s32.f32 %v2597
      %v2606 = vcvt.s32.f32 %v2598
      %v2607 = vcvt.s32.f32 %v2599
      %v2608 = vcvt.s32.f32 %v2600
      %v2609 = vcvt.s32.f32 %v2601
      %v2610 = vcvt.s32.f32 %v2602
      %v2611 = vcvt.s32.f32 %v2603
      %v2612 = vcvt.s32.f32 %v2604
      %v2613 = vmul.f32 %v2581, %v2533
      %v2614 = vmul.f32 %v2582, %v2534
      %v2615 = vmul.f32 %v2583, %v2535
      %v2616 = vmul.f32 %v2584, %v2536
      %v2617 = vmul.f32 %v2585, %v2537
      %v2618 = vmul.f32 %v2586, %v2538
      %v2619 = vmul.f32 %v2587, %v2539
      %v2620 = vmul.f32 %v2588, %v2540
      %v2621 = vmul.f32 %v2581, %v2557
      %v2622 = vmul.f32 %v2582, %v2558
      %v2623 = vmul.f32 %v2583, %v2559
      %v2624 = vmul.f32 %v2584, %v2560
      %v2625 = vmul.f32 %v2585, %v2561
      %v2626 = vmul.f32 %v2586, %v2562
      %v2627 = vmul.f32 %v2587, %v2563
      %v2628 = vmul.f32 %v2588, %v2564
      %v2629 = vmul.f32 %v2605, %v2533
      %v2630 = vmul.f32 %v2606, %v2534
      %v2631 = vmul.f32 %v2607, %v2535
      %v2632 = vmul.f32 %v2608, %v2536
      %v2633 = vmul.f32 %v2609, %v2537
      %v2634 = vmul.f32 %v2610, %v2538
      %v2635 = vmul.f32 %v2611, %v2539
      %v2636 = vmul.f32 %v2612, %v2540
      %v2637 = vmul.f32 %v2605, %v2557
      %v2638 = vmul.f32 %v2606, %v2558
      %v2639 = vmul.f32 %v2607, %v2559
      %v2640 = vmul.f32 %v2608, %v2560
      %v2641 = vmul.f32 %v2609, %v2561
      %v2642 = vmul.f32 %v2610, %v2562
      %v2643 = vmul.f32 %v2611, %v2563
      %v2644 = vmul.f32 %v2612, %v2564
      %2645 = vrot.lane.b32.xlu0 %v2485, 68
      %v2646 = vpop.permute.xlu0 %2645
      %2647 = vrot.lane.b32.xlu0 %v2493, 68
      %v2648 = vpop.permute.xlu0 %2647
      %2649 = vrot.lane.b32.xlu0 %v2501, 68
      %v2650 = vpop.permute.xlu0 %2649
      %2651 = vrot.lane.b32.xlu0 %v2509, 68
      %v2652 = vpop.permute.xlu0 %2651
      %2653 = vrot.lane.b32.xlu0 %v2486, 68
      %v2654 = vpop.permute.xlu0 %2653
      %2655 = vrot.lane.b32.xlu0 %v2494, 68
      %v2656 = vpop.permute.xlu0 %2655
      %2657 = vrot.lane.b32.xlu0 %v2502, 68
      %v2658 = vpop.permute.xlu0 %2657
      %2659 = vrot.lane.b32.xlu0 %v2510, 68
      %v2660 = vpop.permute.xlu0 %2659
      %2661 = vrot.lane.b32.xlu0 %v2487, 68
      %v2662 = vpop.permute.xlu0 %2661
      %2663 = vrot.lane.b32.xlu0 %v2495, 68
      %v2664 = vpop.permute.xlu0 %2663
      %2665 = vrot.lane.b32.xlu0 %v2503, 68
      %v2666 = vpop.permute.xlu0 %2665
      %2667 = vrot.lane.b32.xlu0 %v2511, 68
      %v2668 = vpop.permute.xlu0 %2667
      %2669 = vrot.lane.b32.xlu0 %v2488, 68
      %v2670 = vpop.permute.xlu0 %2669
      %2671 = vrot.lane.b32.xlu0 %v2496, 68
      %v2672 = vpop.permute.xlu0 %2671
      %2673 = vrot.lane.b32.xlu0 %v2504, 68
      %v2674 = vpop.permute.xlu0 %2673
      %2675 = vrot.lane.b32.xlu0 %v2512, 68
      %v2676 = vpop.permute.xlu0 %2675
      %2677 = vrot.lane.b32.xlu0 %v2489, 68
      %v2678 = vpop.permute.xlu0 %2677
      %2679 = vrot.lane.b32.xlu0 %v2497, 68
      %v2680 = vpop.permute.xlu0 %2679
      %2681 = vrot.lane.b32.xlu0 %v2505, 68
      %v2682 = vpop.permute.xlu0 %2681
      %2683 = vrot.lane.b32.xlu0 %v2513, 68
      %v2684 = vpop.permute.xlu0 %2683
      %2685 = vrot.lane.b32.xlu0 %v2490, 68
      %v2686 = vpop.permute.xlu0 %2685
      %2687 = vrot.lane.b32.xlu0 %v2498, 68
      %v2688 = vpop.permute.xlu0 %2687
      %2689 = vrot.lane.b32.xlu0 %v2506, 68
      %v2690 = vpop.permute.xlu0 %2689
      %2691 = vrot.lane.b32.xlu0 %v2514, 68
      %v2692 = vpop.permute.xlu0 %2691
      %2693 = vrot.lane.b32.xlu0 %v2491, 68
      %v2694 = vpop.permute.xlu0 %2693
      %2695 = vrot.lane.b32.xlu0 %v2499, 68
      %v2696 = vpop.permute.xlu0 %2695
      %2697 = vrot.lane.b32.xlu0 %v2507, 68
      %v2698 = vpop.permute.xlu0 %2697
      %2699 = vrot.lane.b32.xlu0 %v2515, 68
      %v2700 = vpop.permute.xlu0 %2699
      %2701 = vrot.lane.b32.xlu0 %v2492, 68
      %v2702 = vpop.permute.xlu0 %2701
      %2703 = vrot.lane.b32.xlu0 %v2500, 68
      %v2704 = vpop.permute.xlu0 %2703
      %2705 = vrot.lane.b32.xlu0 %v2508, 68
      %v2706 = vpop.permute.xlu0 %2705
      %2707 = vrot.lane.b32.xlu0 %v2516, 68
      %v2708 = vpop.permute.xlu0 %2707
      %vm2709 = vcmp.lt.s32.totalorder %v391, 68
      %v2710 = vsel %vm2709, %v2694, %v2702
      %v2711 = vsel %vm2709, %v2696, %v2704
      %v2712 = vsel %vm2709, %v2698, %v2706
      %v2713 = vsel %vm2709, %v2700, %v2708
      %v2714 = vsel %vm2709, %v2686, %v2694
      %v2715 = vsel %vm2709, %v2688, %v2696
      %v2716 = vsel %vm2709, %v2690, %v2698
      %v2717 = vsel %vm2709, %v2692, %v2700
      %v2718 = vsel %vm2709, %v2678, %v2686
      %v2719 = vsel %vm2709, %v2680, %v2688
      %v2720 = vsel %vm2709, %v2682, %v2690
      %v2721 = vsel %vm2709, %v2684, %v2692
      %v2722 = vsel %vm2709, %v2670, %v2678
      %v2723 = vsel %vm2709, %v2672, %v2680
      %v2724 = vsel %vm2709, %v2674, %v2682
      %v2725 = vsel %vm2709, %v2676, %v2684
      %v2726 = vsel %vm2709, %v2662, %v2670
      %v2727 = vsel %vm2709, %v2664, %v2672
      %v2728 = vsel %vm2709, %v2666, %v2674
      %v2729 = vsel %vm2709, %v2668, %v2676
      %v2730 = vsel %vm2709, %v2654, %v2662
      %v2731 = vsel %vm2709, %v2656, %v2664
      %v2732 = vsel %vm2709, %v2658, %v2666
      %v2733 = vsel %vm2709, %v2660, %v2668
      %v2734 = vsel %vm2709, %v2646, %v2654
      %v2735 = vsel %vm2709, %v2648, %v2656
      %v2736 = vsel %vm2709, %v2650, %v2658
      %v2737 = vsel %vm2709, %v2652, %v2660
      %v2738 = vsel %vm2709, %v2702, %v2646
      %v2739 = vsel %vm2709, %v2704, %v2648
      %v2740 = vsel %vm2709, %v2706, %v2650
      %v2741 = vsel %vm2709, %v2708, %v2652
      %v2742 = vmul.f32 %v2738, %v2613
      %v2743 = vmul.f32 %v2734, %v2614
      %v2744 = vmul.f32 %v2730, %v2615
      %v2745 = vmul.f32 %v2726, %v2616
      %v2746 = vmul.f32 %v2722, %v2617
      %v2747 = vmul.f32 %v2718, %v2618
      %v2748 = vmul.f32 %v2714, %v2619
      %v2749 = vmul.f32 %v2710, %v2620
      %v2750 = vmul.f32 %v2739, %v2613
      %v2751 = vmul.f32 %v2735, %v2614
      %v2752 = vmul.f32 %v2731, %v2615
      %v2753 = vmul.f32 %v2727, %v2616
      %v2754 = vmul.f32 %v2723, %v2617
      %v2755 = vmul.f32 %v2719, %v2618
      %v2756 = vmul.f32 %v2715, %v2619
      %v2757 = vmul.f32 %v2711, %v2620
      %v2758 = vmul.f32 %v2740, %v2613
      %v2759 = vmul.f32 %v2736, %v2614
      %v2760 = vmul.f32 %v2732, %v2615
      %v2761 = vmul.f32 %v2728, %v2616
      %v2762 = vmul.f32 %v2724, %v2617
      %v2763 = vmul.f32 %v2720, %v2618
      %v2764 = vmul.f32 %v2716, %v2619
      %v2765 = vmul.f32 %v2712, %v2620
      %v2766 = vmul.f32 %v2741, %v2613
      %v2767 = vmul.f32 %v2737, %v2614
      %v2768 = vmul.f32 %v2733, %v2615
      %v2769 = vmul.f32 %v2729, %v2616
      %v2770 = vmul.f32 %v2725, %v2617
      %v2771 = vmul.f32 %v2721, %v2618
      %v2772 = vmul.f32 %v2717, %v2619
      %v2773 = vmul.f32 %v2713, %v2620
      %v2774 = vpack.c.bf16 %v2750, %v2742
      %v2775 = vpack.c.bf16 %v2751, %v2743
      %v2776 = vpack.c.bf16 %v2752, %v2744
      %v2777 = vpack.c.bf16 %v2753, %v2745
      %v2778 = vpack.c.bf16 %v2754, %v2746
      %v2779 = vpack.c.bf16 %v2755, %v2747
      %v2780 = vpack.c.bf16 %v2756, %v2748
      %v2781 = vpack.c.bf16 %v2757, %v2749
      %v2782 = vpack.c.bf16 %v2766, %v2758
      %v2783 = vpack.c.bf16 %v2767, %v2759
      %v2784 = vpack.c.bf16 %v2768, %v2760
      %v2785 = vpack.c.bf16 %v2769, %v2761
      %v2786 = vpack.c.bf16 %v2770, %v2762
      %v2787 = vpack.c.bf16 %v2771, %v2763
      %v2788 = vpack.c.bf16 %v2772, %v2764
      %v2789 = vpack.c.bf16 %v2773, %v2765
      %2790 = vrot.lane.b32.xlu0 %v2485, 64
      %v2791 = vpop.permute.xlu0 %2790
      %2792 = vrot.lane.b32.xlu0 %v2493, 64
      %v2793 = vpop.permute.xlu0 %2792
      %2794 = vrot.lane.b32.xlu0 %v2501, 64
      %v2795 = vpop.permute.xlu0 %2794
      %2796 = vrot.lane.b32.xlu0 %v2509, 64
      %v2797 = vpop.permute.xlu0 %2796
      %2798 = vrot.lane.b32.xlu0 %v2486, 64
      %v2799 = vpop.permute.xlu0 %2798
      %2800 = vrot.lane.b32.xlu0 %v2494, 64
      %v2801 = vpop.permute.xlu0 %2800
      %2802 = vrot.lane.b32.xlu0 %v2502, 64
      %v2803 = vpop.permute.xlu0 %2802
      %2804 = vrot.lane.b32.xlu0 %v2510, 64
      %v2805 = vpop.permute.xlu0 %2804
      %2806 = vrot.lane.b32.xlu0 %v2487, 64
      %v2807 = vpop.permute.xlu0 %2806
      %2808 = vrot.lane.b32.xlu0 %v2495, 64
      %v2809 = vpop.permute.xlu0 %2808
      %2810 = vrot.lane.b32.xlu0 %v2503, 64
      %v2811 = vpop.permute.xlu0 %2810
      %2812 = vrot.lane.b32.xlu0 %v2511, 64
      %v2813 = vpop.permute.xlu0 %2812
      %2814 = vrot.lane.b32.xlu0 %v2488, 64
      %v2815 = vpop.permute.xlu0 %2814
      %2816 = vrot.lane.b32.xlu0 %v2496, 64
      %v2817 = vpop.permute.xlu0 %2816
      %2818 = vrot.lane.b32.xlu0 %v2504, 64
      %v2819 = vpop.permute.xlu0 %2818
      %2820 = vrot.lane.b32.xlu0 %v2512, 64
      %v2821 = vpop.permute.xlu0 %2820
      %2822 = vrot.lane.b32.xlu0 %v2489, 64
      %v2823 = vpop.permute.xlu0 %2822
      %2824 = vrot.lane.b32.xlu0 %v2497, 64
      %v2825 = vpop.permute.xlu0 %2824
      %2826 = vrot.lane.b32.xlu0 %v2505, 64
      %v2827 = vpop.permute.xlu0 %2826
      %2828 = vrot.lane.b32.xlu0 %v2513, 64
      %v2829 = vpop.permute.xlu0 %2828
      %2830 = vrot.lane.b32.xlu0 %v2490, 64
      %v2831 = vpop.permute.xlu0 %2830
      %2832 = vrot.lane.b32.xlu0 %v2498, 64
      %v2833 = vpop.permute.xlu0 %2832
      %2834 = vrot.lane.b32.xlu0 %v2506, 64
      %v2835 = vpop.permute.xlu0 %2834
      %2836 = vrot.lane.b32.xlu0 %v2514, 64
      %v2837 = vpop.permute.xlu0 %2836
      %2838 = vrot.lane.b32.xlu0 %v2491, 64
      %v2839 = vpop.permute.xlu0 %2838
      %2840 = vrot.lane.b32.xlu0 %v2499, 64
      %v2841 = vpop.permute.xlu0 %2840
      %2842 = vrot.lane.b32.xlu0 %v2507, 64
      %v2843 = vpop.permute.xlu0 %2842
      %2844 = vrot.lane.b32.xlu0 %v2515, 64
      %v2845 = vpop.permute.xlu0 %2844
      %2846 = vrot.lane.b32.xlu0 %v2492, 64
      %v2847 = vpop.permute.xlu0 %2846
      %2848 = vrot.lane.b32.xlu0 %v2500, 64
      %v2849 = vpop.permute.xlu0 %2848
      %2850 = vrot.lane.b32.xlu0 %v2508, 64
      %v2851 = vpop.permute.xlu0 %2850
      %2852 = vrot.lane.b32.xlu0 %v2516, 64
      %v2853 = vpop.permute.xlu0 %2852
      %vm2854 = vcmp.lt.s32.totalorder %v391, 64
      %v2855 = vsel %vm2854, %v2839, %v2847
      %v2856 = vsel %vm2854, %v2841, %v2849
      %v2857 = vsel %vm2854, %v2843, %v2851
      %v2858 = vsel %vm2854, %v2845, %v2853
      %v2859 = vsel %vm2854, %v2831, %v2839
      %v2860 = vsel %vm2854, %v2833, %v2841
      %v2861 = vsel %vm2854, %v2835, %v2843
      %v2862 = vsel %vm2854, %v2837, %v2845
      %v2863 = vsel %vm2854, %v2823, %v2831
      %v2864 = vsel %vm2854, %v2825, %v2833
      %v2865 = vsel %vm2854, %v2827, %v2835
      %v2866 = vsel %vm2854, %v2829, %v2837
      %v2867 = vsel %vm2854, %v2815, %v2823
      %v2868 = vsel %vm2854, %v2817, %v2825
      %v2869 = vsel %vm2854, %v2819, %v2827
      %v2870 = vsel %vm2854, %v2821, %v2829
      %v2871 = vsel %vm2854, %v2807, %v2815
      %v2872 = vsel %vm2854, %v2809, %v2817
      %v2873 = vsel %vm2854, %v2811, %v2819
      %v2874 = vsel %vm2854, %v2813, %v2821
      %v2875 = vsel %vm2854, %v2799, %v2807
      %v2876 = vsel %vm2854, %v2801, %v2809
      %v2877 = vsel %vm2854, %v2803, %v2811
      %v2878 = vsel %vm2854, %v2805, %v2813
      %v2879 = vsel %vm2854, %v2791, %v2799
      %v2880 = vsel %vm2854, %v2793, %v2801
      %v2881 = vsel %vm2854, %v2795, %v2803
      %v2882 = vsel %vm2854, %v2797, %v2805
      %v2883 = vsel %vm2854, %v2847, %v2791
      %v2884 = vsel %vm2854, %v2849, %v2793
      %v2885 = vsel %vm2854, %v2851, %v2795
      %v2886 = vsel %vm2854, %v2853, %v2797
      %v2887 = vmul.f32 %v2883, %v2581
      %v2888 = vmul.f32 %v2879, %v2582
      %v2889 = vmul.f32 %v2875, %v2583
      %v2890 = vmul.f32 %v2871, %v2584
      %v2891 = vmul.f32 %v2867, %v2585
      %v2892 = vmul.f32 %v2863, %v2586
      %v2893 = vmul.f32 %v2859, %v2587
      %v2894 = vmul.f32 %v2855, %v2588
      %v2895 = vmul.f32 %v2884, %v2581
      %v2896 = vmul.f32 %v2880, %v2582
      %v2897 = vmul.f32 %v2876, %v2583
      %v2898 = vmul.f32 %v2872, %v2584
      %v2899 = vmul.f32 %v2868, %v2585
      %v2900 = vmul.f32 %v2864, %v2586
      %v2901 = vmul.f32 %v2860, %v2587
      %v2902 = vmul.f32 %v2856, %v2588
      %v2903 = vmul.f32 %v2885, %v2581
      %v2904 = vmul.f32 %v2881, %v2582
      %v2905 = vmul.f32 %v2877, %v2583
      %v2906 = vmul.f32 %v2873, %v2584
      %v2907 = vmul.f32 %v2869, %v2585
      %v2908 = vmul.f32 %v2865, %v2586
      %v2909 = vmul.f32 %v2861, %v2587
      %v2910 = vmul.f32 %v2857, %v2588
      %v2911 = vmul.f32 %v2886, %v2581
      %v2912 = vmul.f32 %v2882, %v2582
      %v2913 = vmul.f32 %v2878, %v2583
      %v2914 = vmul.f32 %v2874, %v2584
      %v2915 = vmul.f32 %v2870, %v2585
      %v2916 = vmul.f32 %v2866, %v2586
      %v2917 = vmul.f32 %v2862, %v2587
      %v2918 = vmul.f32 %v2858, %v2588
      %v2919 = vpack.c.bf16 %v2895, %v2887
      %v2920 = vpack.c.bf16 %v2896, %v2888
      %v2921 = vpack.c.bf16 %v2897, %v2889
      %v2922 = vpack.c.bf16 %v2898, %v2890
      %v2923 = vpack.c.bf16 %v2899, %v2891
      %v2924 = vpack.c.bf16 %v2900, %v2892
      %v2925 = vpack.c.bf16 %v2901, %v2893
      %v2926 = vpack.c.bf16 %v2902, %v2894
      %v2927 = vpack.c.bf16 %v2911, %v2903
      %v2928 = vpack.c.bf16 %v2912, %v2904
      %v2929 = vpack.c.bf16 %v2913, %v2905
      %v2930 = vpack.c.bf16 %v2914, %v2906
      %v2931 = vpack.c.bf16 %v2915, %v2907
      %v2932 = vpack.c.bf16 %v2916, %v2908
      %v2933 = vpack.c.bf16 %v2917, %v2909
      %v2934 = vpack.c.bf16 %v2918, %v2910
      %2935 = vrot.lane.b32.xlu0 %v2485, 60
      %v2936 = vpop.permute.xlu0 %2935
      %2937 = vrot.lane.b32.xlu0 %v2493, 60
      %v2938 = vpop.permute.xlu0 %2937
      %2939 = vrot.lane.b32.xlu0 %v2501, 60
      %v2940 = vpop.permute.xlu0 %2939
      %2941 = vrot.lane.b32.xlu0 %v2509, 60
      %v2942 = vpop.permute.xlu0 %2941
      %2943 = vrot.lane.b32.xlu0 %v2486, 60
      %v2944 = vpop.permute.xlu0 %2943
      %2945 = vrot.lane.b32.xlu0 %v2494, 60
      %v2946 = vpop.permute.xlu0 %2945
      %2947 = vrot.lane.b32.xlu0 %v2502, 60
      %v2948 = vpop.permute.xlu0 %2947
      %2949 = vrot.lane.b32.xlu0 %v2510, 60
      %v2950 = vpop.permute.xlu0 %2949
      %2951 = vrot.lane.b32.xlu0 %v2487, 60
      %v2952 = vpop.permute.xlu0 %2951
      %2953 = vrot.lane.b32.xlu0 %v2495, 60
      %v2954 = vpop.permute.xlu0 %2953
      %2955 = vrot.lane.b32.xlu0 %v2503, 60
      %v2956 = vpop.permute.xlu0 %2955
      %2957 = vrot.lane.b32.xlu0 %v2511, 60
      %v2958 = vpop.permute.xlu0 %2957
      %2959 = vrot.lane.b32.xlu0 %v2488, 60
      %v2960 = vpop.permute.xlu0 %2959
      %2961 = vrot.lane.b32.xlu0 %v2496, 60
      %v2962 = vpop.permute.xlu0 %2961
      %2963 = vrot.lane.b32.xlu0 %v2504, 60
      %v2964 = vpop.permute.xlu0 %2963
      %2965 = vrot.lane.b32.xlu0 %v2512, 60
      %v2966 = vpop.permute.xlu0 %2965
      %2967 = vrot.lane.b32.xlu0 %v2489, 60
      %v2968 = vpop.permute.xlu0 %2967
      %2969 = vrot.lane.b32.xlu0 %v2497, 60
      %v2970 = vpop.permute.xlu0 %2969
      %2971 = vrot.lane.b32.xlu0 %v2505, 60
      %v2972 = vpop.permute.xlu0 %2971
      %2973 = vrot.lane.b32.xlu0 %v2513, 60
      %v2974 = vpop.permute.xlu0 %2973
      %2975 = vrot.lane.b32.xlu0 %v2490, 60
      %v2976 = vpop.permute.xlu0 %2975
      %2977 = vrot.lane.b32.xlu0 %v2498, 60
      %v2978 = vpop.permute.xlu0 %2977
      %2979 = vrot.lane.b32.xlu0 %v2506, 60
      %v2980 = vpop.permute.xlu0 %2979
      %2981 = vrot.lane.b32.xlu0 %v2514, 60
      %v2982 = vpop.permute.xlu0 %2981
      %2983 = vrot.lane.b32.xlu0 %v2491, 60
      %v2984 = vpop.permute.xlu0 %2983
      %2985 = vrot.lane.b32.xlu0 %v2499, 60
      %v2986 = vpop.permute.xlu0 %2985
      %2987 = vrot.lane.b32.xlu0 %v2507, 60
      %v2988 = vpop.permute.xlu0 %2987
      %2989 = vrot.lane.b32.xlu0 %v2515, 60
      %v2990 = vpop.permute.xlu0 %2989
      %2991 = vrot.lane.b32.xlu0 %v2492, 60
      %v2992 = vpop.permute.xlu0 %2991
      %2993 = vrot.lane.b32.xlu0 %v2500, 60
      %v2994 = vpop.permute.xlu0 %2993
      %2995 = vrot.lane.b32.xlu0 %v2508, 60
      %v2996 = vpop.permute.xlu0 %2995
      %2997 = vrot.lane.b32.xlu0 %v2516, 60
      %v2998 = vpop.permute.xlu0 %2997
      %vm2999 = vcmp.lt.s32.totalorder %v391, 60
      %v3000 = vsel %vm2999, %v2984, %v2992
      %v3001 = vsel %vm2999, %v2986, %v2994
      %v3002 = vsel %vm2999, %v2988, %v2996
      %v3003 = vsel %vm2999, %v2990, %v2998
      %v3004 = vsel %vm2999, %v2976, %v2984
      %v3005 = vsel %vm2999, %v2978, %v2986
      %v3006 = vsel %vm2999, %v2980, %v2988
      %v3007 = vsel %vm2999, %v2982, %v2990
      %v3008 = vsel %vm2999, %v2968, %v2976
      %v3009 = vsel %vm2999, %v2970, %v2978
      %v3010 = vsel %vm2999, %v2972, %v2980
      %v3011 = vsel %vm2999, %v2974, %v2982
      %v3012 = vsel %vm2999, %v2960, %v2968
      %v3013 = vsel %vm2999, %v2962, %v2970
      %v3014 = vsel %vm2999, %v2964, %v2972
      %v3015 = vsel %vm2999, %v2966, %v2974
      %v3016 = vsel %vm2999, %v2952, %v2960
      %v3017 = vsel %vm2999, %v2954, %v2962
      %v3018 = vsel %vm2999, %v2956, %v2964
      %v3019 = vsel %vm2999, %v2958, %v2966
      %v3020 = vsel %vm2999, %v2944, %v2952
      %v3021 = vsel %vm2999, %v2946, %v2954
      %v3022 = vsel %vm2999, %v2948, %v2956
      %v3023 = vsel %vm2999, %v2950, %v2958
      %v3024 = vsel %vm2999, %v2936, %v2944
      %v3025 = vsel %vm2999, %v2938, %v2946
      %v3026 = vsel %vm2999, %v2940, %v2948
      %v3027 = vsel %vm2999, %v2942, %v2950
      %v3028 = vsel %vm2999, %v2992, %v2936
      %v3029 = vsel %vm2999, %v2994, %v2938
      %v3030 = vsel %vm2999, %v2996, %v2940
      %v3031 = vsel %vm2999, %v2998, %v2942
      %v3032 = vmul.f32 %v3028, %v2621
      %v3033 = vmul.f32 %v3024, %v2622
      %v3034 = vmul.f32 %v3020, %v2623
      %v3035 = vmul.f32 %v3016, %v2624
      %v3036 = vmul.f32 %v3012, %v2625
      %v3037 = vmul.f32 %v3008, %v2626
      %v3038 = vmul.f32 %v3004, %v2627
      %v3039 = vmul.f32 %v3000, %v2628
      %v3040 = vmul.f32 %v3029, %v2621
      %v3041 = vmul.f32 %v3025, %v2622
      %v3042 = vmul.f32 %v3021, %v2623
      %v3043 = vmul.f32 %v3017, %v2624
      %v3044 = vmul.f32 %v3013, %v2625
      %v3045 = vmul.f32 %v3009, %v2626
      %v3046 = vmul.f32 %v3005, %v2627
      %v3047 = vmul.f32 %v3001, %v2628
      %v3048 = vmul.f32 %v3030, %v2621
      %v3049 = vmul.f32 %v3026, %v2622
      %v3050 = vmul.f32 %v3022, %v2623
      %v3051 = vmul.f32 %v3018, %v2624
      %v3052 = vmul.f32 %v3014, %v2625
      %v3053 = vmul.f32 %v3010, %v2626
      %v3054 = vmul.f32 %v3006, %v2627
      %v3055 = vmul.f32 %v3002, %v2628
      %v3056 = vmul.f32 %v3031, %v2621
      %v3057 = vmul.f32 %v3027, %v2622
      %v3058 = vmul.f32 %v3023, %v2623
      %v3059 = vmul.f32 %v3019, %v2624
      %v3060 = vmul.f32 %v3015, %v2625
      %v3061 = vmul.f32 %v3011, %v2626
      %v3062 = vmul.f32 %v3007, %v2627
      %v3063 = vmul.f32 %v3003, %v2628
      %v3064 = vpack.c.bf16 %v3040, %v3032
      %v3065 = vpack.c.bf16 %v3041, %v3033
      %v3066 = vpack.c.bf16 %v3042, %v3034
      %v3067 = vpack.c.bf16 %v3043, %v3035
      %v3068 = vpack.c.bf16 %v3044, %v3036
      %v3069 = vpack.c.bf16 %v3045, %v3037
      %v3070 = vpack.c.bf16 %v3046, %v3038
      %v3071 = vpack.c.bf16 %v3047, %v3039
      %v3072 = vpack.c.bf16 %v3056, %v3048
      %v3073 = vpack.c.bf16 %v3057, %v3049
      %v3074 = vpack.c.bf16 %v3058, %v3050
      %v3075 = vpack.c.bf16 %v3059, %v3051
      %v3076 = vpack.c.bf16 %v3060, %v3052
      %v3077 = vpack.c.bf16 %v3061, %v3053
      %v3078 = vpack.c.bf16 %v3062, %v3054
      %v3079 = vpack.c.bf16 %v3063, %v3055
      %3080 = vrot.lane.b32.xlu0 %v2485, 4
      %v3081 = vpop.permute.xlu0 %3080
      %3082 = vrot.lane.b32.xlu0 %v2493, 4
      %v3083 = vpop.permute.xlu0 %3082
      %3084 = vrot.lane.b32.xlu0 %v2501, 4
      %v3085 = vpop.permute.xlu0 %3084
      %3086 = vrot.lane.b32.xlu0 %v2509, 4
      %v3087 = vpop.permute.xlu0 %3086
      %3088 = vrot.lane.b32.xlu0 %v2486, 4
      %v3089 = vpop.permute.xlu0 %3088
      %3090 = vrot.lane.b32.xlu0 %v2494, 4
      %v3091 = vpop.permute.xlu0 %3090
      %3092 = vrot.lane.b32.xlu0 %v2502, 4
      %v3093 = vpop.permute.xlu0 %3092
      %3094 = vrot.lane.b32.xlu0 %v2510, 4
      %v3095 = vpop.permute.xlu0 %3094
      %3096 = vrot.lane.b32.xlu0 %v2487, 4
      %v3097 = vpop.permute.xlu0 %3096
      %3098 = vrot.lane.b32.xlu0 %v2495, 4
      %v3099 = vpop.permute.xlu0 %3098
      %3100 = vrot.lane.b32.xlu0 %v2503, 4
      %v3101 = vpop.permute.xlu0 %3100
      %3102 = vrot.lane.b32.xlu0 %v2511, 4
      %v3103 = vpop.permute.xlu0 %3102
      %3104 = vrot.lane.b32.xlu0 %v2488, 4
      %v3105 = vpop.permute.xlu0 %3104
      %3106 = vrot.lane.b32.xlu0 %v2496, 4
      %v3107 = vpop.permute.xlu0 %3106
      %3108 = vrot.lane.b32.xlu0 %v2504, 4
      %v3109 = vpop.permute.xlu0 %3108
      %3110 = vrot.lane.b32.xlu0 %v2512, 4
      %v3111 = vpop.permute.xlu0 %3110
      %3112 = vrot.lane.b32.xlu0 %v2489, 4
      %v3113 = vpop.permute.xlu0 %3112
      %3114 = vrot.lane.b32.xlu0 %v2497, 4
      %v3115 = vpop.permute.xlu0 %3114
      %3116 = vrot.lane.b32.xlu0 %v2505, 4
      %v3117 = vpop.permute.xlu0 %3116
      %3118 = vrot.lane.b32.xlu0 %v2513, 4
      %v3119 = vpop.permute.xlu0 %3118
      %3120 = vrot.lane.b32.xlu0 %v2490, 4
      %v3121 = vpop.permute.xlu0 %3120
      %3122 = vrot.lane.b32.xlu0 %v2498, 4
      %v3123 = vpop.permute.xlu0 %3122
      %3124 = vrot.lane.b32.xlu0 %v2506, 4
      %v3125 = vpop.permute.xlu0 %3124
      %3126 = vrot.lane.b32.xlu0 %v2514, 4
      %v3127 = vpop.permute.xlu0 %3126
      %3128 = vrot.lane.b32.xlu0 %v2491, 4
      %v3129 = vpop.permute.xlu0 %3128
      %3130 = vrot.lane.b32.xlu0 %v2499, 4
      %v3131 = vpop.permute.xlu0 %3130
      %3132 = vrot.lane.b32.xlu0 %v2507, 4
      %v3133 = vpop.permute.xlu0 %3132
      %3134 = vrot.lane.b32.xlu0 %v2515, 4
      %v3135 = vpop.permute.xlu0 %3134
      %3136 = vrot.lane.b32.xlu0 %v2492, 4
      %v3137 = vpop.permute.xlu0 %3136
      %3138 = vrot.lane.b32.xlu0 %v2500, 4
      %v3139 = vpop.permute.xlu0 %3138
      %3140 = vrot.lane.b32.xlu0 %v2508, 4
      %v3141 = vpop.permute.xlu0 %3140
      %3142 = vrot.lane.b32.xlu0 %v2516, 4
      %v3143 = vpop.permute.xlu0 %3142
      %vm3144 = vcmp.lt.s32.totalorder %v391, 4
      %v3145 = vsel %vm3144, %v3129, %v3137
      %v3146 = vsel %vm3144, %v3131, %v3139
      %v3147 = vsel %vm3144, %v3133, %v3141
      %v3148 = vsel %vm3144, %v3135, %v3143
      %v3149 = vsel %vm3144, %v3121, %v3129
      %v3150 = vsel %vm3144, %v3123, %v3131
      %v3151 = vsel %vm3144, %v3125, %v3133
      %v3152 = vsel %vm3144, %v3127, %v3135
      %v3153 = vsel %vm3144, %v3113, %v3121
      %v3154 = vsel %vm3144, %v3115, %v3123
      %v3155 = vsel %vm3144, %v3117, %v3125
      %v3156 = vsel %vm3144, %v3119, %v3127
      %v3157 = vsel %vm3144, %v3105, %v3113
      %v3158 = vsel %vm3144, %v3107, %v3115
      %v3159 = vsel %vm3144, %v3109, %v3117
      %v3160 = vsel %vm3144, %v3111, %v3119
      %v3161 = vsel %vm3144, %v3097, %v3105
      %v3162 = vsel %vm3144, %v3099, %v3107
      %v3163 = vsel %vm3144, %v3101, %v3109
      %v3164 = vsel %vm3144, %v3103, %v3111
      %v3165 = vsel %vm3144, %v3089, %v3097
      %v3166 = vsel %vm3144, %v3091, %v3099
      %v3167 = vsel %vm3144, %v3093, %v3101
      %v3168 = vsel %vm3144, %v3095, %v3103
      %v3169 = vsel %vm3144, %v3081, %v3089
      %v3170 = vsel %vm3144, %v3083, %v3091
      %v3171 = vsel %vm3144, %v3085, %v3093
      %v3172 = vsel %vm3144, %v3087, %v3095
      %v3173 = vsel %vm3144, %v3137, %v3081
      %v3174 = vsel %vm3144, %v3139, %v3083
      %v3175 = vsel %vm3144, %v3141, %v3085
      %v3176 = vsel %vm3144, %v3143, %v3087
      %v3177 = vmul.f32 %v3173, %v2533
      %v3178 = vmul.f32 %v3169, %v2534
      %v3179 = vmul.f32 %v3165, %v2535
      %v3180 = vmul.f32 %v3161, %v2536
      %v3181 = vmul.f32 %v3157, %v2537
      %v3182 = vmul.f32 %v3153, %v2538
      %v3183 = vmul.f32 %v3149, %v2539
      %v3184 = vmul.f32 %v3145, %v2540
      %v3185 = vmul.f32 %v3174, %v2533
      %v3186 = vmul.f32 %v3170, %v2534
      %v3187 = vmul.f32 %v3166, %v2535
      %v3188 = vmul.f32 %v3162, %v2536
      %v3189 = vmul.f32 %v3158, %v2537
      %v3190 = vmul.f32 %v3154, %v2538
      %v3191 = vmul.f32 %v3150, %v2539
      %v3192 = vmul.f32 %v3146, %v2540
      %v3193 = vmul.f32 %v3175, %v2533
      %v3194 = vmul.f32 %v3171, %v2534
      %v3195 = vmul.f32 %v3167, %v2535
      %v3196 = vmul.f32 %v3163, %v2536
      %v3197 = vmul.f32 %v3159, %v2537
      %v3198 = vmul.f32 %v3155, %v2538
      %v3199 = vmul.f32 %v3151, %v2539
      %v3200 = vmul.f32 %v3147, %v2540
      %v3201 = vmul.f32 %v3176, %v2533
      %v3202 = vmul.f32 %v3172, %v2534
      %v3203 = vmul.f32 %v3168, %v2535
      %v3204 = vmul.f32 %v3164, %v2536
      %v3205 = vmul.f32 %v3160, %v2537
      %v3206 = vmul.f32 %v3156, %v2538
      %v3207 = vmul.f32 %v3152, %v2539
      %v3208 = vmul.f32 %v3148, %v2540
      %v3209 = vpack.c.bf16 %v3185, %v3177
      %v3210 = vpack.c.bf16 %v3186, %v3178
      %v3211 = vpack.c.bf16 %v3187, %v3179
      %v3212 = vpack.c.bf16 %v3188, %v3180
      %v3213 = vpack.c.bf16 %v3189, %v3181
      %v3214 = vpack.c.bf16 %v3190, %v3182
      %v3215 = vpack.c.bf16 %v3191, %v3183
      %v3216 = vpack.c.bf16 %v3192, %v3184
      %v3217 = vpack.c.bf16 %v3201, %v3193
      %v3218 = vpack.c.bf16 %v3202, %v3194
      %v3219 = vpack.c.bf16 %v3203, %v3195
      %v3220 = vpack.c.bf16 %v3204, %v3196
      %v3221 = vpack.c.bf16 %v3205, %v3197
      %v3222 = vpack.c.bf16 %v3206, %v3198
      %v3223 = vpack.c.bf16 %v3207, %v3199
      %v3224 = vpack.c.bf16 %v3208, %v3200
      %v3225 = vpack.c.bf16 %v2493, %v2485
      %v3226 = vpack.c.bf16 %v2494, %v2486
      %v3227 = vpack.c.bf16 %v2495, %v2487
      %v3228 = vpack.c.bf16 %v2496, %v2488
      %v3229 = vpack.c.bf16 %v2497, %v2489
      %v3230 = vpack.c.bf16 %v2498, %v2490
      %v3231 = vpack.c.bf16 %v2499, %v2491
      %v3232 = vpack.c.bf16 %v2500, %v2492
      %v3233 = vpack.c.bf16 %v2509, %v2501
      %v3234 = vpack.c.bf16 %v2510, %v2502
      %v3235 = vpack.c.bf16 %v2511, %v2503
      %v3236 = vpack.c.bf16 %v2512, %v2504
      %v3237 = vpack.c.bf16 %v2513, %v2505
      %v3238 = vpack.c.bf16 %v2514, %v2506
      %v3239 = vpack.c.bf16 %v2515, %v2507
      %v3240 = vpack.c.bf16 %v2516, %v2508
      %3241 = vrot.lane.b32.xlu0 %v2485, 124
      %v3242 = vpop.permute.xlu0 %3241
      %3243 = vrot.lane.b32.xlu0 %v2493, 124
      %v3244 = vpop.permute.xlu0 %3243
      %3245 = vrot.lane.b32.xlu0 %v2501, 124
      %v3246 = vpop.permute.xlu0 %3245
      %3247 = vrot.lane.b32.xlu0 %v2509, 124
      %v3248 = vpop.permute.xlu0 %3247
      %3249 = vrot.lane.b32.xlu0 %v2486, 124
      %v3250 = vpop.permute.xlu0 %3249
      %3251 = vrot.lane.b32.xlu0 %v2494, 124
      %v3252 = vpop.permute.xlu0 %3251
      %3253 = vrot.lane.b32.xlu0 %v2502, 124
      %v3254 = vpop.permute.xlu0 %3253
      %3255 = vrot.lane.b32.xlu0 %v2510, 124
      %v3256 = vpop.permute.xlu0 %3255
      %3257 = vrot.lane.b32.xlu0 %v2487, 124
      %v3258 = vpop.permute.xlu0 %3257
      %3259 = vrot.lane.b32.xlu0 %v2495, 124
      %v3260 = vpop.permute.xlu0 %3259
      %3261 = vrot.lane.b32.xlu0 %v2503, 124
      %v3262 = vpop.permute.xlu0 %3261
      %3263 = vrot.lane.b32.xlu0 %v2511, 124
      %v3264 = vpop.permute.xlu0 %3263
      %3265 = vrot.lane.b32.xlu0 %v2488, 124
      %v3266 = vpop.permute.xlu0 %3265
      %3267 = vrot.lane.b32.xlu0 %v2496, 124
      %v3268 = vpop.permute.xlu0 %3267
      %3269 = vrot.lane.b32.xlu0 %v2504, 124
      %v3270 = vpop.permute.xlu0 %3269
      %3271 = vrot.lane.b32.xlu0 %v2512, 124
      %v3272 = vpop.permute.xlu0 %3271
      %3273 = vrot.lane.b32.xlu0 %v2489, 124
      %v3274 = vpop.permute.xlu0 %3273
      %3275 = vrot.lane.b32.xlu0 %v2497, 124
      %v3276 = vpop.permute.xlu0 %3275
      %3277 = vrot.lane.b32.xlu0 %v2505, 124
      %v3278 = vpop.permute.xlu0 %3277
      %3279 = vrot.lane.b32.xlu0 %v2513, 124
      %v3280 = vpop.permute.xlu0 %3279
      %3281 = vrot.lane.b32.xlu0 %v2490, 124
      %v3282 = vpop.permute.xlu0 %3281
      %3283 = vrot.lane.b32.xlu0 %v2498, 124
      %v3284 = vpop.permute.xlu0 %3283
      %3285 = vrot.lane.b32.xlu0 %v2506, 124
      %v3286 = vpop.permute.xlu0 %3285
      %3287 = vrot.lane.b32.xlu0 %v2514, 124
      %v3288 = vpop.permute.xlu0 %3287
      %3289 = vrot.lane.b32.xlu0 %v2491, 124
      %v3290 = vpop.permute.xlu0 %3289
      %3291 = vrot.lane.b32.xlu0 %v2499, 124
      %v3292 = vpop.permute.xlu0 %3291
      %3293 = vrot.lane.b32.xlu0 %v2507, 124
      %v3294 = vpop.permute.xlu0 %3293
      %3295 = vrot.lane.b32.xlu0 %v2515, 124
      %v3296 = vpop.permute.xlu0 %3295
      %3297 = vrot.lane.b32.xlu0 %v2492, 124
      %v3298 = vpop.permute.xlu0 %3297
      %3299 = vrot.lane.b32.xlu0 %v2500, 124
      %v3300 = vpop.permute.xlu0 %3299
      %3301 = vrot.lane.b32.xlu0 %v2508, 124
      %v3302 = vpop.permute.xlu0 %3301
      %3303 = vrot.lane.b32.xlu0 %v2516, 124
      %v3304 = vpop.permute.xlu0 %3303
      %vm3305 = vcmp.lt.s32.totalorder %v391, 124
      %v3306 = vsel %vm3305, %v3290, %v3298
      %v3307 = vsel %vm3305, %v3292, %v3300
      %v3308 = vsel %vm3305, %v3294, %v3302
      %v3309 = vsel %vm3305, %v3296, %v3304
      %v3310 = vsel %vm3305, %v3282, %v3290
      %v3311 = vsel %vm3305, %v3284, %v3292
      %v3312 = vsel %vm3305, %v3286, %v3294
      %v3313 = vsel %vm3305, %v3288, %v3296
      %v3314 = vsel %vm3305, %v3274, %v3282
      %v3315 = vsel %vm3305, %v3276, %v3284
      %v3316 = vsel %vm3305, %v3278, %v3286
      %v3317 = vsel %vm3305, %v3280, %v3288
      %v3318 = vsel %vm3305, %v3266, %v3274
      %v3319 = vsel %vm3305, %v3268, %v3276
      %v3320 = vsel %vm3305, %v3270, %v3278
      %v3321 = vsel %vm3305, %v3272, %v3280
      %v3322 = vsel %vm3305, %v3258, %v3266
      %v3323 = vsel %vm3305, %v3260, %v3268
      %v3324 = vsel %vm3305, %v3262, %v3270
      %v3325 = vsel %vm3305, %v3264, %v3272
      %v3326 = vsel %vm3305, %v3250, %v3258
      %v3327 = vsel %vm3305, %v3252, %v3260
      %v3328 = vsel %vm3305, %v3254, %v3262
      %v3329 = vsel %vm3305, %v3256, %v3264
      %v3330 = vsel %vm3305, %v3242, %v3250
      %v3331 = vsel %vm3305, %v3244, %v3252
      %v3332 = vsel %vm3305, %v3246, %v3254
      %v3333 = vsel %vm3305, %v3248, %v3256
      %v3334 = vsel %vm3305, %v3298, %v3242
      %v3335 = vsel %vm3305, %v3300, %v3244
      %v3336 = vsel %vm3305, %v3302, %v3246
      %v3337 = vsel %vm3305, %v3304, %v3248
      %v3338 = vmul.f32 %v3330, %v2557
      %v3339 = vmul.f32 %v3326, %v2558
      %v3340 = vmul.f32 %v3322, %v2559
      %v3341 = vmul.f32 %v3318, %v2560
      %v3342 = vmul.f32 %v3314, %v2561
      %v3343 = vmul.f32 %v3310, %v2562
      %v3344 = vmul.f32 %v3306, %v2563
      %v3345 = vmul.f32 %v3334, %v2564
      %v3346 = vmul.f32 %v3331, %v2557
      %v3347 = vmul.f32 %v3327, %v2558
      %v3348 = vmul.f32 %v3323, %v2559
      %v3349 = vmul.f32 %v3319, %v2560
      %v3350 = vmul.f32 %v3315, %v2561
      %v3351 = vmul.f32 %v3311, %v2562
      %v3352 = vmul.f32 %v3307, %v2563
      %v3353 = vmul.f32 %v3335, %v2564
      %v3354 = vmul.f32 %v3332, %v2557
      %v3355 = vmul.f32 %v3328, %v2558
      %v3356 = vmul.f32 %v3324, %v2559
      %v3357 = vmul.f32 %v3320, %v2560
      %v3358 = vmul.f32 %v3316, %v2561
      %v3359 = vmul.f32 %v3312, %v2562
      %v3360 = vmul.f32 %v3308, %v2563
      %v3361 = vmul.f32 %v3336, %v2564
      %v3362 = vmul.f32 %v3333, %v2557
      %v3363 = vmul.f32 %v3329, %v2558
      %v3364 = vmul.f32 %v3325, %v2559
      %v3365 = vmul.f32 %v3321, %v2560
      %v3366 = vmul.f32 %v3317, %v2561
      %v3367 = vmul.f32 %v3313, %v2562
      %v3368 = vmul.f32 %v3309, %v2563
      %v3369 = vmul.f32 %v3337, %v2564
      %v3370 = vpack.c.bf16 %v3346, %v3338
      %v3371 = vpack.c.bf16 %v3347, %v3339
      %v3372 = vpack.c.bf16 %v3348, %v3340
      %v3373 = vpack.c.bf16 %v3349, %v3341
      %v3374 = vpack.c.bf16 %v3350, %v3342
      %v3375 = vpack.c.bf16 %v3351, %v3343
      %v3376 = vpack.c.bf16 %v3352, %v3344
      %v3377 = vpack.c.bf16 %v3353, %v3345
      %v3378 = vpack.c.bf16 %v3362, %v3354
      %v3379 = vpack.c.bf16 %v3363, %v3355
      %v3380 = vpack.c.bf16 %v3364, %v3356
      %v3381 = vpack.c.bf16 %v3365, %v3357
      %v3382 = vpack.c.bf16 %v3366, %v3358
      %v3383 = vpack.c.bf16 %v3367, %v3359
      %v3384 = vpack.c.bf16 %v3368, %v3360
      %v3385 = vpack.c.bf16 %v3369, %v3361
      %v3386 = vmul.f32 %v2734, %v2629
      %v3387 = vmul.f32 %v2730, %v2630
      %v3388 = vmul.f32 %v2726, %v2631
      %v3389 = vmul.f32 %v2722, %v2632
      %v3390 = vmul.f32 %v2718, %v2633
      %v3391 = vmul.f32 %v2714, %v2634
      %v3392 = vmul.f32 %v2710, %v2635
      %v3393 = vmul.f32 %v2738, %v2636
      %v3394 = vmul.f32 %v2735, %v2629
      %v3395 = vmul.f32 %v2731, %v2630
      %v3396 = vmul.f32 %v2727, %v2631
      %v3397 = vmul.f32 %v2723, %v2632
      %v3398 = vmul.f32 %v2719, %v2633
      %v3399 = vmul.f32 %v2715, %v2634
      %v3400 = vmul.f32 %v2711, %v2635
      %v3401 = vmul.f32 %v2739, %v2636
      %v3402 = vmul.f32 %v2736, %v2629
      %v3403 = vmul.f32 %v2732, %v2630
      %v3404 = vmul.f32 %v2728, %v2631
      %v3405 = vmul.f32 %v2724, %v2632
      %v3406 = vmul.f32 %v2720, %v2633
      %v3407 = vmul.f32 %v2716, %v2634
      %v3408 = vmul.f32 %v2712, %v2635
      %v3409 = vmul.f32 %v2740, %v2636
      %v3410 = vmul.f32 %v2737, %v2629
      %v3411 = vmul.f32 %v2733, %v2630
      %v3412 = vmul.f32 %v2729, %v2631
      %v3413 = vmul.f32 %v2725, %v2632
      %v3414 = vmul.f32 %v2721, %v2633
      %v3415 = vmul.f32 %v2717, %v2634
      %v3416 = vmul.f32 %v2713, %v2635
      %v3417 = vmul.f32 %v2741, %v2636
      %v3418 = vpack.c.bf16 %v3394, %v3386
      %v3419 = vpack.c.bf16 %v3395, %v3387
      %v3420 = vpack.c.bf16 %v3396, %v3388
      %v3421 = vpack.c.bf16 %v3397, %v3389
      %v3422 = vpack.c.bf16 %v3398, %v3390
      %v3423 = vpack.c.bf16 %v3399, %v3391
      %v3424 = vpack.c.bf16 %v3400, %v3392
      %v3425 = vpack.c.bf16 %v3401, %v3393
      %v3426 = vpack.c.bf16 %v3410, %v3402
      %v3427 = vpack.c.bf16 %v3411, %v3403
      %v3428 = vpack.c.bf16 %v3412, %v3404
      %v3429 = vpack.c.bf16 %v3413, %v3405
      %v3430 = vpack.c.bf16 %v3414, %v3406
      %v3431 = vpack.c.bf16 %v3415, %v3407
      %v3432 = vpack.c.bf16 %v3416, %v3408
      %v3433 = vpack.c.bf16 %v3417, %v3409
      %v3434 = vmul.f32 %v2879, %v2605
      %v3435 = vmul.f32 %v2875, %v2606
      %v3436 = vmul.f32 %v2871, %v2607
      %v3437 = vmul.f32 %v2867, %v2608
      %v3438 = vmul.f32 %v2863, %v2609
      %v3439 = vmul.f32 %v2859, %v2610
      %v3440 = vmul.f32 %v2855, %v2611
      %v3441 = vmul.f32 %v2883, %v2612
      %v3442 = vmul.f32 %v2880, %v2605
      %v3443 = vmul.f32 %v2876, %v2606
      %v3444 = vmul.f32 %v2872, %v2607
      %v3445 = vmul.f32 %v2868, %v2608
      %v3446 = vmul.f32 %v2864, %v2609
      %v3447 = vmul.f32 %v2860, %v2610
      %v3448 = vmul.f32 %v2856, %v2611
      %v3449 = vmul.f32 %v2884, %v2612
      %v3450 = vmul.f32 %v2881, %v2605
      %v3451 = vmul.f32 %v2877, %v2606
      %v3452 = vmul.f32 %v2873, %v2607
      %v3453 = vmul.f32 %v2869, %v2608
      %v3454 = vmul.f32 %v2865, %v2609
      %v3455 = vmul.f32 %v2861, %v2610
      %v3456 = vmul.f32 %v2857, %v2611
      %v3457 = vmul.f32 %v2885, %v2612
      %v3458 = vmul.f32 %v2882, %v2605
      %v3459 = vmul.f32 %v2878, %v2606
      %v3460 = vmul.f32 %v2874, %v2607
      %v3461 = vmul.f32 %v2870, %v2608
      %v3462 = vmul.f32 %v2866, %v2609
      %v3463 = vmul.f32 %v2862, %v2610
      %v3464 = vmul.f32 %v2858, %v2611
      %v3465 = vmul.f32 %v2886, %v2612
      %v3466 = vpack.c.bf16 %v3442, %v3434
      %v3467 = vpack.c.bf16 %v3443, %v3435
      %v3468 = vpack.c.bf16 %v3444, %v3436
      %v3469 = vpack.c.bf16 %v3445, %v3437
      %v3470 = vpack.c.bf16 %v3446, %v3438
      %v3471 = vpack.c.bf16 %v3447, %v3439
      %v3472 = vpack.c.bf16 %v3448, %v3440
      %v3473 = vpack.c.bf16 %v3449, %v3441
      %v3474 = vpack.c.bf16 %v3458, %v3450
      %v3475 = vpack.c.bf16 %v3459, %v3451
      %v3476 = vpack.c.bf16 %v3460, %v3452
      %v3477 = vpack.c.bf16 %v3461, %v3453
      %v3478 = vpack.c.bf16 %v3462, %v3454
      %v3479 = vpack.c.bf16 %v3463, %v3455
      %v3480 = vpack.c.bf16 %v3464, %v3456
      %v3481 = vpack.c.bf16 %v3465, %v3457
      %v3482 = vmul.f32 %v3024, %v2637
      %v3483 = vmul.f32 %v3020, %v2638
      %v3484 = vmul.f32 %v3016, %v2639
      %v3485 = vmul.f32 %v3012, %v2640
      %v3486 = vmul.f32 %v3008, %v2641
      %v3487 = vmul.f32 %v3004, %v2642
      %v3488 = vmul.f32 %v3000, %v2643
      %v3489 = vmul.f32 %v3028, %v2644
      %v3490 = vmul.f32 %v3025, %v2637
      %v3491 = vmul.f32 %v3021, %v2638
      %v3492 = vmul.f32 %v3017, %v2639
      %v3493 = vmul.f32 %v3013, %v2640
      %v3494 = vmul.f32 %v3009, %v2641
      %v3495 = vmul.f32 %v3005, %v2642
      %v3496 = vmul.f32 %v3001, %v2643
      %v3497 = vmul.f32 %v3029, %v2644
      %v3498 = vmul.f32 %v3026, %v2637
      %v3499 = vmul.f32 %v3022, %v2638
      %v3500 = vmul.f32 %v3018, %v2639
      %v3501 = vmul.f32 %v3014, %v2640
      %v3502 = vmul.f32 %v3010, %v2641
      %v3503 = vmul.f32 %v3006, %v2642
      %v3504 = vmul.f32 %v3002, %v2643
      %v3505 = vmul.f32 %v3030, %v2644
      %v3506 = vmul.f32 %v3027, %v2637
      %v3507 = vmul.f32 %v3023, %v2638
      %v3508 = vmul.f32 %v3019, %v2639
      %v3509 = vmul.f32 %v3015, %v2640
      %v3510 = vmul.f32 %v3011, %v2641
      %v3511 = vmul.f32 %v3007, %v2642
      %v3512 = vmul.f32 %v3003, %v2643
      %v3513 = vmul.f32 %v3031, %v2644
      %v3514 = vpack.c.bf16 %v3490, %v3482
      %v3515 = vpack.c.bf16 %v3491, %v3483
      %v3516 = vpack.c.bf16 %v3492, %v3484
      %v3517 = vpack.c.bf16 %v3493, %v3485
      %v3518 = vpack.c.bf16 %v3494, %v3486
      %v3519 = vpack.c.bf16 %v3495, %v3487
      %v3520 = vpack.c.bf16 %v3496, %v3488
      %v3521 = vpack.c.bf16 %v3497, %v3489
      %v3522 = vpack.c.bf16 %v3506, %v3498
      %v3523 = vpack.c.bf16 %v3507, %v3499
      %v3524 = vpack.c.bf16 %v3508, %v3500
      %v3525 = vpack.c.bf16 %v3509, %v3501
      %v3526 = vpack.c.bf16 %v3510, %v3502
      %v3527 = vpack.c.bf16 %v3511, %v3503
      %v3528 = vpack.c.bf16 %v3512, %v3504
      %v3529 = vpack.c.bf16 %v3513, %v3505
      %v3530 = vld [vmem:[%s5] sm:$0xff]
      %v3531 = vld [vmem:[%s5 + $0x8] sm:$0xf]
      %v3532 = vld [vmem:[%s5 + $0xc] sm:$0xff]
      %v3533 = vld [vmem:[%s5 + $0x14] sm:$0xf]
      %v3534 = vld [vmem:[%s5 + $0x18] sm:$0xff]
      %v3535 = vld [vmem:[%s5 + $0x20] sm:$0xf]
      %v3536 = vld [vmem:[%s5 + $0x24] sm:$0xff]
      %v3537 = vld [vmem:[%s5 + $0x2c] sm:$0xf]
      %v3538 = vld [vmem:[%s5 + $0x30] sm:$0xff]
      %v3539 = vld [vmem:[%s5 + $0x38] sm:$0xf]
      %v3540 = vld [vmem:[%s5 + $0x3c] sm:$0xff]
      %v3541 = vld [vmem:[%s5 + $0x44] sm:$0xf]
      %v3542 = vld [vmem:[%s5 + $0x48] sm:$0xff]
      %v3543 = vld [vmem:[%s5 + $0x50] sm:$0xf]
      %v3544 = vld [vmem:[%s5 + $0x54] sm:$0xff]
      %v3545 = vld [vmem:[%s5 + $0x5c] sm:$0xf]
      %v3546 = vld [vmem:[%s6] sm:$0xff]
      %v3547 = vld [vmem:[%s6 + $0x8] sm:$0xff]
      %v3548 = vld [vmem:[%s6 + $0x10] sm:$0xff]
      %v3549 = vld [vmem:[%s6 + $0x18] sm:$0xff]
      %v3550 = vld [vmem:[%s6 + $0x20] sm:$0xff]
      %v3551 = vld [vmem:[%s6 + $0x28] sm:$0xff]
      %v3552 = vld [vmem:[%s6 + $0x30] sm:$0xff]
      %v3553 = vld [vmem:[%s6 + $0x38] sm:$0xff]
      %3555 = vset.pattern.permute.xlu0 0
      %3556 = vperm.xlu0 %3555, %v3546
      %v3557 = vpop.permute.xlu0 %3556
      %3560 = vset.pattern.permute.xlu0 0
      %3561 = vperm.xlu0 %3560, %v3547
      %v3562 = vpop.permute.xlu0 %3561
      %3565 = vset.pattern.permute.xlu0 0
      %3566 = vperm.xlu0 %3565, %v3548
      %v3567 = vpop.permute.xlu0 %3566
      %3570 = vset.pattern.permute.xlu0 0
      %3571 = vperm.xlu0 %3570, %v3549
      %v3572 = vpop.permute.xlu0 %3571
      %3575 = vset.pattern.permute.xlu0 0
      %3576 = vperm.xlu0 %3575, %v3550
      %v3577 = vpop.permute.xlu0 %3576
      %3580 = vset.pattern.permute.xlu0 0
      %3581 = vperm.xlu0 %3580, %v3551
      %v3582 = vpop.permute.xlu0 %3581
      %3585 = vset.pattern.permute.xlu0 0
      %3586 = vperm.xlu0 %3585, %v3552
      %v3587 = vpop.permute.xlu0 %3586
      %3590 = vset.pattern.permute.xlu0 0
      %3591 = vperm.xlu0 %3590, %v3553
      %v3592 = vpop.permute.xlu0 %3591
      %v3610 = vunpack.c.l.b16 %v3530
      %v3611 = vunpack.c.h.b16 %v3530
      %v3612 = vunpack.c.l.b16 %v3531
      %v3613 = vunpack.c.l.b16 %v3532
      %v3614 = vunpack.c.h.b16 %v3532
      %v3615 = vunpack.c.l.b16 %v3533
      %v3616 = vunpack.c.l.b16 %v3534
      %v3617 = vunpack.c.h.b16 %v3534
      %v3618 = vunpack.c.l.b16 %v3535
      %v3619 = vunpack.c.l.b16 %v3536
      %v3620 = vunpack.c.h.b16 %v3536
      %v3621 = vunpack.c.l.b16 %v3537
      %v3622 = vunpack.c.l.b16 %v3538
      %v3623 = vunpack.c.h.b16 %v3538
      %v3624 = vunpack.c.l.b16 %v3539
      %v3625 = vunpack.c.l.b16 %v3540
      %v3626 = vunpack.c.h.b16 %v3540
      %v3627 = vunpack.c.l.b16 %v3541
      %v3628 = vunpack.c.l.b16 %v3542
      %v3629 = vunpack.c.h.b16 %v3542
      %v3630 = vunpack.c.l.b16 %v3543
      %v3631 = vunpack.c.l.b16 %v3544
      %v3632 = vunpack.c.h.b16 %v3544
      %v3633 = vunpack.c.l.b16 %v3545
      %v3634 = vpack.c.b16 %v3613, %v3610
      %v3635 = vpack.c.b16 %v3614, %v3611
      %v3636 = vpack.c.b16 %v3615, %v3612
      %v3637 = vpack.c.b16 %v3619, %v3616
      %v3638 = vpack.c.b16 %v3620, %v3617
      %v3639 = vpack.c.b16 %v3621, %v3618
      %v3640 = vpack.c.b16 %v3625, %v3622
      %v3641 = vpack.c.b16 %v3626, %v3623
      %v3642 = vpack.c.b16 %v3627, %v3624
      %v3643 = vpack.c.b16 %v3631, %v3628
      %v3644 = vpack.c.b16 %v3632, %v3629
      %v3645 = vpack.c.b16 %v3633, %v3630
      %vm3654 = vcmask 261120
      %v3656 = vsel %vm3654, %v3636, 0
      %v3659 = vsel %vm3654, %v3639, 0
      %v3662 = vsel %vm3654, %v3642, 0
      %v3665 = vsel %vm3654, %v3645, 0
      %3667 = vmatprep.subr.bf16.mxu0 %v3218
      %3668 = vmatpush1.bf16.msra.mxu0 %v3217
      %3669 = vmatprep.subr.bf16.mxu0 %v3210
      %3670 = vmatpush1.bf16.msra.mxu0 %v3209
      %3671 = vmatprep.subr.bf16.mxu0 %v3073
      %3672 = vmatpush1.bf16.msra.mxu0 %v3072
      %3673 = vmatprep.subr.bf16.mxu0 %v3065
      %3674 = vmatpush1.bf16.msra.mxu0 %v3064
      %3675 = vmatprep.subr.bf16.mxu0 %v2928
      %3676 = vmatpush1.bf16.msra.mxu0 %v2927
      %3677 = vmatprep.subr.bf16.mxu0 %v2920
      %3678 = vmatpush1.bf16.msra.mxu0 %v2919
      %3679 = vmatprep.subr.bf16.mxu0 %v2783
      %3680 = vmatpush1.bf16.msra.mxu0 %v2782
      %3681 = vmatprep.subr.bf16.mxu0 %v2775
      %3682 = vmatpush1.bf16.msra.mxu0 %v2774
      %3683 = vmatprep.subr.bf16.mxu0 %v3475
      %3684 = vmatpush2.bf16.msra.mxu0 %v3474
      %3685 = vmatprep.subr.bf16.mxu0 %v3467
      %3686 = vmatpush2.bf16.msra.mxu0 %v3466
      %3687 = vmatprep.subr.bf16.mxu0 %v3427
      %3688 = vmatpush2.bf16.msra.mxu0 %v3426
      %3689 = vmatprep.subr.bf16.mxu0 %v3419
      %3690 = vmatpush2.bf16.msra.mxu0 %v3418
      %3691 = vmatprep.subr.bf16.mxu0 %v3379
      %3692 = vmatpush2.bf16.msra.mxu0 %v3378
      %3693 = vmatprep.subr.bf16.mxu0 %v3371
      %3694 = vmatpush2.bf16.msra.mxu0 %v3370
      %3695 = vmatprep.subr.bf16.mxu0 %v3234
      %3696 = vmatpush2.bf16.msra.mxu0 %v3233
      %3697 = vmatprep.subr.bf16.mxu0 %v3226
      %3698 = vmatpush2.bf16.msra.mxu0 %v3225
      %3699 = vmatprep.mubr.bf16.mxu0 %v3635
      %3700 = vmatmul.mubr.bf16.gmra.mxu0 %v3634
      %v3701 = vpop.f32.mrf.mxu0
      %v3702 = vadd.f32 %v3557, %v3701
      %v3703 = vpop.f32.mrf.mxu0
      %v3704 = vadd.f32 %v3557, %v3703
      %v3705 = vpop.f32.mrf.mxu0
      %v3706 = vadd.f32 %v3562, %v3705
      %v3707 = vpop.f32.mrf.mxu0
      %v3708 = vadd.f32 %v3562, %v3707
      %3709 = vmatprep.mubr.bf16.mxu0 %v3638
      %3710 = vmatmul.mubr.bf16.gmra.mxu0 %v3637
      %v3711 = vpop.f32.mrf.mxu0
      %v3712 = vadd.f32 %v3567, %v3711
      %v3713 = vpop.f32.mrf.mxu0
      %v3714 = vadd.f32 %v3567, %v3713
      %v3715 = vpop.f32.mrf.mxu0
      %v3716 = vadd.f32 %v3572, %v3715
      %v3717 = vpop.f32.mrf.mxu0
      %v3718 = vadd.f32 %v3572, %v3717
      %3719 = vmatprep.mubr.bf16.mxu0 %v3641
      %3720 = vmatmul.mubr.bf16.gmra.mxu0 %v3640
      %v3721 = vpop.f32.mrf.mxu0
      %v3722 = vadd.f32 %v3577, %v3721
      %v3723 = vpop.f32.mrf.mxu0
      %v3724 = vadd.f32 %v3577, %v3723
      %v3725 = vpop.f32.mrf.mxu0
      %v3726 = vadd.f32 %v3582, %v3725
      %v3727 = vpop.f32.mrf.mxu0
      %v3728 = vadd.f32 %v3582, %v3727
      %3729 = vmatprep.mubr.bf16.mxu0 %v3644
      %3730 = vmatmul.mubr.bf16.gmra.mxu0 %v3643
      %v3731 = vpop.f32.mrf.mxu0
      %v3732 = vadd.f32 %v3587, %v3731
      %v3733 = vpop.f32.mrf.mxu0
      %v3734 = vadd.f32 %v3587, %v3733
      %v3735 = vpop.f32.mrf.mxu0
      %v3736 = vadd.f32 %v3592, %v3735
      %v3737 = vpop.f32.mrf.mxu0
      %v3738 = vadd.f32 %v3592, %v3737
      %3739 = vdwg.mxu0
      %3740 = vmatprep.subr.bf16.mxu0 0
      %3741 = vmatpush1.bf16.msra.mxu0 0
      %3742 = vmatprep.subr.bf16.mxu0 0
      %3743 = vmatpush1.bf16.msra.mxu0 0
      %3744 = vmatprep.subr.bf16.mxu0 0
      %3745 = vmatpush1.bf16.msra.mxu0 0
      %3746 = vmatprep.subr.bf16.mxu0 0
      %3747 = vmatpush1.bf16.msra.mxu0 0
      %3748 = vmatprep.subr.bf16.mxu0 0
      %3749 = vmatpush1.bf16.msra.mxu0 0
      %3750 = vmatprep.subr.bf16.mxu0 0
      %3751 = vmatpush1.bf16.msra.mxu0 0
      %3752 = vmatprep.subr.bf16.mxu0 %v3523
      %3753 = vmatpush1.bf16.msra.mxu0 %v3522
      %3754 = vmatprep.subr.bf16.mxu0 %v3515
      %3755 = vmatpush1.bf16.msra.mxu0 %v3514
      %3756 = vmatprep.subr.bf16.mxu0 0
      %3757 = vmatpush2.bf16.msra.mxu0 0
      %3758 = vmatprep.subr.bf16.mxu0 0
      %3759 = vmatpush2.bf16.msra.mxu0 0
      %3760 = vmatprep.subr.bf16.mxu0 0
      %3761 = vmatpush2.bf16.msra.mxu0 0
      %3762 = vmatprep.subr.bf16.mxu0 0
      %3763 = vmatpush2.bf16.msra.mxu0 0
      %3764 = vmatprep.subr.bf16.mxu0 0
      %3765 = vmatpush2.bf16.msra.mxu0 0
      %3766 = vmatprep.subr.bf16.mxu0 0
      %3767 = vmatpush2.bf16.msra.mxu0 0
      %3768 = vmatprep.subr.bf16.mxu0 0
      %3769 = vmatpush2.bf16.msra.mxu0 0
      %3770 = vmatprep.subr.bf16.mxu0 0
      %3771 = vmatpush2.bf16.msra.mxu0 0
      %3772 = vmatprep.mubr.bf16.mxu0 0
      %3773 = vmatmul.mubr.bf16.gmra.mxu0 %v3656
      %v3774 = vpop.f32.mrf.mxu0
      %v3775 = vadd.f32 %v3702, %v3774
      %v3776 = vpop.f32.mrf.mxu0
      %v3777 = vadd.f32 %v3704, %v3776
      %v3778 = vpop.f32.mrf.mxu0
      %v3779 = vadd.f32 %v3706, %v3778
      %v3780 = vpop.f32.mrf.mxu0
      %v3781 = vadd.f32 %v3708, %v3780
      %3782 = vmatprep.mubr.bf16.mxu0 0
      %3783 = vmatmul.mubr.bf16.gmra.mxu0 %v3659
      %v3784 = vpop.f32.mrf.mxu0
      %v3785 = vadd.f32 %v3712, %v3784
      %v3786 = vpop.f32.mrf.mxu0
      %v3787 = vadd.f32 %v3714, %v3786
      %v3788 = vpop.f32.mrf.mxu0
      %v3789 = vadd.f32 %v3716, %v3788
      %v3790 = vpop.f32.mrf.mxu0
      %v3791 = vadd.f32 %v3718, %v3790
      %3792 = vmatprep.mubr.bf16.mxu0 0
      %3793 = vmatmul.mubr.bf16.gmra.mxu0 %v3662
      %v3794 = vpop.f32.mrf.mxu0
      %v3795 = vadd.f32 %v3722, %v3794
      %v3796 = vpop.f32.mrf.mxu0
      %v3797 = vadd.f32 %v3724, %v3796
      %v3798 = vpop.f32.mrf.mxu0
      %v3799 = vadd.f32 %v3726, %v3798
      %v3800 = vpop.f32.mrf.mxu0
      %v3801 = vadd.f32 %v3728, %v3800
      %3802 = vmatprep.mubr.bf16.mxu0 0
      %3803 = vmatmul.mubr.bf16.gmra.mxu0 %v3665
      %v3804 = vpop.f32.mrf.mxu0
      %v3805 = vadd.f32 %v3732, %v3804
      %v3806 = vpop.f32.mrf.mxu0
      %v3807 = vadd.f32 %v3734, %v3806
      %v3808 = vpop.f32.mrf.mxu0
      %v3809 = vadd.f32 %v3736, %v3808
      %v3810 = vpop.f32.mrf.mxu0
      %v3811 = vadd.f32 %v3738, %v3810
      %3812 = vdwg.mxu0
      %3813 = vmatprep.subr.bf16.mxu0 %v3220
      %3814 = vmatpush1.bf16.msra.mxu0 %v3219
      %3815 = vmatprep.subr.bf16.mxu0 %v3212
      %3816 = vmatpush1.bf16.msra.mxu0 %v3211
      %3817 = vmatprep.subr.bf16.mxu0 %v3075
      %3818 = vmatpush1.bf16.msra.mxu0 %v3074
      %3819 = vmatprep.subr.bf16.mxu0 %v3067
      %3820 = vmatpush1.bf16.msra.mxu0 %v3066
      %3821 = vmatprep.subr.bf16.mxu0 %v2930
      %3822 = vmatpush1.bf16.msra.mxu0 %v2929
      %3823 = vmatprep.subr.bf16.mxu0 %v2922
      %3824 = vmatpush1.bf16.msra.mxu0 %v2921
      %3825 = vmatprep.subr.bf16.mxu0 %v2785
      %3826 = vmatpush1.bf16.msra.mxu0 %v2784
      %3827 = vmatprep.subr.bf16.mxu0 %v2777
      %3828 = vmatpush1.bf16.msra.mxu0 %v2776
      %3829 = vmatprep.subr.bf16.mxu0 %v3477
      %3830 = vmatpush2.bf16.msra.mxu0 %v3476
      %3831 = vmatprep.subr.bf16.mxu0 %v3469
      %3832 = vmatpush2.bf16.msra.mxu0 %v3468
      %3833 = vmatprep.subr.bf16.mxu0 %v3429
      %3834 = vmatpush2.bf16.msra.mxu0 %v3428
      %3835 = vmatprep.subr.bf16.mxu0 %v3421
      %3836 = vmatpush2.bf16.msra.mxu0 %v3420
      %3837 = vmatprep.subr.bf16.mxu0 %v3381
      %3838 = vmatpush2.bf16.msra.mxu0 %v3380
      %3839 = vmatprep.subr.bf16.mxu0 %v3373
      %3840 = vmatpush2.bf16.msra.mxu0 %v3372
      %3841 = vmatprep.subr.bf16.mxu0 %v3236
      %3842 = vmatpush2.bf16.msra.mxu0 %v3235
      %3843 = vmatprep.subr.bf16.mxu0 %v3228
      %3844 = vmatpush2.bf16.msra.mxu0 %v3227
      %3845 = vmatprep.mubr.bf16.mxu0 %v3635
      %3846 = vmatmul.mubr.bf16.gmra.mxu0 %v3634
      %v3847 = vpop.f32.mrf.mxu0
      %v3848 = vadd.f32 %v3557, %v3847
      %v3849 = vpop.f32.mrf.mxu0
      %v3850 = vadd.f32 %v3557, %v3849
      %v3851 = vpop.f32.mrf.mxu0
      %v3852 = vadd.f32 %v3562, %v3851
      %v3853 = vpop.f32.mrf.mxu0
      %v3854 = vadd.f32 %v3562, %v3853
      %3855 = vmatprep.mubr.bf16.mxu0 %v3638
      %3856 = vmatmul.mubr.bf16.gmra.mxu0 %v3637
      %v3857 = vpop.f32.mrf.mxu0
      %v3858 = vadd.f32 %v3567, %v3857
      %v3859 = vpop.f32.mrf.mxu0
      %v3860 = vadd.f32 %v3567, %v3859
      %v3861 = vpop.f32.mrf.mxu0
      %v3862 = vadd.f32 %v3572, %v3861
      %v3863 = vpop.f32.mrf.mxu0
      %v3864 = vadd.f32 %v3572, %v3863
      %3865 = vmatprep.mubr.bf16.mxu0 %v3641
      %3866 = vmatmul.mubr.bf16.gmra.mxu0 %v3640
      %v3867 = vpop.f32.mrf.mxu0
      %v3868 = vadd.f32 %v3577, %v3867
      %v3869 = vpop.f32.mrf.mxu0
      %v3870 = vadd.f32 %v3577, %v3869
      %v3871 = vpop.f32.mrf.mxu0
      %v3872 = vadd.f32 %v3582, %v3871
      %v3873 = vpop.f32.mrf.mxu0
      %v3874 = vadd.f32 %v3582, %v3873
      %3875 = vmatprep.mubr.bf16.mxu0 %v3644
      %3876 = vmatmul.mubr.bf16.gmra.mxu0 %v3643
      %v3877 = vpop.f32.mrf.mxu0
      %v3878 = vadd.f32 %v3587, %v3877
      %v3879 = vpop.f32.mrf.mxu0
      %v3880 = vadd.f32 %v3587, %v3879
      %v3881 = vpop.f32.mrf.mxu0
      %v3882 = vadd.f32 %v3592, %v3881
      %v3883 = vpop.f32.mrf.mxu0
      %v3884 = vadd.f32 %v3592, %v3883
      %3885 = vdwg.mxu0
      %3886 = vmatprep.subr.bf16.mxu0 0
      %3887 = vmatpush1.bf16.msra.mxu0 0
      %3888 = vmatprep.subr.bf16.mxu0 0
      %3889 = vmatpush1.bf16.msra.mxu0 0
      %3890 = vmatprep.subr.bf16.mxu0 0
      %3891 = vmatpush1.bf16.msra.mxu0 0
      %3892 = vmatprep.subr.bf16.mxu0 0
      %3893 = vmatpush1.bf16.msra.mxu0 0
      %3894 = vmatprep.subr.bf16.mxu0 0
      %3895 = vmatpush1.bf16.msra.mxu0 0
      %3896 = vmatprep.subr.bf16.mxu0 0
      %3897 = vmatpush1.bf16.msra.mxu0 0
      %3898 = vmatprep.subr.bf16.mxu0 %v3525
      %3899 = vmatpush1.bf16.msra.mxu0 %v3524
      %3900 = vmatprep.subr.bf16.mxu0 %v3517
      %3901 = vmatpush1.bf16.msra.mxu0 %v3516
      %3902 = vmatprep.subr.bf16.mxu0 0
      %3903 = vmatpush2.bf16.msra.mxu0 0
      %3904 = vmatprep.subr.bf16.mxu0 0
      %3905 = vmatpush2.bf16.msra.mxu0 0
      %3906 = vmatprep.subr.bf16.mxu0 0
      %3907 = vmatpush2.bf16.msra.mxu0 0
      %3908 = vmatprep.subr.bf16.mxu0 0
      %3909 = vmatpush2.bf16.msra.mxu0 0
      %3910 = vmatprep.subr.bf16.mxu0 0
      %3911 = vmatpush2.bf16.msra.mxu0 0
      %3912 = vmatprep.subr.bf16.mxu0 0
      %3913 = vmatpush2.bf16.msra.mxu0 0
      %3914 = vmatprep.subr.bf16.mxu0 0
      %3915 = vmatpush2.bf16.msra.mxu0 0
      %3916 = vmatprep.subr.bf16.mxu0 0
      %3917 = vmatpush2.bf16.msra.mxu0 0
      %3918 = vmatprep.mubr.bf16.mxu0 0
      %3919 = vmatmul.mubr.bf16.gmra.mxu0 %v3656
      %v3920 = vpop.f32.mrf.mxu0
      %v3921 = vadd.f32 %v3848, %v3920
      %v3922 = vpop.f32.mrf.mxu0
      %v3923 = vadd.f32 %v3850, %v3922
      %v3924 = vpop.f32.mrf.mxu0
      %v3925 = vadd.f32 %v3852, %v3924
      %v3926 = vpop.f32.mrf.mxu0
      %v3927 = vadd.f32 %v3854, %v3926
      %3928 = vmatprep.mubr.bf16.mxu0 0
      %3929 = vmatmul.mubr.bf16.gmra.mxu0 %v3659
      %v3930 = vpop.f32.mrf.mxu0
      %v3931 = vadd.f32 %v3858, %v3930
      %v3932 = vpop.f32.mrf.mxu0
      %v3933 = vadd.f32 %v3860, %v3932
      %v3934 = vpop.f32.mrf.mxu0
      %v3935 = vadd.f32 %v3862, %v3934
      %v3936 = vpop.f32.mrf.mxu0
      %v3937 = vadd.f32 %v3864, %v3936
      %3938 = vmatprep.mubr.bf16.mxu0 0
      %3939 = vmatmul.mubr.bf16.gmra.mxu0 %v3662
      %v3940 = vpop.f32.mrf.mxu0
      %v3941 = vadd.f32 %v3868, %v3940
      %v3942 = vpop.f32.mrf.mxu0
      %v3943 = vadd.f32 %v3870, %v3942
      %v3944 = vpop.f32.mrf.mxu0
      %v3945 = vadd.f32 %v3872, %v3944
      %v3946 = vpop.f32.mrf.mxu0
      %v3947 = vadd.f32 %v3874, %v3946
      %3948 = vmatprep.mubr.bf16.mxu0 0
      %3949 = vmatmul.mubr.bf16.gmra.mxu0 %v3665
      %v3950 = vpop.f32.mrf.mxu0
      %v3951 = vadd.f32 %v3878, %v3950
      %v3952 = vpop.f32.mrf.mxu0
      %v3953 = vadd.f32 %v3880, %v3952
      %v3954 = vpop.f32.mrf.mxu0
      %v3955 = vadd.f32 %v3882, %v3954
      %v3956 = vpop.f32.mrf.mxu0
      %v3957 = vadd.f32 %v3884, %v3956
      %3958 = vdwg.mxu0
      %3959 = vmatprep.subr.bf16.mxu0 %v3222
      %3960 = vmatpush1.bf16.msra.mxu0 %v3221
      %3961 = vmatprep.subr.bf16.mxu0 %v3214
      %3962 = vmatpush1.bf16.msra.mxu0 %v3213
      %3963 = vmatprep.subr.bf16.mxu0 %v3077
      %3964 = vmatpush1.bf16.msra.mxu0 %v3076
      %3965 = vmatprep.subr.bf16.mxu0 %v3069
      %3966 = vmatpush1.bf16.msra.mxu0 %v3068
      %3967 = vmatprep.subr.bf16.mxu0 %v2932
      %3968 = vmatpush1.bf16.msra.mxu0 %v2931
      %3969 = vmatprep.subr.bf16.mxu0 %v2924
      %3970 = vmatpush1.bf16.msra.mxu0 %v2923
      %3971 = vmatprep.subr.bf16.mxu0 %v2787
      %3972 = vmatpush1.bf16.msra.mxu0 %v2786
      %3973 = vmatprep.subr.bf16.mxu0 %v2779
      %3974 = vmatpush1.bf16.msra.mxu0 %v2778
      %3975 = vmatprep.subr.bf16.mxu0 %v3479
      %3976 = vmatpush2.bf16.msra.mxu0 %v3478
      %3977 = vmatprep.subr.bf16.mxu0 %v3471
      %3978 = vmatpush2.bf16.msra.mxu0 %v3470
      %3979 = vmatprep.subr.bf16.mxu0 %v3431
      %3980 = vmatpush2.bf16.msra.mxu0 %v3430
      %3981 = vmatprep.subr.bf16.mxu0 %v3423
      %3982 = vmatpush2.bf16.msra.mxu0 %v3422
      %3983 = vmatprep.subr.bf16.mxu0 %v3383
      %3984 = vmatpush2.bf16.msra.mxu0 %v3382
      %3985 = vmatprep.subr.bf16.mxu0 %v3375
      %3986 = vmatpush2.bf16.msra.mxu0 %v3374
      %3987 = vmatprep.subr.bf16.mxu0 %v3238
      %3988 = vmatpush2.bf16.msra.mxu0 %v3237
      %3989 = vmatprep.subr.bf16.mxu0 %v3230
      %3990 = vmatpush2.bf16.msra.mxu0 %v3229
      %3991 = vmatprep.mubr.bf16.mxu0 %v3635
      %3992 = vmatmul.mubr.bf16.gmra.mxu0 %v3634
      %v3993 = vpop.f32.mrf.mxu0
      %v3994 = vadd.f32 %v3557, %v3993
      %v3995 = vpop.f32.mrf.mxu0
      %v3996 = vadd.f32 %v3557, %v3995
      %v3997 = vpop.f32.mrf.mxu0
      %v3998 = vadd.f32 %v3562, %v3997
      %v3999 = vpop.f32.mrf.mxu0
      %v4000 = vadd.f32 %v3562, %v3999
      %4001 = vmatprep.mubr.bf16.mxu0 %v3638
      %4002 = vmatmul.mubr.bf16.gmra.mxu0 %v3637
      %v4003 = vpop.f32.mrf.mxu0
      %v4004 = vadd.f32 %v3567, %v4003
      %v4005 = vpop.f32.mrf.mxu0
      %v4006 = vadd.f32 %v3567, %v4005
      %v4007 = vpop.f32.mrf.mxu0
      %v4008 = vadd.f32 %v3572, %v4007
      %v4009 = vpop.f32.mrf.mxu0
      %v4010 = vadd.f32 %v3572, %v4009
      %4011 = vmatprep.mubr.bf16.mxu0 %v3641
      %4012 = vmatmul.mubr.bf16.gmra.mxu0 %v3640
      %v4013 = vpop.f32.mrf.mxu0
      %v4014 = vadd.f32 %v3577, %v4013
      %v4015 = vpop.f32.mrf.mxu0
      %v4016 = vadd.f32 %v3577, %v4015
      %v4017 = vpop.f32.mrf.mxu0
      %v4018 = vadd.f32 %v3582, %v4017
      %v4019 = vpop.f32.mrf.mxu0
      %v4020 = vadd.f32 %v3582, %v4019
      %4021 = vmatprep.mubr.bf16.mxu0 %v3644
      %4022 = vmatmul.mubr.bf16.gmra.mxu0 %v3643
      %v4023 = vpop.f32.mrf.mxu0
      %v4024 = vadd.f32 %v3587, %v4023
      %v4025 = vpop.f32.mrf.mxu0
      %v4026 = vadd.f32 %v3587, %v4025
      %v4027 = vpop.f32.mrf.mxu0
      %v4028 = vadd.f32 %v3592, %v4027
      %v4029 = vpop.f32.mrf.mxu0
      %v4030 = vadd.f32 %v3592, %v4029
      %4031 = vdwg.mxu0
      %4032 = vmatprep.subr.bf16.mxu0 0
      %4033 = vmatpush1.bf16.msra.mxu0 0
      %4034 = vmatprep.subr.bf16.mxu0 0
      %4035 = vmatpush1.bf16.msra.mxu0 0
      %4036 = vmatprep.subr.bf16.mxu0 0
      %4037 = vmatpush1.bf16.msra.mxu0 0
      %4038 = vmatprep.subr.bf16.mxu0 0
      %4039 = vmatpush1.bf16.msra.mxu0 0
      %4040 = vmatprep.subr.bf16.mxu0 0
      %4041 = vmatpush1.bf16.msra.mxu0 0
      %4042 = vmatprep.subr.bf16.mxu0 0
      %4043 = vmatpush1.bf16.msra.mxu0 0
      %4044 = vmatprep.subr.bf16.mxu0 %v3527
      %4045 = vmatpush1.bf16.msra.mxu0 %v3526
      %4046 = vmatprep.subr.bf16.mxu0 %v3519
      %4047 = vmatpush1.bf16.msra.mxu0 %v3518
      %4048 = vmatprep.subr.bf16.mxu0 0
      %4049 = vmatpush2.bf16.msra.mxu0 0
      %4050 = vmatprep.subr.bf16.mxu0 0
      %4051 = vmatpush2.bf16.msra.mxu0 0
      %4052 = vmatprep.subr.bf16.mxu0 0
      %4053 = vmatpush2.bf16.msra.mxu0 0
      %4054 = vmatprep.subr.bf16.mxu0 0
      %4055 = vmatpush2.bf16.msra.mxu0 0
      %4056 = vmatprep.subr.bf16.mxu0 0
      %4057 = vmatpush2.bf16.msra.mxu0 0
      %4058 = vmatprep.subr.bf16.mxu0 0
      %4059 = vmatpush2.bf16.msra.mxu0 0
      %4060 = vmatprep.subr.bf16.mxu0 0
      %4061 = vmatpush2.bf16.msra.mxu0 0
      %4062 = vmatprep.subr.bf16.mxu0 0
      %4063 = vmatpush2.bf16.msra.mxu0 0
      %4064 = vmatprep.mubr.bf16.mxu0 0
      %4065 = vmatmul.mubr.bf16.gmra.mxu0 %v3656
      %v4066 = vpop.f32.mrf.mxu0
      %v4067 = vadd.f32 %v3994, %v4066
      %v4068 = vpop.f32.mrf.mxu0
      %v4069 = vadd.f32 %v3996, %v4068
      %v4070 = vpop.f32.mrf.mxu0
      %v4071 = vadd.f32 %v3998, %v4070
      %v4072 = vpop.f32.mrf.mxu0
      %v4073 = vadd.f32 %v4000, %v4072
      %4074 = vmatprep.mubr.bf16.mxu0 0
      %4075 = vmatmul.mubr.bf16.gmra.mxu0 %v3659
      %v4076 = vpop.f32.mrf.mxu0
      %v4077 = vadd.f32 %v4004, %v4076
      %v4078 = vpop.f32.mrf.mxu0
      %v4079 = vadd.f32 %v4006, %v4078
      %v4080 = vpop.f32.mrf.mxu0
      %v4081 = vadd.f32 %v4008, %v4080
      %v4082 = vpop.f32.mrf.mxu0
      %v4083 = vadd.f32 %v4010, %v4082
      %4084 = vmatprep.mubr.bf16.mxu0 0
      %4085 = vmatmul.mubr.bf16.gmra.mxu0 %v3662
      %v4086 = vpop.f32.mrf.mxu0
      %v4087 = vadd.f32 %v4014, %v4086
      %v4088 = vpop.f32.mrf.mxu0
      %v4089 = vadd.f32 %v4016, %v4088
      %v4090 = vpop.f32.mrf.mxu0
      %v4091 = vadd.f32 %v4018, %v4090
      %v4092 = vpop.f32.mrf.mxu0
      %v4093 = vadd.f32 %v4020, %v4092
      %4094 = vmatprep.mubr.bf16.mxu0 0
      %4095 = vmatmul.mubr.bf16.gmra.mxu0 %v3665
      %v4096 = vpop.f32.mrf.mxu0
      %v4097 = vadd.f32 %v4024, %v4096
      %v4098 = vpop.f32.mrf.mxu0
      %v4099 = vadd.f32 %v4026, %v4098
      %v4100 = vpop.f32.mrf.mxu0
      %v4101 = vadd.f32 %v4028, %v4100
      %v4102 = vpop.f32.mrf.mxu0
      %v4103 = vadd.f32 %v4030, %v4102
      %4104 = vdwg.mxu0
      %4105 = vmatprep.subr.bf16.mxu0 %v3224
      %4106 = vmatpush1.bf16.msra.mxu0 %v3223
      %4107 = vmatprep.subr.bf16.mxu0 %v3216
      %4108 = vmatpush1.bf16.msra.mxu0 %v3215
      %4109 = vmatprep.subr.bf16.mxu0 %v3079
      %4110 = vmatpush1.bf16.msra.mxu0 %v3078
      %4111 = vmatprep.subr.bf16.mxu0 %v3071
      %4112 = vmatpush1.bf16.msra.mxu0 %v3070
      %4113 = vmatprep.subr.bf16.mxu0 %v2934
      %4114 = vmatpush1.bf16.msra.mxu0 %v2933
      %4115 = vmatprep.subr.bf16.mxu0 %v2926
      %4116 = vmatpush1.bf16.msra.mxu0 %v2925
      %4117 = vmatprep.subr.bf16.mxu0 %v2789
      %4118 = vmatpush1.bf16.msra.mxu0 %v2788
      %4119 = vmatprep.subr.bf16.mxu0 %v2781
      %4120 = vmatpush1.bf16.msra.mxu0 %v2780
      %4121 = vmatprep.subr.bf16.mxu0 %v3481
      %4122 = vmatpush2.bf16.msra.mxu0 %v3480
      %4123 = vmatprep.subr.bf16.mxu0 %v3473
      %4124 = vmatpush2.bf16.msra.mxu0 %v3472
      %4125 = vmatprep.subr.bf16.mxu0 %v3433
      %4126 = vmatpush2.bf16.msra.mxu0 %v3432
      %4127 = vmatprep.subr.bf16.mxu0 %v3425
      %4128 = vmatpush2.bf16.msra.mxu0 %v3424
      %4129 = vmatprep.subr.bf16.mxu0 %v3385
      %4130 = vmatpush2.bf16.msra.mxu0 %v3384
      %4131 = vmatprep.subr.bf16.mxu0 %v3377
      %4132 = vmatpush2.bf16.msra.mxu0 %v3376
      %4133 = vmatprep.subr.bf16.mxu0 %v3240
      %4134 = vmatpush2.bf16.msra.mxu0 %v3239
      %4135 = vmatprep.subr.bf16.mxu0 %v3232
      %4136 = vmatpush2.bf16.msra.mxu0 %v3231
      %4137 = vmatprep.mubr.bf16.mxu0 %v3635
      %4138 = vmatmul.mubr.bf16.gmra.mxu0 %v3634
      %v4139 = vpop.f32.mrf.mxu0
      %v4140 = vadd.f32 %v3557, %v4139
      %v4141 = vpop.f32.mrf.mxu0
      %v4142 = vadd.f32 %v3557, %v4141
      %v4143 = vpop.f32.mrf.mxu0
      %v4144 = vadd.f32 %v3562, %v4143
      %v4145 = vpop.f32.mrf.mxu0
      %v4146 = vadd.f32 %v3562, %v4145
      %4147 = vmatprep.mubr.bf16.mxu0 %v3638
      %4148 = vmatmul.mubr.bf16.gmra.mxu0 %v3637
      %v4149 = vpop.f32.mrf.mxu0
      %v4150 = vadd.f32 %v3567, %v4149
      %v4151 = vpop.f32.mrf.mxu0
      %v4152 = vadd.f32 %v3567, %v4151
      %v4153 = vpop.f32.mrf.mxu0
      %v4154 = vadd.f32 %v3572, %v4153
      %v4155 = vpop.f32.mrf.mxu0
      %v4156 = vadd.f32 %v3572, %v4155
      %4157 = vmatprep.mubr.bf16.mxu0 %v3641
      %4158 = vmatmul.mubr.bf16.gmra.mxu0 %v3640
      %v4159 = vpop.f32.mrf.mxu0
      %v4160 = vadd.f32 %v3577, %v4159
      %v4161 = vpop.f32.mrf.mxu0
      %v4162 = vadd.f32 %v3577, %v4161
      %v4163 = vpop.f32.mrf.mxu0
      %v4164 = vadd.f32 %v3582, %v4163
      %v4165 = vpop.f32.mrf.mxu0
      %v4166 = vadd.f32 %v3582, %v4165
      %4167 = vmatprep.mubr.bf16.mxu0 %v3644
      %4168 = vmatmul.mubr.bf16.gmra.mxu0 %v3643
      %v4169 = vpop.f32.mrf.mxu0
      %v4170 = vadd.f32 %v3587, %v4169
      %v4171 = vpop.f32.mrf.mxu0
      %v4172 = vadd.f32 %v3587, %v4171
      %v4173 = vpop.f32.mrf.mxu0
      %v4174 = vadd.f32 %v3592, %v4173
      %v4175 = vpop.f32.mrf.mxu0
      %v4176 = vadd.f32 %v3592, %v4175
      %4177 = vdwg.mxu0
      %4178 = vmatprep.subr.bf16.mxu0 0
      %4179 = vmatpush1.bf16.msra.mxu0 0
      %4180 = vmatprep.subr.bf16.mxu0 0
      %4181 = vmatpush1.bf16.msra.mxu0 0
      %4182 = vmatprep.subr.bf16.mxu0 0
      %4183 = vmatpush1.bf16.msra.mxu0 0
      %4184 = vmatprep.subr.bf16.mxu0 0
      %4185 = vmatpush1.bf16.msra.mxu0 0
      %4186 = vmatprep.subr.bf16.mxu0 0
      %4187 = vmatpush1.bf16.msra.mxu0 0
      %4188 = vmatprep.subr.bf16.mxu0 0
      %4189 = vmatpush1.bf16.msra.mxu0 0
      %4190 = vmatprep.subr.bf16.mxu0 %v3529
      %4191 = vmatpush1.bf16.msra.mxu0 %v3528
      %4192 = vmatprep.subr.bf16.mxu0 %v3521
      %4193 = vmatpush1.bf16.msra.mxu0 %v3520
      %4194 = vmatprep.subr.bf16.mxu0 0
      %4195 = vmatpush2.bf16.msra.mxu0 0
      %4196 = vmatprep.subr.bf16.mxu0 0
      %4197 = vmatpush2.bf16.msra.mxu0 0
      %4198 = vmatprep.subr.bf16.mxu0 0
      %4199 = vmatpush2.bf16.msra.mxu0 0
      %4200 = vmatprep.subr.bf16.mxu0 0
      %4201 = vmatpush2.bf16.msra.mxu0 0
      %4202 = vmatprep.subr.bf16.mxu0 0
      %4203 = vmatpush2.bf16.msra.mxu0 0
      %4204 = vmatprep.subr.bf16.mxu0 0
      %4205 = vmatpush2.bf16.msra.mxu0 0
      %4206 = vmatprep.subr.bf16.mxu0 0
      %4207 = vmatpush2.bf16.msra.mxu0 0
      %4208 = vmatprep.subr.bf16.mxu0 0
      %4209 = vmatpush2.bf16.msra.mxu0 0
      %4210 = vmatprep.mubr.bf16.mxu0 0
      %4211 = vmatmul.mubr.bf16.gmra.mxu0 %v3656
      %v4212 = vpop.f32.mrf.mxu0
      %v4213 = vadd.f32 %v4140, %v4212
      %v4214 = vpop.f32.mrf.mxu0
      %v4215 = vadd.f32 %v4142, %v4214
      %v4216 = vpop.f32.mrf.mxu0
      %v4217 = vadd.f32 %v4144, %v4216
      %v4218 = vpop.f32.mrf.mxu0
      %v4219 = vadd.f32 %v4146, %v4218
      %4220 = vmatprep.mubr.bf16.mxu0 0
      %4221 = vmatmul.mubr.bf16.gmra.mxu0 %v3659
      %v4222 = vpop.f32.mrf.mxu0
      %v4223 = vadd.f32 %v4150, %v4222
      %v4224 = vpop.f32.mrf.mxu0
      %v4225 = vadd.f32 %v4152, %v4224
      %v4226 = vpop.f32.mrf.mxu0
      %v4227 = vadd.f32 %v4154, %v4226
      %v4228 = vpop.f32.mrf.mxu0
      %v4229 = vadd.f32 %v4156, %v4228
      %4230 = vmatprep.mubr.bf16.mxu0 0
      %4231 = vmatmul.mubr.bf16.gmra.mxu0 %v3662
      %v4232 = vpop.f32.mrf.mxu0
      %v4233 = vadd.f32 %v4160, %v4232
      %v4234 = vpop.f32.mrf.mxu0
      %v4235 = vadd.f32 %v4162, %v4234
      %v4236 = vpop.f32.mrf.mxu0
      %v4237 = vadd.f32 %v4164, %v4236
      %v4238 = vpop.f32.mrf.mxu0
      %v4239 = vadd.f32 %v4166, %v4238
      %4240 = vmatprep.mubr.bf16.mxu0 0
      %4241 = vmatmul.mubr.bf16.gmra.mxu0 %v3665
      %v4242 = vpop.f32.mrf.mxu0
      %v4243 = vadd.f32 %v4170, %v4242
      %v4244 = vpop.f32.mrf.mxu0
      %v4245 = vadd.f32 %v4172, %v4244
      %v4246 = vpop.f32.mrf.mxu0
      %v4247 = vadd.f32 %v4174, %v4246
      %v4248 = vpop.f32.mrf.mxu0
      %v4249 = vadd.f32 %v4176, %v4248
      %4250 = vdwg.mxu0
      %v4251 = vmax.f32 %v3775, 0.0
      %v4252 = vmax.f32 %v3777, 0.0
      %v4253 = vmax.f32 %v3921, 0.0
      %v4254 = vmax.f32 %v3923, 0.0
      %v4255 = vmax.f32 %v4067, 0.0
      %v4256 = vmax.f32 %v4069, 0.0
      %v4257 = vmax.f32 %v4213, 0.0
      %v4258 = vmax.f32 %v4215, 0.0
      %v4259 = vmax.f32 %v3779, 0.0
      %v4260 = vmax.f32 %v3781, 0.0
      %v4261 = vmax.f32 %v3925, 0.0
      %v4262 = vmax.f32 %v3927, 0.0
      %v4263 = vmax.f32 %v4071, 0.0
      %v4264 = vmax.f32 %v4073, 0.0
      %v4265 = vmax.f32 %v4217, 0.0
      %v4266 = vmax.f32 %v4219, 0.0
      %v4267 = vmax.f32 %v3785, 0.0
      %v4268 = vmax.f32 %v3787, 0.0
      %v4269 = vmax.f32 %v3931, 0.0
      %v4270 = vmax.f32 %v3933, 0.0
      %v4271 = vmax.f32 %v4077, 0.0
      %v4272 = vmax.f32 %v4079, 0.0
      %v4273 = vmax.f32 %v4223, 0.0
      %v4274 = vmax.f32 %v4225, 0.0
      %v4275 = vmax.f32 %v3789, 0.0
      %v4276 = vmax.f32 %v3791, 0.0
      %v4277 = vmax.f32 %v3935, 0.0
      %v4278 = vmax.f32 %v3937, 0.0
      %v4279 = vmax.f32 %v4081, 0.0
      %v4280 = vmax.f32 %v4083, 0.0
      %v4281 = vmax.f32 %v4227, 0.0
      %v4282 = vmax.f32 %v4229, 0.0
      %v4283 = vmax.f32 %v3795, 0.0
      %v4284 = vmax.f32 %v3797, 0.0
      %v4285 = vmax.f32 %v3941, 0.0
      %v4286 = vmax.f32 %v3943, 0.0
      %v4287 = vmax.f32 %v4087, 0.0
      %v4288 = vmax.f32 %v4089, 0.0
      %v4289 = vmax.f32 %v4233, 0.0
      %v4290 = vmax.f32 %v4235, 0.0
      %v4291 = vmax.f32 %v3799, 0.0
      %v4292 = vmax.f32 %v3801, 0.0
      %v4293 = vmax.f32 %v3945, 0.0
      %v4294 = vmax.f32 %v3947, 0.0
      %v4295 = vmax.f32 %v4091, 0.0
      %v4296 = vmax.f32 %v4093, 0.0
      %v4297 = vmax.f32 %v4237, 0.0
      %v4298 = vmax.f32 %v4239, 0.0
      %v4299 = vmax.f32 %v3805, 0.0
      %v4300 = vmax.f32 %v3807, 0.0
      %v4301 = vmax.f32 %v3951, 0.0
      %v4302 = vmax.f32 %v3953, 0.0
      %v4303 = vmax.f32 %v4097, 0.0
      %v4304 = vmax.f32 %v4099, 0.0
      %v4305 = vmax.f32 %v4243, 0.0
      %v4306 = vmax.f32 %v4245, 0.0
      %v4307 = vmax.f32 %v3809, 0.0
      %v4308 = vmax.f32 %v3811, 0.0
      %v4309 = vmax.f32 %v3955, 0.0
      %v4310 = vmax.f32 %v3957, 0.0
      %v4311 = vmax.f32 %v4101, 0.0
      %v4312 = vmax.f32 %v4103, 0.0
      %v4313 = vmax.f32 %v4247, 0.0
      %v4314 = vmax.f32 %v4249, 0.0
      %4315 = vrot.lane.b32.xlu0 %v4251, 124
      %v4316 = vpop.permute.xlu0 %4315
      %4317 = vrot.lane.b32.xlu0 %v4259, 124
      %v4318 = vpop.permute.xlu0 %4317
      %4319 = vrot.lane.b32.xlu0 %v4267, 124
      %v4320 = vpop.permute.xlu0 %4319
      %4321 = vrot.lane.b32.xlu0 %v4275, 124
      %v4322 = vpop.permute.xlu0 %4321
      %4323 = vrot.lane.b32.xlu0 %v4283, 124
      %v4324 = vpop.permute.xlu0 %4323
      %4325 = vrot.lane.b32.xlu0 %v4291, 124
      %v4326 = vpop.permute.xlu0 %4325
      %4327 = vrot.lane.b32.xlu0 %v4299, 124
      %v4328 = vpop.permute.xlu0 %4327
      %4329 = vrot.lane.b32.xlu0 %v4307, 124
      %v4330 = vpop.permute.xlu0 %4329
      %4331 = vrot.lane.b32.xlu0 %v4252, 124
      %v4332 = vpop.permute.xlu0 %4331
      %4333 = vrot.lane.b32.xlu0 %v4260, 124
      %v4334 = vpop.permute.xlu0 %4333
      %4335 = vrot.lane.b32.xlu0 %v4268, 124
      %v4336 = vpop.permute.xlu0 %4335
      %4337 = vrot.lane.b32.xlu0 %v4276, 124
      %v4338 = vpop.permute.xlu0 %4337
      %4339 = vrot.lane.b32.xlu0 %v4284, 124
      %v4340 = vpop.permute.xlu0 %4339
      %4341 = vrot.lane.b32.xlu0 %v4292, 124
      %v4342 = vpop.permute.xlu0 %4341
      %4343 = vrot.lane.b32.xlu0 %v4300, 124
      %v4344 = vpop.permute.xlu0 %4343
      %4345 = vrot.lane.b32.xlu0 %v4308, 124
      %v4346 = vpop.permute.xlu0 %4345
      %4347 = vrot.lane.b32.xlu0 %v4253, 124
      %v4348 = vpop.permute.xlu0 %4347
      %4349 = vrot.lane.b32.xlu0 %v4261, 124
      %v4350 = vpop.permute.xlu0 %4349
      %4351 = vrot.lane.b32.xlu0 %v4269, 124
      %v4352 = vpop.permute.xlu0 %4351
      %4353 = vrot.lane.b32.xlu0 %v4277, 124
      %v4354 = vpop.permute.xlu0 %4353
      %4355 = vrot.lane.b32.xlu0 %v4285, 124
      %v4356 = vpop.permute.xlu0 %4355
      %4357 = vrot.lane.b32.xlu0 %v4293, 124
      %v4358 = vpop.permute.xlu0 %4357
      %4359 = vrot.lane.b32.xlu0 %v4301, 124
      %v4360 = vpop.permute.xlu0 %4359
      %4361 = vrot.lane.b32.xlu0 %v4309, 124
      %v4362 = vpop.permute.xlu0 %4361
      %4363 = vrot.lane.b32.xlu0 %v4254, 124
      %v4364 = vpop.permute.xlu0 %4363
      %4365 = vrot.lane.b32.xlu0 %v4262, 124
      %v4366 = vpop.permute.xlu0 %4365
      %4367 = vrot.lane.b32.xlu0 %v4270, 124
      %v4368 = vpop.permute.xlu0 %4367
      %4369 = vrot.lane.b32.xlu0 %v4278, 124
      %v4370 = vpop.permute.xlu0 %4369
      %4371 = vrot.lane.b32.xlu0 %v4286, 124
      %v4372 = vpop.permute.xlu0 %4371
      %4373 = vrot.lane.b32.xlu0 %v4294, 124
      %v4374 = vpop.permute.xlu0 %4373
      %4375 = vrot.lane.b32.xlu0 %v4302, 124
      %v4376 = vpop.permute.xlu0 %4375
      %4377 = vrot.lane.b32.xlu0 %v4310, 124
      %v4378 = vpop.permute.xlu0 %4377
      %4379 = vrot.lane.b32.xlu0 %v4255, 124
      %v4380 = vpop.permute.xlu0 %4379
      %4381 = vrot.lane.b32.xlu0 %v4263, 124
      %v4382 = vpop.permute.xlu0 %4381
      %4383 = vrot.lane.b32.xlu0 %v4271, 124
      %v4384 = vpop.permute.xlu0 %4383
      %4385 = vrot.lane.b32.xlu0 %v4279, 124
      %v4386 = vpop.permute.xlu0 %4385
      %4387 = vrot.lane.b32.xlu0 %v4287, 124
      %v4388 = vpop.permute.xlu0 %4387
      %4389 = vrot.lane.b32.xlu0 %v4295, 124
      %v4390 = vpop.permute.xlu0 %4389
      %4391 = vrot.lane.b32.xlu0 %v4303, 124
      %v4392 = vpop.permute.xlu0 %4391
      %4393 = vrot.lane.b32.xlu0 %v4311, 124
      %v4394 = vpop.permute.xlu0 %4393
      %4395 = vrot.lane.b32.xlu0 %v4256, 124
      %v4396 = vpop.permute.xlu0 %4395
      %4397 = vrot.lane.b32.xlu0 %v4264, 124
      %v4398 = vpop.permute.xlu0 %4397
      %4399 = vrot.lane.b32.xlu0 %v4272, 124
      %v4400 = vpop.permute.xlu0 %4399
      %4401 = vrot.lane.b32.xlu0 %v4280, 124
      %v4402 = vpop.permute.xlu0 %4401
      %4403 = vrot.lane.b32.xlu0 %v4288, 124
      %v4404 = vpop.permute.xlu0 %4403
      %4405 = vrot.lane.b32.xlu0 %v4296, 124
      %v4406 = vpop.permute.xlu0 %4405
      %4407 = vrot.lane.b32.xlu0 %v4304, 124
      %v4408 = vpop.permute.xlu0 %4407
      %4409 = vrot.lane.b32.xlu0 %v4312, 124
      %v4410 = vpop.permute.xlu0 %4409
      %4411 = vrot.lane.b32.xlu0 %v4257, 124
      %v4412 = vpop.permute.xlu0 %4411
      %4413 = vrot.lane.b32.xlu0 %v4265, 124
      %v4414 = vpop.permute.xlu0 %4413
      %4415 = vrot.lane.b32.xlu0 %v4273, 124
      %v4416 = vpop.permute.xlu0 %4415
      %4417 = vrot.lane.b32.xlu0 %v4281, 124
      %v4418 = vpop.permute.xlu0 %4417
      %4419 = vrot.lane.b32.xlu0 %v4289, 124
      %v4420 = vpop.permute.xlu0 %4419
      %4421 = vrot.lane.b32.xlu0 %v4297, 124
      %v4422 = vpop.permute.xlu0 %4421
      %4423 = vrot.lane.b32.xlu0 %v4305, 124
      %v4424 = vpop.permute.xlu0 %4423
      %4425 = vrot.lane.b32.xlu0 %v4313, 124
      %v4426 = vpop.permute.xlu0 %4425
      %4427 = vrot.lane.b32.xlu0 %v4258, 124
      %v4428 = vpop.permute.xlu0 %4427
      %4429 = vrot.lane.b32.xlu0 %v4266, 124
      %v4430 = vpop.permute.xlu0 %4429
      %4431 = vrot.lane.b32.xlu0 %v4274, 124
      %v4432 = vpop.permute.xlu0 %4431
      %4433 = vrot.lane.b32.xlu0 %v4282, 124
      %v4434 = vpop.permute.xlu0 %4433
      %4435 = vrot.lane.b32.xlu0 %v4290, 124
      %v4436 = vpop.permute.xlu0 %4435
      %4437 = vrot.lane.b32.xlu0 %v4298, 124
      %v4438 = vpop.permute.xlu0 %4437
      %4439 = vrot.lane.b32.xlu0 %v4306, 124
      %v4440 = vpop.permute.xlu0 %4439
      %4441 = vrot.lane.b32.xlu0 %v4314, 124
      %v4442 = vpop.permute.xlu0 %4441
      %v4443 = vsel %vm3305, %v4412, %v4428
      %v4444 = vsel %vm3305, %v4414, %v4430
      %v4445 = vsel %vm3305, %v4416, %v4432
      %v4446 = vsel %vm3305, %v4418, %v4434
      %v4447 = vsel %vm3305, %v4420, %v4436
      %v4448 = vsel %vm3305, %v4422, %v4438
      %v4449 = vsel %vm3305, %v4424, %v4440
      %v4450 = vsel %vm3305, %v4426, %v4442
      %v4451 = vsel %vm3305, %v4396, %v4412
      %v4452 = vsel %vm3305, %v4398, %v4414
      %v4453 = vsel %vm3305, %v4400, %v4416
      %v4454 = vsel %vm3305, %v4402, %v4418
      %v4455 = vsel %vm3305, %v4404, %v4420
      %v4456 = vsel %vm3305, %v4406, %v4422
      %v4457 = vsel %vm3305, %v4408, %v4424
      %v4458 = vsel %vm3305, %v4410, %v4426
      %v4459 = vsel %vm3305, %v4380, %v4396
      %v4460 = vsel %vm3305, %v4382, %v4398
      %v4461 = vsel %vm3305, %v4384, %v4400
      %v4462 = vsel %vm3305, %v4386, %v4402
      %v4463 = vsel %vm3305, %v4388, %v4404
      %v4464 = vsel %vm3305, %v4390, %v4406
      %v4465 = vsel %vm3305, %v4392, %v4408
      %v4466 = vsel %vm3305, %v4394, %v4410
      %v4467 = vsel %vm3305, %v4364, %v4380
      %v4468 = vsel %vm3305, %v4366, %v4382
      %v4469 = vsel %vm3305, %v4368, %v4384
      %v4470 = vsel %vm3305, %v4370, %v4386
      %v4471 = vsel %vm3305, %v4372, %v4388
      %v4472 = vsel %vm3305, %v4374, %v4390
      %v4473 = vsel %vm3305, %v4376, %v4392
      %v4474 = vsel %vm3305, %v4378, %v4394
      %v4475 = vsel %vm3305, %v4348, %v4364
      %v4476 = vsel %vm3305, %v4350, %v4366
      %v4477 = vsel %vm3305, %v4352, %v4368
      %v4478 = vsel %vm3305, %v4354, %v4370
      %v4479 = vsel %vm3305, %v4356, %v4372
      %v4480 = vsel %vm3305, %v4358, %v4374
      %v4481 = vsel %vm3305, %v4360, %v4376
      %v4482 = vsel %vm3305, %v4362, %v4378
      %v4483 = vsel %vm3305, %v4332, %v4348
      %v4484 = vsel %vm3305, %v4334, %v4350
      %v4485 = vsel %vm3305, %v4336, %v4352
      %v4486 = vsel %vm3305, %v4338, %v4354
      %v4487 = vsel %vm3305, %v4340, %v4356
      %v4488 = vsel %vm3305, %v4342, %v4358
      %v4489 = vsel %vm3305, %v4344, %v4360
      %v4490 = vsel %vm3305, %v4346, %v4362
      %v4491 = vsel %vm3305, %v4316, %v4332
      %v4492 = vsel %vm3305, %v4318, %v4334
      %v4493 = vsel %vm3305, %v4320, %v4336
      %v4494 = vsel %vm3305, %v4322, %v4338
      %v4495 = vsel %vm3305, %v4324, %v4340
      %v4496 = vsel %vm3305, %v4326, %v4342
      %v4497 = vsel %vm3305, %v4328, %v4344
      %v4498 = vsel %vm3305, %v4330, %v4346
      %v4499 = vsel %vm3305, %v4428, %v4316
      %v4500 = vsel %vm3305, %v4430, %v4318
      %v4501 = vsel %vm3305, %v4432, %v4320
      %v4502 = vsel %vm3305, %v4434, %v4322
      %v4503 = vsel %vm3305, %v4436, %v4324
      %v4504 = vsel %vm3305, %v4438, %v4326
      %v4505 = vsel %vm3305, %v4440, %v4328
      %v4506 = vsel %vm3305, %v4442, %v4330
      %v4507 = vmax.f32 %v4251, %v4491
      %v4508 = vmax.f32 %v4252, %v4483
      %v4509 = vmax.f32 %v4253, %v4475
      %v4510 = vmax.f32 %v4254, %v4467
      %v4511 = vmax.f32 %v4255, %v4459
      %v4512 = vmax.f32 %v4256, %v4451
      %v4513 = vmax.f32 %v4257, %v4443
      %v4514 = vmax.f32 %v4258, %v4499
      %v4515 = vmax.f32 %v4259, %v4492
      %v4516 = vmax.f32 %v4260, %v4484
      %v4517 = vmax.f32 %v4261, %v4476
      %v4518 = vmax.f32 %v4262, %v4468
      %v4519 = vmax.f32 %v4263, %v4460
      %v4520 = vmax.f32 %v4264, %v4452
      %v4521 = vmax.f32 %v4265, %v4444
      %v4522 = vmax.f32 %v4266, %v4500
      %v4523 = vmax.f32 %v4267, %v4493
      %v4524 = vmax.f32 %v4268, %v4485
      %v4525 = vmax.f32 %v4269, %v4477
      %v4526 = vmax.f32 %v4270, %v4469
      %v4527 = vmax.f32 %v4271, %v4461
      %v4528 = vmax.f32 %v4272, %v4453
      %v4529 = vmax.f32 %v4273, %v4445
      %v4530 = vmax.f32 %v4274, %v4501
      %v4531 = vmax.f32 %v4275, %v4494
      %v4532 = vmax.f32 %v4276, %v4486
      %v4533 = vmax.f32 %v4277, %v4478
      %v4534 = vmax.f32 %v4278, %v4470
      %v4535 = vmax.f32 %v4279, %v4462
      %v4536 = vmax.f32 %v4280, %v4454
      %v4537 = vmax.f32 %v4281, %v4446
      %v4538 = vmax.f32 %v4282, %v4502
      %v4539 = vmax.f32 %v4283, %v4495
      %v4540 = vmax.f32 %v4284, %v4487
      %v4541 = vmax.f32 %v4285, %v4479
      %v4542 = vmax.f32 %v4286, %v4471
      %v4543 = vmax.f32 %v4287, %v4463
      %v4544 = vmax.f32 %v4288, %v4455
      %v4545 = vmax.f32 %v4289, %v4447
      %v4546 = vmax.f32 %v4290, %v4503
      %v4547 = vmax.f32 %v4291, %v4496
      %v4548 = vmax.f32 %v4292, %v4488
      %v4549 = vmax.f32 %v4293, %v4480
      %v4550 = vmax.f32 %v4294, %v4472
      %v4551 = vmax.f32 %v4295, %v4464
      %v4552 = vmax.f32 %v4296, %v4456
      %v4553 = vmax.f32 %v4297, %v4448
      %v4554 = vmax.f32 %v4298, %v4504
      %v4555 = vmax.f32 %v4299, %v4497
      %v4556 = vmax.f32 %v4300, %v4489
      %v4557 = vmax.f32 %v4301, %v4481
      %v4558 = vmax.f32 %v4302, %v4473
      %v4559 = vmax.f32 %v4303, %v4465
      %v4560 = vmax.f32 %v4304, %v4457
      %v4561 = vmax.f32 %v4305, %v4449
      %v4562 = vmax.f32 %v4306, %v4505
      %v4563 = vmax.f32 %v4307, %v4498
      %v4564 = vmax.f32 %v4308, %v4490
      %v4565 = vmax.f32 %v4309, %v4482
      %v4566 = vmax.f32 %v4310, %v4474
      %v4567 = vmax.f32 %v4311, %v4466
      %v4568 = vmax.f32 %v4312, %v4458
      %v4569 = vmax.f32 %v4313, %v4450
      %v4570 = vmax.f32 %v4314, %v4506
      %4571 = vrot.lane.b32.xlu0 %v4507, 64
      %v4572 = vpop.permute.xlu0 %4571
      %4573 = vrot.lane.b32.xlu0 %v4515, 64
      %v4574 = vpop.permute.xlu0 %4573
      %4575 = vrot.lane.b32.xlu0 %v4523, 64
      %v4576 = vpop.permute.xlu0 %4575
      %4577 = vrot.lane.b32.xlu0 %v4531, 64
      %v4578 = vpop.permute.xlu0 %4577
      %4579 = vrot.lane.b32.xlu0 %v4539, 64
      %v4580 = vpop.permute.xlu0 %4579
      %4581 = vrot.lane.b32.xlu0 %v4547, 64
      %v4582 = vpop.permute.xlu0 %4581
      %4583 = vrot.lane.b32.xlu0 %v4555, 64
      %v4584 = vpop.permute.xlu0 %4583
      %4585 = vrot.lane.b32.xlu0 %v4563, 64
      %v4586 = vpop.permute.xlu0 %4585
      %4587 = vrot.lane.b32.xlu0 %v4508, 64
      %v4588 = vpop.permute.xlu0 %4587
      %4589 = vrot.lane.b32.xlu0 %v4516, 64
      %v4590 = vpop.permute.xlu0 %4589
      %4591 = vrot.lane.b32.xlu0 %v4524, 64
      %v4592 = vpop.permute.xlu0 %4591
      %4593 = vrot.lane.b32.xlu0 %v4532, 64
      %v4594 = vpop.permute.xlu0 %4593
      %4595 = vrot.lane.b32.xlu0 %v4540, 64
      %v4596 = vpop.permute.xlu0 %4595
      %4597 = vrot.lane.b32.xlu0 %v4548, 64
      %v4598 = vpop.permute.xlu0 %4597
      %4599 = vrot.lane.b32.xlu0 %v4556, 64
      %v4600 = vpop.permute.xlu0 %4599
      %4601 = vrot.lane.b32.xlu0 %v4564, 64
      %v4602 = vpop.permute.xlu0 %4601
      %4603 = vrot.lane.b32.xlu0 %v4509, 64
      %v4604 = vpop.permute.xlu0 %4603
      %4605 = vrot.lane.b32.xlu0 %v4517, 64
      %v4606 = vpop.permute.xlu0 %4605
      %4607 = vrot.lane.b32.xlu0 %v4525, 64
      %v4608 = vpop.permute.xlu0 %4607
      %4609 = vrot.lane.b32.xlu0 %v4533, 64
      %v4610 = vpop.permute.xlu0 %4609
      %4611 = vrot.lane.b32.xlu0 %v4541, 64
      %v4612 = vpop.permute.xlu0 %4611
      %4613 = vrot.lane.b32.xlu0 %v4549, 64
      %v4614 = vpop.permute.xlu0 %4613
      %4615 = vrot.lane.b32.xlu0 %v4557, 64
      %v4616 = vpop.permute.xlu0 %4615
      %4617 = vrot.lane.b32.xlu0 %v4565, 64
      %v4618 = vpop.permute.xlu0 %4617
      %4619 = vrot.lane.b32.xlu0 %v4510, 64
      %v4620 = vpop.permute.xlu0 %4619
      %4621 = vrot.lane.b32.xlu0 %v4518, 64
      %v4622 = vpop.permute.xlu0 %4621
      %4623 = vrot.lane.b32.xlu0 %v4526, 64
      %v4624 = vpop.permute.xlu0 %4623
      %4625 = vrot.lane.b32.xlu0 %v4534, 64
      %v4626 = vpop.permute.xlu0 %4625
      %4627 = vrot.lane.b32.xlu0 %v4542, 64
      %v4628 = vpop.permute.xlu0 %4627
      %4629 = vrot.lane.b32.xlu0 %v4550, 64
      %v4630 = vpop.permute.xlu0 %4629
      %4631 = vrot.lane.b32.xlu0 %v4558, 64
      %v4632 = vpop.permute.xlu0 %4631
      %4633 = vrot.lane.b32.xlu0 %v4566, 64
      %v4634 = vpop.permute.xlu0 %4633
      %4635 = vrot.lane.b32.xlu0 %v4511, 64
      %v4636 = vpop.permute.xlu0 %4635
      %4637 = vrot.lane.b32.xlu0 %v4519, 64
      %v4638 = vpop.permute.xlu0 %4637
      %4639 = vrot.lane.b32.xlu0 %v4527, 64
      %v4640 = vpop.permute.xlu0 %4639
      %4641 = vrot.lane.b32.xlu0 %v4535, 64
      %v4642 = vpop.permute.xlu0 %4641
      %4643 = vrot.lane.b32.xlu0 %v4543, 64
      %v4644 = vpop.permute.xlu0 %4643
      %4645 = vrot.lane.b32.xlu0 %v4551, 64
      %v4646 = vpop.permute.xlu0 %4645
      %4647 = vrot.lane.b32.xlu0 %v4559, 64
      %v4648 = vpop.permute.xlu0 %4647
      %4649 = vrot.lane.b32.xlu0 %v4567, 64
      %v4650 = vpop.permute.xlu0 %4649
      %4651 = vrot.lane.b32.xlu0 %v4512, 64
      %v4652 = vpop.permute.xlu0 %4651
      %4653 = vrot.lane.b32.xlu0 %v4520, 64
      %v4654 = vpop.permute.xlu0 %4653
      %4655 = vrot.lane.b32.xlu0 %v4528, 64
      %v4656 = vpop.permute.xlu0 %4655
      %4657 = vrot.lane.b32.xlu0 %v4536, 64
      %v4658 = vpop.permute.xlu0 %4657
      %4659 = vrot.lane.b32.xlu0 %v4544, 64
      %v4660 = vpop.permute.xlu0 %4659
      %4661 = vrot.lane.b32.xlu0 %v4552, 64
      %v4662 = vpop.permute.xlu0 %4661
      %4663 = vrot.lane.b32.xlu0 %v4560, 64
      %v4664 = vpop.permute.xlu0 %4663
      %4665 = vrot.lane.b32.xlu0 %v4568, 64
      %v4666 = vpop.permute.xlu0 %4665
      %4667 = vrot.lane.b32.xlu0 %v4513, 64
      %v4668 = vpop.permute.xlu0 %4667
      %4669 = vrot.lane.b32.xlu0 %v4521, 64
      %v4670 = vpop.permute.xlu0 %4669
      %4671 = vrot.lane.b32.xlu0 %v4529, 64
      %v4672 = vpop.permute.xlu0 %4671
      %4673 = vrot.lane.b32.xlu0 %v4537, 64
      %v4674 = vpop.permute.xlu0 %4673
      %4675 = vrot.lane.b32.xlu0 %v4545, 64
      %v4676 = vpop.permute.xlu0 %4675
      %4677 = vrot.lane.b32.xlu0 %v4553, 64
      %v4678 = vpop.permute.xlu0 %4677
      %4679 = vrot.lane.b32.xlu0 %v4561, 64
      %v4680 = vpop.permute.xlu0 %4679
      %4681 = vrot.lane.b32.xlu0 %v4569, 64
      %v4682 = vpop.permute.xlu0 %4681
      %4683 = vrot.lane.b32.xlu0 %v4514, 64
      %v4684 = vpop.permute.xlu0 %4683
      %4685 = vrot.lane.b32.xlu0 %v4522, 64
      %v4686 = vpop.permute.xlu0 %4685
      %4687 = vrot.lane.b32.xlu0 %v4530, 64
      %v4688 = vpop.permute.xlu0 %4687
      %4689 = vrot.lane.b32.xlu0 %v4538, 64
      %v4690 = vpop.permute.xlu0 %4689
      %4691 = vrot.lane.b32.xlu0 %v4546, 64
      %v4692 = vpop.permute.xlu0 %4691
      %4693 = vrot.lane.b32.xlu0 %v4554, 64
      %v4694 = vpop.permute.xlu0 %4693
      %4695 = vrot.lane.b32.xlu0 %v4562, 64
      %v4696 = vpop.permute.xlu0 %4695
      %4697 = vrot.lane.b32.xlu0 %v4570, 64
      %v4698 = vpop.permute.xlu0 %4697
      %v4699 = vsel %vm2854, %v4668, %v4684
      %v4700 = vsel %vm2854, %v4670, %v4686
      %v4701 = vsel %vm2854, %v4672, %v4688
      %v4702 = vsel %vm2854, %v4674, %v4690
      %v4703 = vsel %vm2854, %v4676, %v4692
      %v4704 = vsel %vm2854, %v4678, %v4694
      %v4705 = vsel %vm2854, %v4680, %v4696
      %v4706 = vsel %vm2854, %v4682, %v4698
      %v4707 = vsel %vm2854, %v4652, %v4668
      %v4708 = vsel %vm2854, %v4654, %v4670
      %v4709 = vsel %vm2854, %v4656, %v4672
      %v4710 = vsel %vm2854, %v4658, %v4674
      %v4711 = vsel %vm2854, %v4660, %v4676
      %v4712 = vsel %vm2854, %v4662, %v4678
      %v4713 = vsel %vm2854, %v4664, %v4680
      %v4714 = vsel %vm2854, %v4666, %v4682
      %v4715 = vsel %vm2854, %v4636, %v4652
      %v4716 = vsel %vm2854, %v4638, %v4654
      %v4717 = vsel %vm2854, %v4640, %v4656
      %v4718 = vsel %vm2854, %v4642, %v4658
      %v4719 = vsel %vm2854, %v4644, %v4660
      %v4720 = vsel %vm2854, %v4646, %v4662
      %v4721 = vsel %vm2854, %v4648, %v4664
      %v4722 = vsel %vm2854, %v4650, %v4666
      %v4723 = vsel %vm2854, %v4620, %v4636
      %v4724 = vsel %vm2854, %v4622, %v4638
      %v4725 = vsel %vm2854, %v4624, %v4640
      %v4726 = vsel %vm2854, %v4626, %v4642
      %v4727 = vsel %vm2854, %v4628, %v4644
      %v4728 = vsel %vm2854, %v4630, %v4646
      %v4729 = vsel %vm2854, %v4632, %v4648
      %v4730 = vsel %vm2854, %v4634, %v4650
      %v4731 = vsel %vm2854, %v4604, %v4620
      %v4732 = vsel %vm2854, %v4606, %v4622
      %v4733 = vsel %vm2854, %v4608, %v4624
      %v4734 = vsel %vm2854, %v4610, %v4626
      %v4735 = vsel %vm2854, %v4612, %v4628
      %v4736 = vsel %vm2854, %v4614, %v4630
      %v4737 = vsel %vm2854, %v4616, %v4632
      %v4738 = vsel %vm2854, %v4618, %v4634
      %v4739 = vsel %vm2854, %v4588, %v4604
      %v4740 = vsel %vm2854, %v4590, %v4606
      %v4741 = vsel %vm2854, %v4592, %v4608
      %v4742 = vsel %vm2854, %v4594, %v4610
      %v4743 = vsel %vm2854, %v4596, %v4612
      %v4744 = vsel %vm2854, %v4598, %v4614
      %v4745 = vsel %vm2854, %v4600, %v4616
      %v4746 = vsel %vm2854, %v4602, %v4618
      %v4747 = vsel %vm2854, %v4572, %v4588
      %v4748 = vsel %vm2854, %v4574, %v4590
      %v4749 = vsel %vm2854, %v4576, %v4592
      %v4750 = vsel %vm2854, %v4578, %v4594
      %v4751 = vsel %vm2854, %v4580, %v4596
      %v4752 = vsel %vm2854, %v4582, %v4598
      %v4753 = vsel %vm2854, %v4584, %v4600
      %v4754 = vsel %vm2854, %v4586, %v4602
      %v4755 = vsel %vm2854, %v4684, %v4572
      %v4756 = vsel %vm2854, %v4686, %v4574
      %v4757 = vsel %vm2854, %v4688, %v4576
      %v4758 = vsel %vm2854, %v4690, %v4578
      %v4759 = vsel %vm2854, %v4692, %v4580
      %v4760 = vsel %vm2854, %v4694, %v4582
      %v4761 = vsel %vm2854, %v4696, %v4584
      %v4762 = vsel %vm2854, %v4698, %v4586
      %v4763 = vmax.f32 %v4507, %v4747
      %v4764 = vmax.f32 %v4508, %v4739
      %v4765 = vmax.f32 %v4509, %v4731
      %v4766 = vmax.f32 %v4510, %v4723
      %v4767 = vmax.f32 %v4511, %v4715
      %v4768 = vmax.f32 %v4512, %v4707
      %v4769 = vmax.f32 %v4513, %v4699
      %v4770 = vmax.f32 %v4514, %v4755
      %v4771 = vmax.f32 %v4515, %v4748
      %v4772 = vmax.f32 %v4516, %v4740
      %v4773 = vmax.f32 %v4517, %v4732
      %v4774 = vmax.f32 %v4518, %v4724
      %v4775 = vmax.f32 %v4519, %v4716
      %v4776 = vmax.f32 %v4520, %v4708
      %v4777 = vmax.f32 %v4521, %v4700
      %v4778 = vmax.f32 %v4522, %v4756
      %v4779 = vmax.f32 %v4523, %v4749
      %v4780 = vmax.f32 %v4524, %v4741
      %v4781 = vmax.f32 %v4525, %v4733
      %v4782 = vmax.f32 %v4526, %v4725
      %v4783 = vmax.f32 %v4527, %v4717
      %v4784 = vmax.f32 %v4528, %v4709
      %v4785 = vmax.f32 %v4529, %v4701
      %v4786 = vmax.f32 %v4530, %v4757
      %v4787 = vmax.f32 %v4531, %v4750
      %v4788 = vmax.f32 %v4532, %v4742
      %v4789 = vmax.f32 %v4533, %v4734
      %v4790 = vmax.f32 %v4534, %v4726
      %v4791 = vmax.f32 %v4535, %v4718
      %v4792 = vmax.f32 %v4536, %v4710
      %v4793 = vmax.f32 %v4537, %v4702
      %v4794 = vmax.f32 %v4538, %v4758
      %v4795 = vmax.f32 %v4539, %v4751
      %v4796 = vmax.f32 %v4540, %v4743
      %v4797 = vmax.f32 %v4541, %v4735
      %v4798 = vmax.f32 %v4542, %v4727
      %v4799 = vmax.f32 %v4543, %v4719
      %v4800 = vmax.f32 %v4544, %v4711
      %v4801 = vmax.f32 %v4545, %v4703
      %v4802 = vmax.f32 %v4546, %v4759
      %v4803 = vmax.f32 %v4547, %v4752
      %v4804 = vmax.f32 %v4548, %v4744
      %v4805 = vmax.f32 %v4549, %v4736
      %v4806 = vmax.f32 %v4550, %v4728
      %v4807 = vmax.f32 %v4551, %v4720
      %v4808 = vmax.f32 %v4552, %v4712
      %v4809 = vmax.f32 %v4553, %v4704
      %v4810 = vmax.f32 %v4554, %v4760
      %v4811 = vmax.f32 %v4555, %v4753
      %v4812 = vmax.f32 %v4556, %v4745
      %v4813 = vmax.f32 %v4557, %v4737
      %v4814 = vmax.f32 %v4558, %v4729
      %v4815 = vmax.f32 %v4559, %v4721
      %v4816 = vmax.f32 %v4560, %v4713
      %v4817 = vmax.f32 %v4561, %v4705
      %v4818 = vmax.f32 %v4562, %v4761
      %v4819 = vmax.f32 %v4563, %v4754
      %v4820 = vmax.f32 %v4564, %v4746
      %v4821 = vmax.f32 %v4565, %v4738
      %v4822 = vmax.f32 %v4566, %v4730
      %v4823 = vmax.f32 %v4567, %v4722
      %v4824 = vmax.f32 %v4568, %v4714
      %v4825 = vmax.f32 %v4569, %v4706
      %v4826 = vmax.f32 %v4570, %v4762
      %v4827 = vand.u32 %v399, 7
      %v4828 = vand.u32 %v400, 7
      %v4829 = vand.u32 %v401, 7
      %v4830 = vand.u32 %v402, 7
      %v4831 = vand.u32 %v403, 7
      %v4832 = vand.u32 %v404, 7
      %v4833 = vand.u32 %v405, 7
      %v4834 = vand.u32 %v406, 7
      %vm4835 = vcmp.eq.s32.totalorder %v4827, 0
      %vm4836 = vcmp.eq.s32.totalorder %v4828, 0
      %vm4837 = vcmp.eq.s32.totalorder %v4829, 0
      %vm4838 = vcmp.eq.s32.totalorder %v4830, 0
      %vm4839 = vcmp.eq.s32.totalorder %v4831, 0
      %vm4840 = vcmp.eq.s32.totalorder %v4832, 0
      %vm4841 = vcmp.eq.s32.totalorder %v4833, 0
      %vm4842 = vcmp.eq.s32.totalorder %v4834, 0
      %v4843 = vand.u32 %v415, 7
      %v4844 = vand.u32 %v416, 7
      %v4845 = vand.u32 %v417, 7
      %v4846 = vand.u32 %v418, 7
      %v4847 = vand.u32 %v419, 7
      %v4848 = vand.u32 %v420, 7
      %v4849 = vand.u32 %v421, 7
      %v4850 = vand.u32 %v422, 7
      %vm4851 = vcmp.eq.s32.totalorder %v4843, 0
      %vm4852 = vcmp.eq.s32.totalorder %v4844, 0
      %vm4853 = vcmp.eq.s32.totalorder %v4845, 0
      %vm4854 = vcmp.eq.s32.totalorder %v4846, 0
      %vm4855 = vcmp.eq.s32.totalorder %v4847, 0
      %vm4856 = vcmp.eq.s32.totalorder %v4848, 0
      %vm4857 = vcmp.eq.s32.totalorder %v4849, 0
      %vm4858 = vcmp.eq.s32.totalorder %v4850, 0
      %vm4859 = vmand %vm4835, %vm4851
      %vm4860 = vmand %vm4836, %vm4852
      %vm4861 = vmand %vm4837, %vm4853
      %vm4862 = vmand %vm4838, %vm4854
      %vm4863 = vmand %vm4839, %vm4855
      %vm4864 = vmand %vm4840, %vm4856
      %vm4865 = vmand %vm4841, %vm4857
      %vm4866 = vmand %vm4842, %vm4858
      %v4867 = vsel %vm4859, 0.25, 0.0
      %v4868 = vsel %vm4860, 0.25, 0.0
      %v4869 = vsel %vm4861, 0.25, 0.0
      %v4870 = vsel %vm4862, 0.25, 0.0
      %v4871 = vsel %vm4863, 0.25, 0.0
      %v4872 = vsel %vm4864, 0.25, 0.0
      %v4873 = vsel %vm4865, 0.25, 0.0
      %v4874 = vsel %vm4866, 0.25, 0.0
      %v4875 = vmul.f32 %v4763, %v4867
      %v4876 = vmul.f32 %v4764, %v4868
      %v4877 = vmul.f32 %v4765, %v4869
      %v4878 = vmul.f32 %v4766, %v4870
      %v4879 = vmul.f32 %v4767, %v4871
      %v4880 = vmul.f32 %v4768, %v4872
      %v4881 = vmul.f32 %v4769, %v4873
      %v4882 = vmul.f32 %v4770, %v4874
      %v4883 = vmul.f32 %v4771, %v4867
      %v4884 = vmul.f32 %v4772, %v4868
      %v4885 = vmul.f32 %v4773, %v4869
      %v4886 = vmul.f32 %v4774, %v4870
      %v4887 = vmul.f32 %v4775, %v4871
      %v4888 = vmul.f32 %v4776, %v4872
      %v4889 = vmul.f32 %v4777, %v4873
      %v4890 = vmul.f32 %v4778, %v4874
      %v4891 = vmul.f32 %v4779, %v4867
      %v4892 = vmul.f32 %v4780, %v4868
      %v4893 = vmul.f32 %v4781, %v4869
      %v4894 = vmul.f32 %v4782, %v4870
      %v4895 = vmul.f32 %v4783, %v4871
      %v4896 = vmul.f32 %v4784, %v4872
      %v4897 = vmul.f32 %v4785, %v4873
      %v4898 = vmul.f32 %v4786, %v4874
      %v4899 = vmul.f32 %v4787, %v4867
      %v4900 = vmul.f32 %v4788, %v4868
      %v4901 = vmul.f32 %v4789, %v4869
      %v4902 = vmul.f32 %v4790, %v4870
      %v4903 = vmul.f32 %v4791, %v4871
      %v4904 = vmul.f32 %v4792, %v4872
      %v4905 = vmul.f32 %v4793, %v4873
      %v4906 = vmul.f32 %v4794, %v4874
      %v4907 = vmul.f32 %v4795, %v4867
      %v4908 = vmul.f32 %v4796, %v4868
      %v4909 = vmul.f32 %v4797, %v4869
      %v4910 = vmul.f32 %v4798, %v4870
      %v4911 = vmul.f32 %v4799, %v4871
      %v4912 = vmul.f32 %v4800, %v4872
      %v4913 = vmul.f32 %v4801, %v4873
      %v4914 = vmul.f32 %v4802, %v4874
      %v4915 = vmul.f32 %v4803, %v4867
      %v4916 = vmul.f32 %v4804, %v4868
      %v4917 = vmul.f32 %v4805, %v4869
      %v4918 = vmul.f32 %v4806, %v4870
      %v4919 = vmul.f32 %v4807, %v4871
      %v4920 = vmul.f32 %v4808, %v4872
      %v4921 = vmul.f32 %v4809, %v4873
      %v4922 = vmul.f32 %v4810, %v4874
      %v4923 = vmul.f32 %v4811, %v4867
      %v4924 = vmul.f32 %v4812, %v4868
      %v4925 = vmul.f32 %v4813, %v4869
      %v4926 = vmul.f32 %v4814, %v4870
      %v4927 = vmul.f32 %v4815, %v4871
      %v4928 = vmul.f32 %v4816, %v4872
      %v4929 = vmul.f32 %v4817, %v4873
      %v4930 = vmul.f32 %v4818, %v4874
      %v4931 = vmul.f32 %v4819, %v4867
      %v4932 = vmul.f32 %v4820, %v4868
      %v4933 = vmul.f32 %v4821, %v4869
      %v4934 = vmul.f32 %v4822, %v4870
      %v4935 = vmul.f32 %v4823, %v4871
      %v4936 = vmul.f32 %v4824, %v4872
      %v4937 = vmul.f32 %v4825, %v4873
      %v4938 = vmul.f32 %v4826, %v4874
      %v4939 = vadd.f32 %v4875, %v4876
      %4940 = vadd.xlane.f32.xlu0 %v4939
      %v4941 = vpop.xlane.xlu0 %4940
      %v4942 = vadd.f32 %v4883, %v4884
      %4943 = vadd.xlane.f32.xlu0 %v4942
      %v4944 = vpop.xlane.xlu0 %4943
      %v4945 = vadd.f32 %v4891, %v4892
      %4946 = vadd.xlane.f32.xlu0 %v4945
      %v4947 = vpop.xlane.xlu0 %4946
      %v4948 = vadd.f32 %v4899, %v4900
      %4949 = vadd.xlane.f32.xlu0 %v4948
      %v4950 = vpop.xlane.xlu0 %4949
      %v4951 = vadd.f32 %v4907, %v4908
      %4952 = vadd.xlane.f32.xlu0 %v4951
      %v4953 = vpop.xlane.xlu0 %4952
      %v4954 = vadd.f32 %v4915, %v4916
      %4955 = vadd.xlane.f32.xlu0 %v4954
      %v4956 = vpop.xlane.xlu0 %4955
      %v4957 = vadd.f32 %v4923, %v4924
      %4958 = vadd.xlane.f32.xlu0 %v4957
      %v4959 = vpop.xlane.xlu0 %4958
      %v4960 = vadd.f32 %v4931, %v4932
      %4961 = vadd.xlane.f32.xlu0 %v4960
      %v4962 = vpop.xlane.xlu0 %4961
      %v4963 = vadd.f32 %v4877, %v4878
      %4964 = vadd.xlane.f32.xlu0 %v4963
      %v4965 = vpop.xlane.xlu0 %4964
      %v4966 = vadd.f32 %v4885, %v4886
      %4967 = vadd.xlane.f32.xlu0 %v4966
      %v4968 = vpop.xlane.xlu0 %4967
      %v4969 = vadd.f32 %v4893, %v4894
      %4970 = vadd.xlane.f32.xlu0 %v4969
      %v4971 = vpop.xlane.xlu0 %4970
      %v4972 = vadd.f32 %v4901, %v4902
      %4973 = vadd.xlane.f32.xlu0 %v4972
      %v4974 = vpop.xlane.xlu0 %4973
      %v4975 = vadd.f32 %v4909, %v4910
      %4976 = vadd.xlane.f32.xlu0 %v4975
      %v4977 = vpop.xlane.xlu0 %4976
      %v4978 = vadd.f32 %v4917, %v4918
      %4979 = vadd.xlane.f32.xlu0 %v4978
      %v4980 = vpop.xlane.xlu0 %4979
      %v4981 = vadd.f32 %v4925, %v4926
      %4982 = vadd.xlane.f32.xlu0 %v4981
      %v4983 = vpop.xlane.xlu0 %4982
      %v4984 = vadd.f32 %v4933, %v4934
      %4985 = vadd.xlane.f32.xlu0 %v4984
      %v4986 = vpop.xlane.xlu0 %4985
      %v4987 = vadd.f32 %v4879, %v4880
      %4988 = vadd.xlane.f32.xlu0 %v4987
      %v4989 = vpop.xlane.xlu0 %4988
      %v4990 = vadd.f32 %v4887, %v4888
      %4991 = vadd.xlane.f32.xlu0 %v4990
      %v4992 = vpop.xlane.xlu0 %4991
      %v4993 = vadd.f32 %v4895, %v4896
      %4994 = vadd.xlane.f32.xlu0 %v4993
      %v4995 = vpop.xlane.xlu0 %4994
      %v4996 = vadd.f32 %v4903, %v4904
      %4997 = vadd.xlane.f32.xlu0 %v4996
      %v4998 = vpop.xlane.xlu0 %4997
      %v4999 = vadd.f32 %v4911, %v4912
      %5000 = vadd.xlane.f32.xlu0 %v4999
      %v5001 = vpop.xlane.xlu0 %5000
      %v5002 = vadd.f32 %v4919, %v4920
      %5003 = vadd.xlane.f32.xlu0 %v5002
      %v5004 = vpop.xlane.xlu0 %5003
      %v5005 = vadd.f32 %v4927, %v4928
      %5006 = vadd.xlane.f32.xlu0 %v5005
      %v5007 = vpop.xlane.xlu0 %5006
      %v5008 = vadd.f32 %v4935, %v4936
      %5009 = vadd.xlane.f32.xlu0 %v5008
      %v5010 = vpop.xlane.xlu0 %5009
      %v5011 = vadd.f32 %v4881, %v4882
      %5012 = vadd.xlane.f32.xlu0 %v5011
      %v5013 = vpop.xlane.xlu0 %5012
      %v5014 = vadd.f32 %v4889, %v4890
      %5015 = vadd.xlane.f32.xlu0 %v5014
      %v5016 = vpop.xlane.xlu0 %5015
      %v5017 = vadd.f32 %v4897, %v4898
      %5018 = vadd.xlane.f32.xlu0 %v5017
      %v5019 = vpop.xlane.xlu0 %5018
      %v5020 = vadd.f32 %v4905, %v4906
      %5021 = vadd.xlane.f32.xlu0 %v5020
      %v5022 = vpop.xlane.xlu0 %5021
      %v5023 = vadd.f32 %v4913, %v4914
      %5024 = vadd.xlane.f32.xlu0 %v5023
      %v5025 = vpop.xlane.xlu0 %5024
      %v5026 = vadd.f32 %v4921, %v4922
      %5027 = vadd.xlane.f32.xlu0 %v5026
      %v5028 = vpop.xlane.xlu0 %5027
      %v5029 = vadd.f32 %v4929, %v4930
      %5030 = vadd.xlane.f32.xlu0 %v5029
      %v5031 = vpop.xlane.xlu0 %5030
      %v5032 = vadd.f32 %v4937, %v4938
      %5033 = vadd.xlane.f32.xlu0 %v5032
      %v5034 = vpop.xlane.xlu0 %5033
      %vm5035 = vcmask 7168
      %v5036 = vsel %vm5035, %v4941, %v4965
      %v5037 = vsel %vm5035, %v4944, %v4968
      %v5038 = vsel %vm5035, %v4947, %v4971
      %v5039 = vsel %vm5035, %v4950, %v4974
      %v5040 = vsel %vm5035, %v4953, %v4977
      %v5041 = vsel %vm5035, %v4956, %v4980
      %v5042 = vsel %vm5035, %v4959, %v4983
      %v5043 = vsel %vm5035, %v4962, %v4986
      %vm5044 = vcmask 15360
      %v5045 = vsel %vm5044, %v5036, %v4989
      %v5046 = vsel %vm5044, %v5037, %v4992
      %v5047 = vsel %vm5044, %v5038, %v4995
      %v5048 = vsel %vm5044, %v5039, %v4998
      %v5049 = vsel %vm5044, %v5040, %v5001
      %v5050 = vsel %vm5044, %v5041, %v5004
      %v5051 = vsel %vm5044, %v5042, %v5007
      %v5052 = vsel %vm5044, %v5043, %v5010
      %vm5053 = vcmask 23552
      %v5054 = vsel %vm5053, %v5045, %v5013
      %v5055 = vsel %vm5053, %v5046, %v5016
      %v5056 = vsel %vm5053, %v5047, %v5019
      %v5057 = vsel %vm5053, %v5048, %v5022
      %v5058 = vsel %vm5053, %v5049, %v5025
      %v5059 = vsel %vm5053, %v5050, %v5028
      %v5060 = vsel %vm5053, %v5051, %v5031
      %v5061 = vsel %vm5053, %v5052, %v5034
      %v5062 = vld [vmem:[%s7] sm:$0xf]
      %v5063 = vld [vmem:[%s7 + $0x4] sm:$0xf]
      %v5064 = vld [vmem:[%s7 + $0x8] sm:$0xf]
      %v5065 = vld [vmem:[%s7 + $0xc] sm:$0xf]
      %v5066 = vpack.c.bf16 %v5055, %v5054
      %v5067 = vpack.c.bf16 %v5057, %v5056
      %v5068 = vpack.c.bf16 %v5059, %v5058
      %v5069 = vpack.c.bf16 %v5061, %v5060
      %v5070 = vld [vmem:[%s8] sm:$0xff]
      %v5071 = vld [vmem:[%s8 + $0x8] sm:$0xff]
      %v5072 = vld [vmem:[%s8 + $0x10] sm:$0xff]
      %v5073 = vld [vmem:[%s8 + $0x18] sm:$0xff]
      %5075 = vset.pattern.permute.xlu0 0
      %5076 = vperm.xlu0 %5075, %v5070
      %v5077 = vpop.permute.xlu0 %5076
      %5080 = vset.pattern.permute.xlu0 0
      %5081 = vperm.xlu0 %5080, %v5071
      %v5082 = vpop.permute.xlu0 %5081
      %5085 = vset.pattern.permute.xlu0 0
      %5086 = vperm.xlu0 %5085, %v5072
      %v5087 = vpop.permute.xlu0 %5086
      %5090 = vset.pattern.permute.xlu0 0
      %5091 = vperm.xlu0 %5090, %v5073
      %v5092 = vpop.permute.xlu0 %5091
      %v5098 = vunpack.c.l.b16 %v5062
      %v5099 = vunpack.c.l.b16 %v5063
      %v5100 = vunpack.c.l.b16 %v5064
      %v5101 = vunpack.c.l.b16 %v5065
      %v5102 = vpack.c.b16 %v5099, %v5098
      %v5103 = vpack.c.b16 %v5101, %v5100
      %vm5104 = vcmask 523264
      %v5106 = vsel %vm5104, %v5102, 0
      %v5109 = vsel %vm5104, %v5103, 0
      %5111 = vmatprep.subr.bf16.mxu0 0
      %5112 = vmatpush1.bf16.msra.mxu0 0
      %5113 = vmatprep.subr.bf16.mxu0 0
      %5114 = vmatpush1.bf16.msra.mxu0 0
      %5115 = vmatprep.subr.bf16.mxu0 0
      %5116 = vmatpush1.bf16.msra.mxu0 0
      %5117 = vmatprep.subr.bf16.mxu0 0
      %5118 = vmatpush1.bf16.msra.mxu0 0
      %5119 = vmatprep.subr.bf16.mxu0 0
      %5120 = vmatpush1.bf16.msra.mxu0 %v5069
      %5121 = vmatprep.subr.bf16.mxu0 0
      %5122 = vmatpush1.bf16.msra.mxu0 %v5068
      %5123 = vmatprep.subr.bf16.mxu0 0
      %5124 = vmatpush1.bf16.msra.mxu0 %v5067
      %5125 = vmatprep.subr.bf16.mxu0 0
      %5126 = vmatpush1.bf16.msra.mxu0 %v5066
      %5127 = vmatprep.subr.bf16.mxu0 0
      %5128 = vmatpush2.bf16.msra.mxu0 0
      %5129 = vmatprep.subr.bf16.mxu0 0
      %5130 = vmatpush2.bf16.msra.mxu0 0
      %5131 = vmatprep.subr.bf16.mxu0 0
      %5132 = vmatpush2.bf16.msra.mxu0 0
      %5133 = vmatprep.subr.bf16.mxu0 0
      %5134 = vmatpush2.bf16.msra.mxu0 0
      %5135 = vmatprep.subr.bf16.mxu0 0
      %5136 = vmatpush2.bf16.msra.mxu0 0
      %5137 = vmatprep.subr.bf16.mxu0 0
      %5138 = vmatpush2.bf16.msra.mxu0 0
      %5139 = vmatprep.subr.bf16.mxu0 0
      %5140 = vmatpush2.bf16.msra.mxu0 0
      %5141 = vmatprep.subr.bf16.mxu0 0
      %5142 = vmatpush2.bf16.msra.mxu0 0
      %5143 = vmatprep.mubr.bf16.mxu0 0
      %5144 = vmatmul.mubr.bf16.gmra.mxu0 %v5106
      %v5145 = vpop.f32.mrf.mxu0
      %v5146 = vadd.f32 %v5077, %v5145
      %v5147 = vpop.f32.mrf.mxu0
      %v5148 = vpop.f32.mrf.mxu0
      %v5149 = vadd.f32 %v5082, %v5148
      %v5150 = vpop.f32.mrf.mxu0
      %5151 = vmatprep.mubr.bf16.mxu0 0
      %5152 = vmatmul.mubr.bf16.gmra.mxu0 %v5109
      %v5153 = vpop.f32.mrf.mxu0
      %v5154 = vadd.f32 %v5087, %v5153
      %v5155 = vpop.f32.mrf.mxu0
      %v5156 = vpop.f32.mrf.mxu0
      %v5157 = vadd.f32 %v5092, %v5156
      %v5158 = vpop.f32.mrf.mxu0
      %5159 = vdwg.mxu0
      %v5160 = vmax.f32 %v5146, 0.0
      %v5161 = vmax.f32 %v5149, 0.0
      %v5162 = vmax.f32 %v5154, 0.0
      %v5163 = vmax.f32 %v5157, 0.0
      %v5164 = vld [vmem:[%s9] sm:$0xff]
      %v5165 = vld [vmem:[%s9 + $0x8] sm:$0xff]
      %v5166 = vld [vmem:[%s9 + $0x10] sm:$0xff]
      %v5167 = vld [vmem:[%s9 + $0x18] sm:$0xff]
      %5169 = vset.pattern.permute.xlu0 0
      %5170 = vperm.xlu0 %5169, %v5164
      %v5171 = vpop.permute.xlu0 %5170
      %5174 = vset.pattern.permute.xlu0 0
      %5175 = vperm.xlu0 %5174, %v5165
      %v5176 = vpop.permute.xlu0 %5175
      %5179 = vset.pattern.permute.xlu0 0
      %5180 = vperm.xlu0 %5179, %v5166
      %v5181 = vpop.permute.xlu0 %5180
      %5184 = vset.pattern.permute.xlu0 0
      %5185 = vperm.xlu0 %5184, %v5167
      %v5186 = vpop.permute.xlu0 %5185
      %v5188 = vmul.f32 %v5171, %v5160
      %v5189 = vmul.f32 %v5176, %v5161
      %v5190 = vmul.f32 %v5181, %v5162
      %v5191 = vmul.f32 %v5186, %v5163
      %vm5192 = vcmask 31744
      %v5193 = vsel %vm5192, %v5188, 0.0
      %v5194 = vsel %vm5192, %v5189, 0.0
      %v5195 = vadd.f32 %v5193, %v5194
      %v5196 = vsel %vm5192, %v5190, 0.0
      %v5197 = vadd.f32 %v5195, %v5196
      %v5198 = vsel %vm5192, %v5191, 0.0
      %v5199 = vadd.f32 %v5197, %v5198
      %v5200 = vrot.slane %v5199, 4
      %v5201 = vadd.f32 %v5199, %v5200
      %v5202 = vrot.slane %v5201, 2
      %v5203 = vadd.f32 %v5201, %v5202
      %v5204 = vrot.slane %v5203, 1
      %v5205 = vadd.f32 %v5203, %v5204
      %v5206 = vld [vmem:[#allocation2] sm:$0x1]
      %5208 = vset.pattern.permute.xlu0 0
      %5209 = vperm.xlu0 %5208, %v5206
      %v5210 = vpop.permute.xlu0 %5209
      %v5212 = vlaneseq
      %v5213 = vshrl.u32 %v5212, 7
      %v5214 = vsub.s32 0, %v5213
      %v5215 = vrot.slane %v5210, %v5214
      %v5216 = vadd.f32 %v5205, %v5215
      %v5217 = vmul.f32 %v5216, 0.5
      %v5218 = vtanh.pop %v5217
      %v5219 = vadd.f32 %v5218, 1.0
      %v5220 = vmul.f32 %v5219, 0.5
      %v5221 = vsel %vm5192, %v5220, 0.0
      %5222 = vadd.xlane.f32.xlu0 %v5221
      %v5223 = vpop.xlane.xlu0 %5222
      %v5224 = vmul.f32 %v5223, 0.25
      %5225 = vst [vmem:[%s388] sm:$0xff] %v5224
      %p5226 = scmp.lt.s32.totalorder %s24, 1
      %s5227 = scalar_select %p5226, %s24, 1
      %s5228 = smul.addr %s5227, 8
      %s5229 = scalar_lea.vmem %s11, %s5228
      // Predicated region
      $region65: #{engagement_forward.1} parent=63 // pred_check
        %p5230 = pneg %p278
      $region66: #{engagement_forward.1} parent=63 // pred_check_branch
        %5232 = sbr.rel (%p5230) target = $region68
      $region67: #{engagement_forward.1} parent=63 // pred_region
        _
      $region68: #{engagement_forward.1} parent=63 // pred_fallthru
        _
    $region64: #{engagement_forward.1} parent=5 // pred_fallthru
      _
    %p5233 = scmp.le.s32.totalorder 2, %s19
    // Predicated region
    $region69: #{engagement_forward.1} parent=5 // pred_check
      %p5234 = pneg %p5233
    $region70: #{engagement_forward.1} parent=5 // pred_check_branch
      %5236 = sbr.rel (%p5234) target = $region72
    $region71: #{engagement_forward.1} parent=5 // pred_region
      %s5237 = ssub.s32 %s19, 2
      // Predicated region
      $region73: #{engagement_forward.1} parent=71 // pred_check
        %p5238 = pneg %p284
      $region74: #{engagement_forward.1} parent=71 // pred_check_branch
        %5240 = sbr.rel (%p5238) target = $region76
      $region75: #{engagement_forward.1} parent=71 // pred_region
        %p5241 = scmp.lt.s32.totalorder %s25, 1
        %s5242 = scalar_select %p5241, %s25, 1
        %s5243 = smul.addr %s5242, 8
        %s5244 = scalar_lea.vmem %s11, %s5243
      $region76: #{engagement_forward.1} parent=71 // pred_fallthru
        _
    $region72: #{engagement_forward.1} parent=5 // pred_fallthru
      _
  $region6: #{engagement_forward.1} parent=0 // loop_footer
    %s23 = sadd.s32 1, %s19
  $region7: #{engagement_forward.1} parent=0 // loop_footer_branch
    %18 = sbr.rel target = $region3
  $region8: #{engagement_forward.1} parent=0 // loop_exit
    _

</llo_original>
